<compile_context>
chip_gen: v7x
topology: tpu7x:2x2x1
jax: 0.10.0
libtpu: 0.0.40
codegen_flags: <defaults>
</compile_context>

<pallas_src>
import functools
import math

import jax
import jax.numpy as jnp
from jax.experimental import pallas as pl
from jax.experimental.pallas import tpu as pltpu

# Small, self-consistent config (stands in for the external `config` dict).
CONFIG = dict(
    image_size=16,
    vit_patch_size=4,
    vit_dim=32,
    vit_heads=4,
    vit_mlp_dim=64,
    vit_depth=2,
    num_classes=10,
)


def _round_up(x, m):
    return (x + m - 1) // m * m


# ----------------------------------------------------------------------------
# Parameter-slab layouts (shared by pack_params and the kernel)
# ----------------------------------------------------------------------------
def _slab_d_layout(cfg):
    """Row layout of the width-dim parameter slab. Returns (offsets, rows)."""
    d = cfg["vit_dim"]
    p = cfg["vit_patch_size"]
    mlp = cfg["vit_mlp_dim"]
    depth = cfg["vit_depth"]
    n_patch = (cfg["image_size"] // p) ** 2
    cpp = 3 * p * p
    off, r = {}, 0

    def put(name, n):
        nonlocal r
        off[name] = r
        r += n

    put("patch_w", cpp)
    put("pos_rest", n_patch)
    put("patch_b", 1)
    put("cls", 1)
    put("pos_cls", 1)
    put("norm_g", 1)
    put("norm_b", 1)
    put("hln_g", 1)
    put("hln_b", 1)
    r = _round_up(r, 8)                      # 8-row-align the per-layer blocks
    for li in range(depth):
        put(("wq", li), d)
        put(("wk", li), d)
        put(("wv", li), d)
        put(("wo", li), d)
        put(("w2", li), mlp)
        for nm in ("bq", "bk", "bv", "bo", "b2", "ln1_g", "ln1_b", "ln2_g", "ln2_b"):
            put((nm, li), 1)
        r = _round_up(r, 8)
    return off, r


def _slab_m_layout(cfg):
    """Row layout of the width-mlp parameter slab. Returns (offsets, rows)."""
    d = cfg["vit_dim"]
    depth = cfg["vit_depth"]
    off, r = {}, 0
    for li in range(depth):
        off[("w1", li)] = r
        r += d
        off[("b1", li)] = r
        r += 1
        r = _round_up(r, 8)
    return off, r


# ----------------------------------------------------------------------------
# In-kernel math helpers (values, not refs)
# ----------------------------------------------------------------------------
def _erf_approx(x):
    # Abramowitz & Stegun 7.1.26 (abs err ~1.5e-7): "exact" GELU in f32 built
    # only from ops with guaranteed Mosaic lowering (exp/mul/add/where).
    a1, a2, a3, a4, a5 = 0.254829592, -0.284496736, 1.421413741, -1.453152027, 1.061405429
    p = 0.3275911
    sgn = jnp.where(x >= 0.0, 1.0, -1.0)
    ax = jnp.abs(x)
    t = 1.0 / (1.0 + p * ax)
    poly = ((((a5 * t + a4) * t + a3) * t + a2) * t + a1) * t
    return sgn * (1.0 - poly * jnp.exp(-ax * ax))


def _gelu_exact(x):
    # PyTorch activation='gelu' uses the exact (erf) form.
    return 0.5 * x * (1.0 + _erf_approx(x * 0.7071067811865476))


def _layernorm(x, g, b, eps=1e-5):
    mean = jnp.mean(x, axis=-1, keepdims=True)
    c = x - mean
    var = jnp.mean(c * c, axis=-1, keepdims=True)
    return (c * jax.lax.rsqrt(var + eps)) * g + b


# ----------------------------------------------------------------------------
# The single fused ViT kernel
# ----------------------------------------------------------------------------
def _vit_kernel(patches_ref, pd_ref, pm_ref, head_ref, o_ref, x_scr, *,
                S, n_patch, heads, hd, E, mlp, depth, off_d, off_m):
    f32 = jnp.float32
    T = x_scr.shape[0] // S                  # padded tokens per image (mult of 8)
    scale = 1.0 / math.sqrt(hd)

    def pd(name, n=1):                       # static carve from the width-E slab
        r = off_d[name]
        return pd_ref[r:r + n, :]

    def pm(name, n=1):                       # static carve from the width-mlp slab
        r = off_m[name]
        return pm_ref[r:r + n, :]

    # Block-diagonal ones matrices for per-head lane-group reduce / broadcast,
    # built from iota (no transposes, no extra DMAs).
    lane = jax.lax.broadcasted_iota(jnp.int32, (E, heads), 0)
    hcol = jax.lax.broadcasted_iota(jnp.int32, (E, heads), 1)
    P = jnp.where((lane >= hcol * hd) & (lane < (hcol + 1) * hd), 1.0, 0.0).astype(f32)
    hrow = jax.lax.broadcasted_iota(jnp.int32, (heads, E), 0)
    lane2 = jax.lax.broadcasted_iota(jnp.int32, (heads, E), 1)
    PT = jnp.where((lane2 >= hrow * hd) & (lane2 < (hrow + 1) * hd), 1.0, 0.0).astype(f32)

    # ---- patch embedding (stride-p conv == per-patch matmul) + aligned assembly
    pew = pd("patch_w", patches_ref.shape[1])                       # (c*p*p, E)
    tok = jnp.dot(patches_ref[...], pew, preferred_element_type=f32) + pd("patch_b")
    cls_row = pd("cls") + pd("pos_cls")                             # (1, E)
    pos_rest = pd("pos_rest", n_patch)                              # (n_patch, E)

    x_scr[...] = jnp.zeros_like(x_scr)                              # zero pad rows
    for s in range(S):
        base = s * T
        x_scr[base:base + n_patch, :] = tok[s * n_patch:(s + 1) * n_patch, :] + pos_rest
        x_scr[base + n_patch:base + n_patch + 1, :] = cls_row       # cls at row n_patch

    xs = [x_scr[s * T:(s + 1) * T, :] for s in range(S)]            # (T, E) values

    # ---- transformer encoder layers (post-norm, dropout = identity) ----
    for li in range(depth):
        wq, wk, wv = pd(("wq", li), E), pd(("wk", li), E), pd(("wv", li), E)
        wo, w2 = pd(("wo", li), E), pd(("w2", li), mlp)
        bq, bk, bv = pd(("bq", li)), pd(("bk", li)), pd(("bv", li))
        bo, b2 = pd(("bo", li)), pd(("b2", li))
        g1, be1 = pd(("ln1_g", li)), pd(("ln1_b", li))
        g2, be2 = pd(("ln2_g", li)), pd(("ln2_b", li))
        w1, b1 = pm(("w1", li), E), pm(("b1", li))

        qs = [jnp.dot(x, wq, preferred_element_type=f32) + bq for x in xs]
        ks = [jnp.dot(x, wk, preferred_element_type=f32) + bk for x in xs]
        vs = [jnp.dot(x, wv, preferred_element_type=f32) + bv for x in xs]

        new_xs = []
        for s1 in range(S):
            # batch_first=False semantics: token n of image s1 attends over the
            # S batch images.  All heads at once: per-head reduce via P, softmax
            # on the (T, heads) slab, broadcast back with PT.
            scores = [jnp.dot(qs[s1] * ks[s2], P, preferred_element_type=f32) * scale
                      for s2 in range(S)]                           # each (T, heads)
            m = scores[0]
            for sc in scores[1:]:
                m = jnp.maximum(m, sc)
            exps = [jnp.exp(sc - m) for sc in scores]
            denom = exps[0]
            for e in exps[1:]:
                denom = denom + e
            inv = pl.reciprocal(denom, approx=True)                 # EUP slot
            attn = None
            for s2 in range(S):
                w_lane = jnp.dot(exps[s2] * inv, PT, preferred_element_type=f32)
                contrib = w_lane * vs[s2]                           # (T, E)
                attn = contrib if attn is None else attn + contrib
            attn = jnp.dot(attn, wo, preferred_element_type=f32) + bo
            x1 = _layernorm(xs[s1] + attn, g1, be1)                 # norm1(x + sa)
            ff = _gelu_exact(jnp.dot(x1, w1, preferred_element_type=f32) + b1)
            ff = jnp.dot(ff, w2, preferred_element_type=f32) + b2
            new_xs.append(_layernorm(x1 + ff, g2, be2))             # norm2(x + ff)
        xs = new_xs

    # ---- final norm + classification head on the cls rows only ----
    norm_g, norm_b = pd("norm_g"), pd("norm_b")
    hln_g, hln_b = pd("hln_g"), pd("hln_b")
    hw = head_ref[0:E, :]                                           # (E, nc_pad)
    hb = head_ref[E:E + 1, :]
    for s in range(S):
        cls_tok = xs[s][n_patch:n_patch + 1, :]                     # (1, E)
        cls_tok = _layernorm(cls_tok, norm_g, norm_b)               # self.norm
        cls_tok = _layernorm(cls_tok, hln_g, hln_b)                 # mlp_head LN
        o_ref[s:s + 1, :] = (jnp.dot(cls_tok, hw, preferred_element_type=f32)
                             + hb).astype(o_ref.dtype)


def _full_spec(shape):
    nd = len(shape)
    return pl.BlockSpec(shape, lambda *_: (0,) * nd)


# ----------------------------------------------------------------------------
# Parameter init (deterministic, synthetic, PyTorch layouts)
# ----------------------------------------------------------------------------
def init_params(key, cfg):
    d = cfg["vit_dim"]
    p = cfg["vit_patch_size"]
    mlp = cfg["vit_mlp_dim"]
    nc = cfg["num_classes"]
    depth = cfg["vit_depth"]
    n_tok = (cfg["image_size"] // p) ** 2 + 1

    keys = jax.random.split(key, 8 + depth)

    def nrm(k, shape, scale=0.05):
        return scale * jax.random.normal(k, shape, jnp.float32)

    params = {
        "patch_w": nrm(keys[0], (d, 3, p, p)),          # Conv2d weight (out,in,kh,kw)
        "patch_b": nrm(keys[1], (d,)),
        "pos_embed": jax.random.uniform(keys[2], (1, n_tok, d), jnp.float32),
        "cls_token": jax.random.normal(keys[3], (1, 1, d), jnp.float32),
        "norm_g": jnp.ones((d,), jnp.float32),
        "norm_b": jnp.zeros((d,), jnp.float32),
        "head_ln_g": jnp.ones((d,), jnp.float32),
        "head_ln_b": jnp.zeros((d,), jnp.float32),
        "head_w": nrm(keys[4], (nc, d)),                # nn.Linear weight (out,in)
        "head_b": nrm(keys[5], (nc,)),
        "layers": [],
    }
    for li in range(depth):
        lk = jax.random.split(keys[8 + li], 8)
        params["layers"].append({
            "in_proj_w": nrm(lk[0], (3 * d, d)),
            "in_proj_b": nrm(lk[1], (3 * d,)),
            "out_proj_w": nrm(lk[2], (d, d)),
            "out_proj_b": nrm(lk[3], (d,)),
            "lin1_w": nrm(lk[4], (mlp, d)),
            "lin1_b": nrm(lk[5], (mlp,)),
            "lin2_w": nrm(lk[6], (d, mlp)),
            "lin2_b": nrm(lk[7], (d,)),
            "norm1_g": jnp.ones((d,), jnp.float32),
            "norm1_b": jnp.zeros((d,), jnp.float32),
            "norm2_g": jnp.ones((d,), jnp.float32),
            "norm2_b": jnp.zeros((d,), jnp.float32),
        })
    return params


def pack_params(params, cfg):
    """One-time repack into 3 contiguous, 8-row-aligned f32 slabs.

    slab_d: width vit_dim — patch-embed, pos/cls, all (.., d) weights/biases/LN.
    slab_m: width vit_mlp — lin1 weight/bias per layer.
    head:   classifier weight/bias, lane-padded to a multiple of 128.
    Done once outside jit: no per-call transposes, 4 input DMAs per forward.
    """
    d = cfg["vit_dim"]
    mlp = cfg["vit_mlp_dim"]
    nc = cfg["num_classes"]
    off_d, nd_rows = _slab_d_layout(cfg)
    off_m, nm_rows = _slab_m_layout(cfg)

    def put(slab, off, name, val):
        val = jnp.asarray(val, jnp.float32)
        if val.ndim == 1:
            val = val[None, :]
        r = off[name]
        return slab.at[r:r + val.shape[0], :].set(val)

    sd = jnp.zeros((nd_rows, d), jnp.float32)
    sd = put(sd, off_d, "patch_w", params["patch_w"].reshape(d, -1).T)   # (c*p*p, d)
    sd = put(sd, off_d, "pos_rest", params["pos_embed"][0, 1:, :])
    sd = put(sd, off_d, "patch_b", params["patch_b"])
    sd = put(sd, off_d, "cls", params["cls_token"].reshape(1, d))
    sd = put(sd, off_d, "pos_cls", params["pos_embed"][0, 0:1, :])
    sd = put(sd, off_d, "norm_g", params["norm_g"])
    sd = put(sd, off_d, "norm_b", params["norm_b"])
    sd = put(sd, off_d, "hln_g", params["head_ln_g"])
    sd = put(sd, off_d, "hln_b", params["head_ln_b"])

    sm = jnp.zeros((nm_rows, mlp), jnp.float32)

    for li, l in enumerate(params["layers"]):
        wq = l["in_proj_w"][0 * d:1 * d, :].T
        wk = l["in_proj_w"][1 * d:2 * d, :].T
        wv = l["in_proj_w"][2 * d:3 * d, :].T
        bq = l["in_proj_b"][0 * d:1 * d]
        bk = l["in_proj_b"][1 * d:2 * d]
        bv = l["in_proj_b"][2 * d:3 * d]
        sd = put(sd, off_d, ("wq", li), wq)
        sd = put(sd, off_d, ("wk", li), wk)
        sd = put(sd, off_d, ("wv", li), wv)
        sd = put(sd, off_d, ("wo", li), l["out_proj_w"].T)
        sd = put(sd, off_d, ("w2", li), l["lin2_w"].T)
        sd = put(sd, off_d, ("bq", li), bq)
        sd = put(sd, off_d, ("bk", li), bk)
        sd = put(sd, off_d, ("bv", li), bv)
        sd = put(sd, off_d, ("bo", li), l["out_proj_b"])
        sd = put(sd, off_d, ("b2", li), l["lin2_b"])
        sd = put(sd, off_d, ("ln1_g", li), l["norm1_g"])
        sd = put(sd, off_d, ("ln1_b", li), l["norm1_b"])
        sd = put(sd, off_d, ("ln2_g", li), l["norm2_g"])
        sd = put(sd, off_d, ("ln2_b", li), l["norm2_b"])
        sm = put(sm, off_m, ("w1", li), l["lin1_w"].T)
        sm = put(sm, off_m, ("b1", li), l["lin1_b"])

    nc_pad = _round_up(nc, 128)
    head_rows = _round_up(d + 1, 8)
    head = jnp.zeros((head_rows, nc_pad), jnp.float32)
    head = head.at[0:d, 0:nc].set(params["head_w"].T)                   # (d, nc)
    head = head.at[d, 0:nc].set(params["head_b"])

    return dict(slab_d=sd, slab_m=sm, head=head)


# ----------------------------------------------------------------------------
# Forward pass: one pallas_call for the whole network
# ----------------------------------------------------------------------------
def vit_forward(x, packed, cfg):
    # layout: x is NCHW (b, 3, H, W), same as the PyTorch module.
    b, c, H, W = x.shape
    p = cfg["vit_patch_size"]
    d = cfg["vit_dim"]
    heads = cfg["vit_heads"]
    mlp = cfg["vit_mlp_dim"]
    depth = cfg["vit_depth"]
    nc = cfg["num_classes"]
    hp, wp = H // p, W // p
    n_patch = hp * wp
    T = _round_up(n_patch + 1, 8)            # padded tokens per image
    off_d, _ = _slab_d_layout(cfg)
    off_m, _ = _slab_m_layout(cfg)

    # Pure layout op: non-overlapping p x p patches as rows (stays in XLA).
    # TODO(synk): fold this gather into the kernel (index-math the patch rows)
    # if it ever shows up in the trace; ~1% at this size.
    patches = (x.reshape(b, c, hp, p, wp, p)
                 .transpose(0, 2, 4, 1, 3, 5)
                 .reshape(b * n_patch, c * p * p))

    kernel = functools.partial(
        _vit_kernel, S=b, n_patch=n_patch, heads=heads, hd=d // heads,
        E=d, mlp=mlp, depth=depth, off_d=off_d, off_m=off_m)

    args = (patches, packed["slab_d"], packed["slab_m"], packed["head"])
    nc_pad = packed["head"].shape[1]

    # TODO(synk): for real batch sizes (>= ~8 images) add a leading grid axis
    # over batch groups marked "parallel" so v7x's two TensorCores split the
    # work; at b=2 the extra sync would cost more than it saves.
    # TODO(synk): before scaling to real ViT sizes (dim 768+/depth 12+), move
    # depth to a grid axis and stream the per-layer weight slabs (double-
    # buffered) instead of holding all layers in VMEM — mandatory on v7x's
    # 64 MiB VMEM.
    out = pl.pallas_call(
        kernel,
        out_shape=jax.ShapeDtypeStruct((b, nc_pad), jnp.float32),
        grid=(1,),
        in_specs=[_full_spec(a.shape) for a in args],
        out_specs=pl.BlockSpec((b, nc_pad), lambda i: (0, 0)),
        scratch_shapes=[pltpu.VMEM((b * T, d), jnp.float32)],   # aligned token rows
        compiler_params=pltpu.CompilerParams(
            dimension_semantics=("arbitrary",)),
    )(*args)
    return out[:, :nc]


if __name__ == "__main__":
    cfg = CONFIG
    key = jax.random.PRNGKey(0)
    pkey, xkey = jax.random.split(key)
    params = init_params(pkey, cfg)
    packed = pack_params(params, cfg)        # one-time repack, outside jit
    x = jax.random.normal(xkey, (2, 3, cfg["image_size"], cfg["image_size"]),
                          jnp.float32)

    fwd = jax.jit(functools.partial(vit_forward, cfg=cfg))
    out = fwd(x, packed)
    jax.block_until_ready(out)
    assert out.shape == (2, cfg["num_classes"])
    assert bool(jnp.all(jnp.isfinite(out)))
    print("KERNEL_OK")
</pallas_src>

<mosaic_0001>
module attributes {stable_mosaic.version = 11 : i64} {
  func.func @_vit_kernel(%arg0: i32, %arg1: memref<32x48xf32, #tpu.memory_space<vmem>>, %arg2: memref<488x32xf32, #tpu.memory_space<vmem>>, %arg3: memref<80x64xf32, #tpu.memory_space<vmem>>, %arg4: memref<40x128xf32, #tpu.memory_space<vmem>>, %arg5: memref<2x128xf32, #tpu.memory_space<vmem>>, %arg6: memref<48x32xf32, #tpu.memory_space<vmem>>) attributes {dimension_semantics = [#tpu.dimension_semantics<arbitrary>], iteration_bounds = array<i64: 1>, scalar_prefetch = 0 : i64, scratch_operands = 1 : i64, tpu.core_type = #tpu.core_type<tc>, window_params = [{pipeline_mode = #tpu.pipeline_mode<synchronous>, transform_indices = @transform_0, window_bounds = array<i64: 32, 48>}, {pipeline_mode = #tpu.pipeline_mode<synchronous>, transform_indices = @transform_1, window_bounds = array<i64: 488, 32>}, {pipeline_mode = #tpu.pipeline_mode<synchronous>, transform_indices = @transform_2, window_bounds = array<i64: 80, 64>}, {pipeline_mode = #tpu.pipeline_mode<synchronous>, transform_indices = @transform_3, window_bounds = array<i64: 40, 128>}, {pipeline_mode = #tpu.pipeline_mode<synchronous>, transform_indices = @transform_4, window_bounds = array<i64: 2, 128>}]} {
    %0 = tpu.iota {dimensions = array<i32: 0>} : vector<32x4xi32>
    %1 = tpu.iota {dimensions = array<i32: 1>} : vector<32x4xi32>
    %c8_i32 = arith.constant 8 : i32
    %2 = vector.broadcast %c8_i32 : i32 to vector<32x4xi32>
    %3 = arith.muli %1, %2 : vector<32x4xi32>
    %4 = arith.cmpi sge, %0, %3 : vector<32x4xi32>
    %c1_i32 = arith.constant 1 : i32
    %5 = vector.broadcast %c1_i32 : i32 to vector<32x4xi32>
    %6 = arith.addi %1, %5 : vector<32x4xi32>
    %c8_i32_0 = arith.constant 8 : i32
    %7 = vector.broadcast %c8_i32_0 : i32 to vector<32x4xi32>
    %8 = arith.muli %6, %7 : vector<32x4xi32>
    %9 = arith.cmpi slt, %0, %8 : vector<32x4xi32>
    %10 = arith.andi %4, %9 : vector<32x4xi1>
    %cst = arith.constant 1.000000e+00 : f32
    %cst_1 = arith.constant 0.000000e+00 : f32
    %11 = vector.broadcast %cst : f32 to vector<32x4xf32>
    %12 = vector.broadcast %cst_1 : f32 to vector<32x4xf32>
    %13 = arith.select %10, %11, %12 : vector<32x4xi1>, vector<32x4xf32>
    %14 = tpu.iota {dimensions = array<i32: 0>} : vector<4x32xi32>
    %15 = tpu.iota {dimensions = array<i32: 1>} : vector<4x32xi32>
    %c8_i32_2 = arith.constant 8 : i32
    %16 = vector.broadcast %c8_i32_2 : i32 to vector<4x32xi32>
    %17 = arith.muli %14, %16 : vector<4x32xi32>
    %18 = arith.cmpi sge, %15, %17 : vector<4x32xi32>
    %c1_i32_3 = arith.constant 1 : i32
    %19 = vector.broadcast %c1_i32_3 : i32 to vector<4x32xi32>
    %20 = arith.addi %14, %19 : vector<4x32xi32>
    %c8_i32_4 = arith.constant 8 : i32
    %21 = vector.broadcast %c8_i32_4 : i32 to vector<4x32xi32>
    %22 = arith.muli %20, %21 : vector<4x32xi32>
    %23 = arith.cmpi slt, %15, %22 : vector<4x32xi32>
    %24 = arith.andi %18, %23 : vector<4x32xi1>
    %cst_5 = arith.constant 1.000000e+00 : f32
    %cst_6 = arith.constant 0.000000e+00 : f32
    %25 = vector.broadcast %cst_5 : f32 to vector<4x32xf32>
    %26 = vector.broadcast %cst_6 : f32 to vector<4x32xf32>
    %27 = arith.select %24, %25, %26 : vector<4x32xi1>, vector<4x32xf32>
    %c0 = arith.constant 0 : index
    %c0_7 = arith.constant 0 : index
    %28 = vector.load %arg2[%c0, %c0_7] : memref<488x32xf32, #tpu.memory_space<vmem>>, vector<48x32xf32>
    %c0_8 = arith.constant 0 : index
    %c0_9 = arith.constant 0 : index
    %29 = vector.load %arg1[%c0_8, %c0_9] : memref<32x48xf32, #tpu.memory_space<vmem>>, vector<32x48xf32>
    %cst_10 = arith.constant dense<0.000000e+00> : vector<32x32xf32>
    %30 = tpu.matmul %29, %28, %cst_10 {dimension_numbers = #tpu.dot_dimension_numbers<[1], [0], [0], [1], [0, 0, 1, 1], [], []>} : vector<32x48xf32>, vector<48x32xf32>, vector<32x32xf32> -> vector<32x32xf32>
    %c64 = arith.constant 64 : index
    %c0_11 = arith.constant 0 : index
    %31 = vector.load %arg2[%c64, %c0_11] : memref<488x32xf32, #tpu.memory_space<vmem>>, vector<1x32xf32>
    %32 = vector.broadcast %31 : vector<1x32xf32> to vector<32x32xf32>
    %33 = arith.addf %30, %32 : vector<32x32xf32>
    %c65 = arith.constant 65 : index
    %c0_12 = arith.constant 0 : index
    %34 = vector.load %arg2[%c65, %c0_12] : memref<488x32xf32, #tpu.memory_space<vmem>>, vector<1x32xf32>
    %c66 = arith.constant 66 : index
    %c0_13 = arith.constant 0 : index
    %35 = vector.load %arg2[%c66, %c0_13] : memref<488x32xf32, #tpu.memory_space<vmem>>, vector<1x32xf32>
    %36 = arith.addf %34, %35 : vector<1x32xf32>
    %c48 = arith.constant 48 : index
    %c0_14 = arith.constant 0 : index
    %37 = vector.load %arg2[%c48, %c0_14] : memref<488x32xf32, #tpu.memory_space<vmem>>, vector<16x32xf32>
    %cst_15 = arith.constant 0.000000e+00 : f32
    %38 = vector.broadcast %cst_15 : f32 to vector<48x32xf32>
    %c0_16 = arith.constant 0 : index
    %c0_17 = arith.constant 0 : index
    %39 = vector.load %arg6[%c0_16, %c0_17] : memref<48x32xf32, #tpu.memory_space<vmem>>, vector<48x32xf32>
    tpu.vector_store %arg6[%c0_16, %c0_17], %38 {strides = array<i32>} : memref<48x32xf32, #tpu.memory_space<vmem>>, vector<48x32xf32>,
    %40 = vector.extract_strided_slice %33 {offsets = [0, 0], sizes = [16, 32], strides = [1, 1]} : vector<32x32xf32> to vector<16x32xf32>
    %41 = arith.addf %40, %37 : vector<16x32xf32>
    %c0_18 = arith.constant 0 : index
    %c0_19 = arith.constant 0 : index
    %42 = vector.load %arg6[%c0_18, %c0_19] : memref<48x32xf32, #tpu.memory_space<vmem>>, vector<16x32xf32>
    tpu.vector_store %arg6[%c0_18, %c0_19], %41 {strides = array<i32>} : memref<48x32xf32, #tpu.memory_space<vmem>>, vector<16x32xf32>,
    %c16 = arith.constant 16 : index
    %c0_20 = arith.constant 0 : index
    %43 = vector.load %arg6[%c16, %c0_20] : memref<48x32xf32, #tpu.memory_space<vmem>>, vector<1x32xf32>
    tpu.vector_store %arg6[%c16, %c0_20], %36 {strides = array<i32>} : memref<48x32xf32, #tpu.memory_space<vmem>>, vector<1x32xf32>,
    %44 = vector.extract_strided_slice %33 {offsets = [16, 0], sizes = [16, 32], strides = [1, 1]} : vector<32x32xf32> to vector<16x32xf32>
    %45 = arith.addf %44, %37 : vector<16x32xf32>
    %c24 = arith.constant 24 : index
    %c0_21 = arith.constant 0 : index
    %46 = vector.load %arg6[%c24, %c0_21] : memref<48x32xf32, #tpu.memory_space<vmem>>, vector<16x32xf32>
    tpu.vector_store %arg6[%c24, %c0_21], %45 {strides = array<i32>} : memref<48x32xf32, #tpu.memory_space<vmem>>, vector<16x32xf32>,
    %c40 = arith.constant 40 : index
    %c0_22 = arith.constant 0 : index
    %47 = vector.load %arg6[%c40, %c0_22] : memref<48x32xf32, #tpu.memory_space<vmem>>, vector<1x32xf32>
    tpu.vector_store %arg6[%c40, %c0_22], %36 {strides = array<i32>} : memref<48x32xf32, #tpu.memory_space<vmem>>, vector<1x32xf32>,
    %c0_23 = arith.constant 0 : index
    %c0_24 = arith.constant 0 : index
    %48 = vector.load %arg6[%c0_23, %c0_24] : memref<48x32xf32, #tpu.memory_space<vmem>>, vector<24x32xf32>
    %c24_25 = arith.constant 24 : index
    %c0_26 = arith.constant 0 : index
    %49 = vector.load %arg6[%c24_25, %c0_26] : memref<48x32xf32, #tpu.memory_space<vmem>>, vector<24x32xf32>
    %c72 = arith.constant 72 : index
    %c0_27 = arith.constant 0 : index
    %50 = vector.load %arg2[%c72, %c0_27] : memref<488x32xf32, #tpu.memory_space<vmem>>, vector<32x32xf32>
    %c104 = arith.constant 104 : index
    %c0_28 = arith.constant 0 : index
    %51 = vector.load %arg2[%c104, %c0_28] : memref<488x32xf32, #tpu.memory_space<vmem>>, vector<32x32xf32>
    %c136 = arith.constant 136 : index
    %c0_29 = arith.constant 0 : index
    %52 = vector.load %arg2[%c136, %c0_29] : memref<488x32xf32, #tpu.memory_space<vmem>>, vector<32x32xf32>
    %c168 = arith.constant 168 : index
    %c0_30 = arith.constant 0 : index
    %53 = vector.load %arg2[%c168, %c0_30] : memref<488x32xf32, #tpu.memory_space<vmem>>, vector<32x32xf32>
    %c200 = arith.constant 200 : index
    %c0_31 = arith.constant 0 : index
    %54 = vector.load %arg2[%c200, %c0_31] : memref<488x32xf32, #tpu.memory_space<vmem>>, vector<64x32xf32>
    %c264 = arith.constant 264 : index
    %c0_32 = arith.constant 0 : index
    %55 = vector.load %arg2[%c264, %c0_32] : memref<488x32xf32, #tpu.memory_space<vmem>>, vector<1x32xf32>
    %c265 = arith.constant 265 : index
    %c0_33 = arith.constant 0 : index
    %56 = vector.load %arg2[%c265, %c0_33] : memref<488x32xf32, #tpu.memory_space<vmem>>, vector<1x32xf32>
    %c266 = arith.constant 266 : index
    %c0_34 = arith.constant 0 : index
    %57 = vector.load %arg2[%c266, %c0_34] : memref<488x32xf32, #tpu.memory_space<vmem>>, vector<1x32xf32>
    %c267 = arith.constant 267 : index
    %c0_35 = arith.constant 0 : index
    %58 = vector.load %arg2[%c267, %c0_35] : memref<488x32xf32, #tpu.memory_space<vmem>>, vector<1x32xf32>
    %c268 = arith.constant 268 : index
    %c0_36 = arith.constant 0 : index
    %59 = vector.load %arg2[%c268, %c0_36] : memref<488x32xf32, #tpu.memory_space<vmem>>, vector<1x32xf32>
    %c269 = arith.constant 269 : index
    %c0_37 = arith.constant 0 : index
    %60 = vector.load %arg2[%c269, %c0_37] : memref<488x32xf32, #tpu.memory_space<vmem>>, vector<1x32xf32>
    %c270 = arith.constant 270 : index
    %c0_38 = arith.constant 0 : index
    %61 = vector.load %arg2[%c270, %c0_38] : memref<488x32xf32, #tpu.memory_space<vmem>>, vector<1x32xf32>
    %c271 = arith.constant 271 : index
    %c0_39 = arith.constant 0 : index
    %62 = vector.load %arg2[%c271, %c0_39] : memref<488x32xf32, #tpu.memory_space<vmem>>, vector<1x32xf32>
    %c272 = arith.constant 272 : index
    %c0_40 = arith.constant 0 : index
    %63 = vector.load %arg2[%c272, %c0_40] : memref<488x32xf32, #tpu.memory_space<vmem>>, vector<1x32xf32>
    %c0_41 = arith.constant 0 : index
    %c0_42 = arith.constant 0 : index
    %64 = vector.load %arg3[%c0_41, %c0_42] : memref<80x64xf32, #tpu.memory_space<vmem>>, vector<32x64xf32>
    %c32 = arith.constant 32 : index
    %c0_43 = arith.constant 0 : index
    %65 = vector.load %arg3[%c32, %c0_43] : memref<80x64xf32, #tpu.memory_space<vmem>>, vector<1x64xf32>
    %cst_44 = arith.constant dense<0.000000e+00> : vector<24x32xf32>
    %66 = tpu.matmul %48, %50, %cst_44 {dimension_numbers = #tpu.dot_dimension_numbers<[1], [0], [0], [1], [0, 0, 1, 1], [], []>} : vector<24x32xf32>, vector<32x32xf32>, vector<24x32xf32> -> vector<24x32xf32>
    %67 = vector.broadcast %55 : vector<1x32xf32> to vector<24x32xf32>
    %68 = arith.addf %66, %67 : vector<24x32xf32>
    %cst_45 = arith.constant dense<0.000000e+00> : vector<24x32xf32>
    %69 = tpu.matmul %49, %50, %cst_45 {dimension_numbers = #tpu.dot_dimension_numbers<[1], [0], [0], [1], [0, 0, 1, 1], [], []>} : vector<24x32xf32>, vector<32x32xf32>, vector<24x32xf32> -> vector<24x32xf32>
    %70 = vector.broadcast %55 : vector<1x32xf32> to vector<24x32xf32>
    %71 = arith.addf %69, %70 : vector<24x32xf32>
    %cst_46 = arith.constant dense<0.000000e+00> : vector<24x32xf32>
    %72 = tpu.matmul %48, %51, %cst_46 {dimension_numbers = #tpu.dot_dimension_numbers<[1], [0], [0], [1], [0, 0, 1, 1], [], []>} : vector<24x32xf32>, vector<32x32xf32>, vector<24x32xf32> -> vector<24x32xf32>
    %73 = vector.broadcast %56 : vector<1x32xf32> to vector<24x32xf32>
    %74 = arith.addf %72, %73 : vector<24x32xf32>
    %cst_47 = arith.constant dense<0.000000e+00> : vector<24x32xf32>
    %75 = tpu.matmul %49, %51, %cst_47 {dimension_numbers = #tpu.dot_dimension_numbers<[1], [0], [0], [1], [0, 0, 1, 1], [], []>} : vector<24x32xf32>, vector<32x32xf32>, vector<24x32xf32> -> vector<24x32xf32>
    %76 = vector.broadcast %56 : vector<1x32xf32> to vector<24x32xf32>
    %77 = arith.addf %75, %76 : vector<24x32xf32>
    %cst_48 = arith.constant dense<0.000000e+00> : vector<24x32xf32>
    %78 = tpu.matmul %48, %52, %cst_48 {dimension_numbers = #tpu.dot_dimension_numbers<[1], [0], [0], [1], [0, 0, 1, 1], [], []>} : vector<24x32xf32>, vector<32x32xf32>, vector<24x32xf32> -> vector<24x32xf32>
    %79 = vector.broadcast %57 : vector<1x32xf32> to vector<24x32xf32>
    %80 = arith.addf %78, %79 : vector<24x32xf32>
    %cst_49 = arith.constant dense<0.000000e+00> : vector<24x32xf32>
    %81 = tpu.matmul %49, %52, %cst_49 {dimension_numbers = #tpu.dot_dimension_numbers<[1], [0], [0], [1], [0, 0, 1, 1], [], []>} : vector<24x32xf32>, vector<32x32xf32>, vector<24x32xf32> -> vector<24x32xf32>
    %82 = vector.broadcast %57 : vector<1x32xf32> to vector<24x32xf32>
    %83 = arith.addf %81, %82 : vector<24x32xf32>
    %84 = arith.mulf %68, %74 : vector<24x32xf32>
    %cst_50 = arith.constant dense<0.000000e+00> : vector<24x4xf32>
    %85 = tpu.matmul %84, %13, %cst_50 {dimension_numbers = #tpu.dot_dimension_numbers<[1], [0], [0], [1], [0, 0, 1, 1], [], []>} : vector<24x32xf32>, vector<32x4xf32>, vector<24x4xf32> -> vector<24x4xf32>
    %cst_51 = arith.constant 0.353553385 : f32
    %86 = vector.broadcast %cst_51 : f32 to vector<24x4xf32>
    %87 = arith.mulf %85, %86 : vector<24x4xf32>
    %88 = arith.mulf %68, %77 : vector<24x32xf32>
    %cst_52 = arith.constant dense<0.000000e+00> : vector<24x4xf32>
    %89 = tpu.matmul %88, %13, %cst_52 {dimension_numbers = #tpu.dot_dimension_numbers<[1], [0], [0], [1], [0, 0, 1, 1], [], []>} : vector<24x32xf32>, vector<32x4xf32>, vector<24x4xf32> -> vector<24x4xf32>
    %cst_53 = arith.constant 0.353553385 : f32
    %90 = vector.broadcast %cst_53 : f32 to vector<24x4xf32>
    %91 = arith.mulf %89, %90 : vector<24x4xf32>
    %92 = arith.maximumf %87, %91 : vector<24x4xf32>
    %93 = arith.subf %87, %92 : vector<24x4xf32>
    %94 = math.exp %93 : vector<24x4xf32>
    %95 = arith.subf %91, %92 : vector<24x4xf32>
    %96 = math.exp %95 : vector<24x4xf32>
    %97 = arith.addf %94, %96 : vector<24x4xf32>
    %98 = tpu.reciprocal %97 {approx = true} : vector<24x4xf32> -> vector<24x4xf32>
    %99 = arith.mulf %94, %98 : vector<24x4xf32>
    %cst_54 = arith.constant dense<0.000000e+00> : vector<24x32xf32>
    %100 = tpu.matmul %99, %27, %cst_54 {dimension_numbers = #tpu.dot_dimension_numbers<[1], [0], [0], [1], [0, 0, 1, 1], [], []>} : vector<24x4xf32>, vector<4x32xf32>, vector<24x32xf32> -> vector<24x32xf32>
    %101 = arith.mulf %100, %80 : vector<24x32xf32>
    %102 = arith.mulf %96, %98 : vector<24x4xf32>
    %cst_55 = arith.constant dense<0.000000e+00> : vector<24x32xf32>
    %103 = tpu.matmul %102, %27, %cst_55 {dimension_numbers = #tpu.dot_dimension_numbers<[1], [0], [0], [1], [0, 0, 1, 1], [], []>} : vector<24x4xf32>, vector<4x32xf32>, vector<24x32xf32> -> vector<24x32xf32>
    %104 = arith.mulf %103, %83 : vector<24x32xf32>
    %105 = arith.addf %101, %104 : vector<24x32xf32>
    %cst_56 = arith.constant dense<0.000000e+00> : vector<24x32xf32>
    %106 = tpu.matmul %105, %53, %cst_56 {dimension_numbers = #tpu.dot_dimension_numbers<[1], [0], [0], [1], [0, 0, 1, 1], [], []>} : vector<24x32xf32>, vector<32x32xf32>, vector<24x32xf32> -> vector<24x32xf32>
    %107 = vector.broadcast %58 : vector<1x32xf32> to vector<24x32xf32>
    %108 = arith.addf %106, %107 : vector<24x32xf32>
    %109 = arith.addf %48, %108 : vector<24x32xf32>
    %cst_57 = arith.constant dense<0.000000e+00> : vector<24xf32>
    %110 = vector.multi_reduction <add>, %109, %cst_57 [1] : vector<24x32xf32> to vector<24xf32>
    %111 = vector.shape_cast %110 : vector<24xf32> to vector<24x1xf32>
    %cst_58 = arith.constant 3.200000e+01 : f32
    %112 = vector.broadcast %cst_58 : f32 to vector<24x1xf32>
    %113 = arith.divf %111, %112 : vector<24x1xf32>
    %114 = vector.broadcast %113 : vector<24x1xf32> to vector<24x32xf32>
    %115 = arith.subf %109, %114 : vector<24x32xf32>
    %116 = arith.mulf %115, %115 : vector<24x32xf32>
    %cst_59 = arith.constant dense<0.000000e+00> : vector<24xf32>
    %117 = vector.multi_reduction <add>, %116, %cst_59 [1] : vector<24x32xf32> to vector<24xf32>
    %118 = vector.shape_cast %117 : vector<24xf32> to vector<24x1xf32>
    %cst_60 = arith.constant 3.200000e+01 : f32
    %119 = vector.broadcast %cst_60 : f32 to vector<24x1xf32>
    %120 = arith.divf %118, %119 : vector<24x1xf32>
    %cst_61 = arith.constant 9.99999974E-6 : f32
    %121 = vector.broadcast %cst_61 : f32 to vector<24x1xf32>
    %122 = arith.addf %120, %121 : vector<24x1xf32>
    %123 = math.rsqrt %122 : vector<24x1xf32>
    %124 = vector.broadcast %123 : vector<24x1xf32> to vector<24x32xf32>
    %125 = arith.mulf %115, %124 : vector<24x32xf32>
    %126 = vector.broadcast %60 : vector<1x32xf32> to vector<24x32xf32>
    %127 = arith.mulf %125, %126 : vector<24x32xf32>
    %128 = vector.broadcast %61 : vector<1x32xf32> to vector<24x32xf32>
    %129 = arith.addf %127, %128 : vector<24x32xf32>
    %cst_62 = arith.constant dense<0.000000e+00> : vector<24x64xf32>
    %130 = tpu.matmul %129, %64, %cst_62 {dimension_numbers = #tpu.dot_dimension_numbers<[1], [0], [0], [1], [0, 0, 1, 1], [], []>} : vector<24x32xf32>, vector<32x64xf32>, vector<24x64xf32> -> vector<24x64xf32>
    %131 = vector.broadcast %65 : vector<1x64xf32> to vector<24x64xf32>
    %132 = arith.addf %130, %131 : vector<24x64xf32>
    %cst_63 = arith.constant 5.000000e-01 : f32
    %133 = vector.broadcast %cst_63 : f32 to vector<24x64xf32>
    %134 = arith.mulf %133, %132 : vector<24x64xf32>
    %cst_64 = arith.constant 0.707106769 : f32
    %135 = vector.broadcast %cst_64 : f32 to vector<24x64xf32>
    %136 = arith.mulf %132, %135 : vector<24x64xf32>
    %cst_65 = arith.constant 0.000000e+00 : f32
    %137 = vector.broadcast %cst_65 : f32 to vector<24x64xf32>
    %138 = arith.cmpf oge, %136, %137 : vector<24x64xf32>
    %cst_66 = arith.constant 1.000000e+00 : f32
    %cst_67 = arith.constant -1.000000e+00 : f32
    %139 = vector.broadcast %cst_66 : f32 to vector<24x64xf32>
    %140 = vector.broadcast %cst_67 : f32 to vector<24x64xf32>
    %141 = arith.select %138, %139, %140 : vector<24x64xi1>, vector<24x64xf32>
    %142 = math.absf %136 : vector<24x64xf32>
    %cst_68 = arith.constant 0.327591091 : f32
    %143 = vector.broadcast %cst_68 : f32 to vector<24x64xf32>
    %144 = arith.mulf %143, %142 : vector<24x64xf32>
    %cst_69 = arith.constant 1.000000e+00 : f32
    %145 = vector.broadcast %cst_69 : f32 to vector<24x64xf32>
    %146 = arith.addf %145, %144 : vector<24x64xf32>
    %cst_70 = arith.constant 1.000000e+00 : f32
    %147 = vector.broadcast %cst_70 : f32 to vector<24x64xf32>
    %148 = arith.divf %147, %146 : vector<24x64xf32>
    %cst_71 = arith.constant 1.06140542 : f32
    %149 = vector.broadcast %cst_71 : f32 to vector<24x64xf32>
    %150 = arith.mulf %149, %148 : vector<24x64xf32>
    %cst_72 = arith.constant -1.45315206 : f32
    %151 = vector.broadcast %cst_72 : f32 to vector<24x64xf32>
    %152 = arith.addf %150, %151 : vector<24x64xf32>
    %153 = arith.mulf %152, %148 : vector<24x64xf32>
    %cst_73 = arith.constant 1.42141378 : f32
    %154 = vector.broadcast %cst_73 : f32 to vector<24x64xf32>
    %155 = arith.addf %153, %154 : vector<24x64xf32>
    %156 = arith.mulf %155, %148 : vector<24x64xf32>
    %cst_74 = arith.constant -0.284496725 : f32
    %157 = vector.broadcast %cst_74 : f32 to vector<24x64xf32>
    %158 = arith.addf %156, %157 : vector<24x64xf32>
    %159 = arith.mulf %158, %148 : vector<24x64xf32>
    %cst_75 = arith.constant 0.254829586 : f32
    %160 = vector.broadcast %cst_75 : f32 to vector<24x64xf32>
    %161 = arith.addf %159, %160 : vector<24x64xf32>
    %162 = arith.mulf %161, %148 : vector<24x64xf32>
    %cst_76 = arith.constant 0.000000e+00 : f32
    %163 = vector.broadcast %cst_76 : f32 to vector<24x64xf32>
    %164 = arith.subf %163, %142 : vector<24x64xf32>
    %165 = arith.mulf %164, %142 : vector<24x64xf32>
    %166 = math.exp %165 : vector<24x64xf32>
    %167 = arith.mulf %162, %166 : vector<24x64xf32>
    %cst_77 = arith.constant 1.000000e+00 : f32
    %168 = vector.broadcast %cst_77 : f32 to vector<24x64xf32>
    %169 = arith.subf %168, %167 : vector<24x64xf32>
    %170 = arith.mulf %141, %169 : vector<24x64xf32>
    %cst_78 = arith.constant 1.000000e+00 : f32
    %171 = vector.broadcast %cst_78 : f32 to vector<24x64xf32>
    %172 = arith.addf %171, %170 : vector<24x64xf32>
    %173 = arith.mulf %134, %172 : vector<24x64xf32>
    %cst_79 = arith.constant dense<0.000000e+00> : vector<24x32xf32>
    %174 = tpu.matmul %173, %54, %cst_79 {dimension_numbers = #tpu.dot_dimension_numbers<[1], [0], [0], [1], [0, 0, 1, 1], [], []>} : vector<24x64xf32>, vector<64x32xf32>, vector<24x32xf32> -> vector<24x32xf32>
    %175 = vector.broadcast %59 : vector<1x32xf32> to vector<24x32xf32>
    %176 = arith.addf %174, %175 : vector<24x32xf32>
    %177 = arith.addf %129, %176 : vector<24x32xf32>
    %cst_80 = arith.constant dense<0.000000e+00> : vector<24xf32>
    %178 = vector.multi_reduction <add>, %177, %cst_80 [1] : vector<24x32xf32> to vector<24xf32>
    %179 = vector.shape_cast %178 : vector<24xf32> to vector<24x1xf32>
    %cst_81 = arith.constant 3.200000e+01 : f32
    %180 = vector.broadcast %cst_81 : f32 to vector<24x1xf32>
    %181 = arith.divf %179, %180 : vector<24x1xf32>
    %182 = vector.broadcast %181 : vector<24x1xf32> to vector<24x32xf32>
    %183 = arith.subf %177, %182 : vector<24x32xf32>
    %184 = arith.mulf %183, %183 : vector<24x32xf32>
    %cst_82 = arith.constant dense<0.000000e+00> : vector<24xf32>
    %185 = vector.multi_reduction <add>, %184, %cst_82 [1] : vector<24x32xf32> to vector<24xf32>
    %186 = vector.shape_cast %185 : vector<24xf32> to vector<24x1xf32>
    %cst_83 = arith.constant 3.200000e+01 : f32
    %187 = vector.broadcast %cst_83 : f32 to vector<24x1xf32>
    %188 = arith.divf %186, %187 : vector<24x1xf32>
    %cst_84 = arith.constant 9.99999974E-6 : f32
    %189 = vector.broadcast %cst_84 : f32 to vector<24x1xf32>
    %190 = arith.addf %188, %189 : vector<24x1xf32>
    %191 = math.rsqrt %190 : vector<24x1xf32>
    %192 = vector.broadcast %191 : vector<24x1xf32> to vector<24x32xf32>
    %193 = arith.mulf %183, %192 : vector<24x32xf32>
    %194 = vector.broadcast %62 : vector<1x32xf32> to vector<24x32xf32>
    %195 = arith.mulf %193, %194 : vector<24x32xf32>
    %196 = vector.broadcast %63 : vector<1x32xf32> to vector<24x32xf32>
    %197 = arith.addf %195, %196 : vector<24x32xf32>
    %198 = arith.mulf %71, %74 : vector<24x32xf32>
    %cst_85 = arith.constant dense<0.000000e+00> : vector<24x4xf32>
    %199 = tpu.matmul %198, %13, %cst_85 {dimension_numbers = #tpu.dot_dimension_numbers<[1], [0], [0], [1], [0, 0, 1, 1], [], []>} : vector<24x32xf32>, vector<32x4xf32>, vector<24x4xf32> -> vector<24x4xf32>
    %cst_86 = arith.constant 0.353553385 : f32
    %200 = vector.broadcast %cst_86 : f32 to vector<24x4xf32>
    %201 = arith.mulf %199, %200 : vector<24x4xf32>
    %202 = arith.mulf %71, %77 : vector<24x32xf32>
    %cst_87 = arith.constant dense<0.000000e+00> : vector<24x4xf32>
    %203 = tpu.matmul %202, %13, %cst_87 {dimension_numbers = #tpu.dot_dimension_numbers<[1], [0], [0], [1], [0, 0, 1, 1], [], []>} : vector<24x32xf32>, vector<32x4xf32>, vector<24x4xf32> -> vector<24x4xf32>
    %cst_88 = arith.constant 0.353553385 : f32
    %204 = vector.broadcast %cst_88 : f32 to vector<24x4xf32>
    %205 = arith.mulf %203, %204 : vector<24x4xf32>
    %206 = arith.maximumf %201, %205 : vector<24x4xf32>
    %207 = arith.subf %201, %206 : vector<24x4xf32>
    %208 = math.exp %207 : vector<24x4xf32>
    %209 = arith.subf %205, %206 : vector<24x4xf32>
    %210 = math.exp %209 : vector<24x4xf32>
    %211 = arith.addf %208, %210 : vector<24x4xf32>
    %212 = tpu.reciprocal %211 {approx = true} : vector<24x4xf32> -> vector<24x4xf32>
    %213 = arith.mulf %208, %212 : vector<24x4xf32>
    %cst_89 = arith.constant dense<0.000000e+00> : vector<24x32xf32>
    %214 = tpu.matmul %213, %27, %cst_89 {dimension_numbers = #tpu.dot_dimension_numbers<[1], [0], [0], [1], [0, 0, 1, 1], [], []>} : vector<24x4xf32>, vector<4x32xf32>, vector<24x32xf32> -> vector<24x32xf32>
    %215 = arith.mulf %214, %80 : vector<24x32xf32>
    %216 = arith.mulf %210, %212 : vector<24x4xf32>
    %cst_90 = arith.constant dense<0.000000e+00> : vector<24x32xf32>
    %217 = tpu.matmul %216, %27, %cst_90 {dimension_numbers = #tpu.dot_dimension_numbers<[1], [0], [0], [1], [0, 0, 1, 1], [], []>} : vector<24x4xf32>, vector<4x32xf32>, vector<24x32xf32> -> vector<24x32xf32>
    %218 = arith.mulf %217, %83 : vector<24x32xf32>
    %219 = arith.addf %215, %218 : vector<24x32xf32>
    %cst_91 = arith.constant dense<0.000000e+00> : vector<24x32xf32>
    %220 = tpu.matmul %219, %53, %cst_91 {dimension_numbers = #tpu.dot_dimension_numbers<[1], [0], [0], [1], [0, 0, 1, 1], [], []>} : vector<24x32xf32>, vector<32x32xf32>, vector<24x32xf32> -> vector<24x32xf32>
    %221 = vector.broadcast %58 : vector<1x32xf32> to vector<24x32xf32>
    %222 = arith.addf %220, %221 : vector<24x32xf32>
    %223 = arith.addf %49, %222 : vector<24x32xf32>
    %cst_92 = arith.constant dense<0.000000e+00> : vector<24xf32>
    %224 = vector.multi_reduction <add>, %223, %cst_92 [1] : vector<24x32xf32> to vector<24xf32>
    %225 = vector.shape_cast %224 : vector<24xf32> to vector<24x1xf32>
    %cst_93 = arith.constant 3.200000e+01 : f32
    %226 = vector.broadcast %cst_93 : f32 to vector<24x1xf32>
    %227 = arith.divf %225, %226 : vector<24x1xf32>
    %228 = vector.broadcast %227 : vector<24x1xf32> to vector<24x32xf32>
    %229 = arith.subf %223, %228 : vector<24x32xf32>
    %230 = arith.mulf %229, %229 : vector<24x32xf32>
    %cst_94 = arith.constant dense<0.000000e+00> : vector<24xf32>
    %231 = vector.multi_reduction <add>, %230, %cst_94 [1] : vector<24x32xf32> to vector<24xf32>
    %232 = vector.shape_cast %231 : vector<24xf32> to vector<24x1xf32>
    %cst_95 = arith.constant 3.200000e+01 : f32
    %233 = vector.broadcast %cst_95 : f32 to vector<24x1xf32>
    %234 = arith.divf %232, %233 : vector<24x1xf32>
    %cst_96 = arith.constant 9.99999974E-6 : f32
    %235 = vector.broadcast %cst_96 : f32 to vector<24x1xf32>
    %236 = arith.addf %234, %235 : vector<24x1xf32>
    %237 = math.rsqrt %236 : vector<24x1xf32>
    %238 = vector.broadcast %237 : vector<24x1xf32> to vector<24x32xf32>
    %239 = arith.mulf %229, %238 : vector<24x32xf32>
    %240 = vector.broadcast %60 : vector<1x32xf32> to vector<24x32xf32>
    %241 = arith.mulf %239, %240 : vector<24x32xf32>
    %242 = vector.broadcast %61 : vector<1x32xf32> to vector<24x32xf32>
    %243 = arith.addf %241, %242 : vector<24x32xf32>
    %cst_97 = arith.constant dense<0.000000e+00> : vector<24x64xf32>
    %244 = tpu.matmul %243, %64, %cst_97 {dimension_numbers = #tpu.dot_dimension_numbers<[1], [0], [0], [1], [0, 0, 1, 1], [], []>} : vector<24x32xf32>, vector<32x64xf32>, vector<24x64xf32> -> vector<24x64xf32>
    %245 = vector.broadcast %65 : vector<1x64xf32> to vector<24x64xf32>
    %246 = arith.addf %244, %245 : vector<24x64xf32>
    %cst_98 = arith.constant 5.000000e-01 : f32
    %247 = vector.broadcast %cst_98 : f32 to vector<24x64xf32>
    %248 = arith.mulf %247, %246 : vector<24x64xf32>
    %cst_99 = arith.constant 0.707106769 : f32
    %249 = vector.broadcast %cst_99 : f32 to vector<24x64xf32>
    %250 = arith.mulf %246, %249 : vector<24x64xf32>
    %cst_100 = arith.constant 0.000000e+00 : f32
    %251 = vector.broadcast %cst_100 : f32 to vector<24x64xf32>
    %252 = arith.cmpf oge, %250, %251 : vector<24x64xf32>
    %cst_101 = arith.constant 1.000000e+00 : f32
    %cst_102 = arith.constant -1.000000e+00 : f32
    %253 = vector.broadcast %cst_101 : f32 to vector<24x64xf32>
    %254 = vector.broadcast %cst_102 : f32 to vector<24x64xf32>
    %255 = arith.select %252, %253, %254 : vector<24x64xi1>, vector<24x64xf32>
    %256 = math.absf %250 : vector<24x64xf32>
    %cst_103 = arith.constant 0.327591091 : f32
    %257 = vector.broadcast %cst_103 : f32 to vector<24x64xf32>
    %258 = arith.mulf %257, %256 : vector<24x64xf32>
    %cst_104 = arith.constant 1.000000e+00 : f32
    %259 = vector.broadcast %cst_104 : f32 to vector<24x64xf32>
    %260 = arith.addf %259, %258 : vector<24x64xf32>
    %cst_105 = arith.constant 1.000000e+00 : f32
    %261 = vector.broadcast %cst_105 : f32 to vector<24x64xf32>
    %262 = arith.divf %261, %260 : vector<24x64xf32>
    %cst_106 = arith.constant 1.06140542 : f32
    %263 = vector.broadcast %cst_106 : f32 to vector<24x64xf32>
    %264 = arith.mulf %263, %262 : vector<24x64xf32>
    %cst_107 = arith.constant -1.45315206 : f32
    %265 = vector.broadcast %cst_107 : f32 to vector<24x64xf32>
    %266 = arith.addf %264, %265 : vector<24x64xf32>
    %267 = arith.mulf %266, %262 : vector<24x64xf32>
    %cst_108 = arith.constant 1.42141378 : f32
    %268 = vector.broadcast %cst_108 : f32 to vector<24x64xf32>
    %269 = arith.addf %267, %268 : vector<24x64xf32>
    %270 = arith.mulf %269, %262 : vector<24x64xf32>
    %cst_109 = arith.constant -0.284496725 : f32
    %271 = vector.broadcast %cst_109 : f32 to vector<24x64xf32>
    %272 = arith.addf %270, %271 : vector<24x64xf32>
    %273 = arith.mulf %272, %262 : vector<24x64xf32>
    %cst_110 = arith.constant 0.254829586 : f32
    %274 = vector.broadcast %cst_110 : f32 to vector<24x64xf32>
    %275 = arith.addf %273, %274 : vector<24x64xf32>
    %276 = arith.mulf %275, %262 : vector<24x64xf32>
    %cst_111 = arith.constant 0.000000e+00 : f32
    %277 = vector.broadcast %cst_111 : f32 to vector<24x64xf32>
    %278 = arith.subf %277, %256 : vector<24x64xf32>
    %279 = arith.mulf %278, %256 : vector<24x64xf32>
    %280 = math.exp %279 : vector<24x64xf32>
    %281 = arith.mulf %276, %280 : vector<24x64xf32>
    %cst_112 = arith.constant 1.000000e+00 : f32
    %282 = vector.broadcast %cst_112 : f32 to vector<24x64xf32>
    %283 = arith.subf %282, %281 : vector<24x64xf32>
    %284 = arith.mulf %255, %283 : vector<24x64xf32>
    %cst_113 = arith.constant 1.000000e+00 : f32
    %285 = vector.broadcast %cst_113 : f32 to vector<24x64xf32>
    %286 = arith.addf %285, %284 : vector<24x64xf32>
    %287 = arith.mulf %248, %286 : vector<24x64xf32>
    %cst_114 = arith.constant dense<0.000000e+00> : vector<24x32xf32>
    %288 = tpu.matmul %287, %54, %cst_114 {dimension_numbers = #tpu.dot_dimension_numbers<[1], [0], [0], [1], [0, 0, 1, 1], [], []>} : vector<24x64xf32>, vector<64x32xf32>, vector<24x32xf32> -> vector<24x32xf32>
    %289 = vector.broadcast %59 : vector<1x32xf32> to vector<24x32xf32>
    %290 = arith.addf %288, %289 : vector<24x32xf32>
    %291 = arith.addf %243, %290 : vector<24x32xf32>
    %cst_115 = arith.constant dense<0.000000e+00> : vector<24xf32>
    %292 = vector.multi_reduction <add>, %291, %cst_115 [1] : vector<24x32xf32> to vector<24xf32>
    %293 = vector.shape_cast %292 : vector<24xf32> to vector<24x1xf32>
    %cst_116 = arith.constant 3.200000e+01 : f32
    %294 = vector.broadcast %cst_116 : f32 to vector<24x1xf32>
    %295 = arith.divf %293, %294 : vector<24x1xf32>
    %296 = vector.broadcast %295 : vector<24x1xf32> to vector<24x32xf32>
    %297 = arith.subf %291, %296 : vector<24x32xf32>
    %298 = arith.mulf %297, %297 : vector<24x32xf32>
    %cst_117 = arith.constant dense<0.000000e+00> : vector<24xf32>
    %299 = vector.multi_reduction <add>, %298, %cst_117 [1] : vector<24x32xf32> to vector<24xf32>
    %300 = vector.shape_cast %299 : vector<24xf32> to vector<24x1xf32>
    %cst_118 = arith.constant 3.200000e+01 : f32
    %301 = vector.broadcast %cst_118 : f32 to vector<24x1xf32>
    %302 = arith.divf %300, %301 : vector<24x1xf32>
    %cst_119 = arith.constant 9.99999974E-6 : f32
    %303 = vector.broadcast %cst_119 : f32 to vector<24x1xf32>
    %304 = arith.addf %302, %303 : vector<24x1xf32>
    %305 = math.rsqrt %304 : vector<24x1xf32>
    %306 = vector.broadcast %305 : vector<24x1xf32> to vector<24x32xf32>
    %307 = arith.mulf %297, %306 : vector<24x32xf32>
    %308 = vector.broadcast %62 : vector<1x32xf32> to vector<24x32xf32>
    %309 = arith.mulf %307, %308 : vector<24x32xf32>
    %310 = vector.broadcast %63 : vector<1x32xf32> to vector<24x32xf32>
    %311 = arith.addf %309, %310 : vector<24x32xf32>
    %c280 = arith.constant 280 : index
    %c0_120 = arith.constant 0 : index
    %312 = vector.load %arg2[%c280, %c0_120] : memref<488x32xf32, #tpu.memory_space<vmem>>, vector<32x32xf32>
    %c312 = arith.constant 312 : index
    %c0_121 = arith.constant 0 : index
    %313 = vector.load %arg2[%c312, %c0_121] : memref<488x32xf32, #tpu.memory_space<vmem>>, vector<32x32xf32>
    %c344 = arith.constant 344 : index
    %c0_122 = arith.constant 0 : index
    %314 = vector.load %arg2[%c344, %c0_122] : memref<488x32xf32, #tpu.memory_space<vmem>>, vector<32x32xf32>
    %c376 = arith.constant 376 : index
    %c0_123 = arith.constant 0 : index
    %315 = vector.load %arg2[%c376, %c0_123] : memref<488x32xf32, #tpu.memory_space<vmem>>, vector<32x32xf32>
    %c408 = arith.constant 408 : index
    %c0_124 = arith.constant 0 : index
    %316 = vector.load %arg2[%c408, %c0_124] : memref<488x32xf32, #tpu.memory_space<vmem>>, vector<64x32xf32>
    %c472 = arith.constant 472 : index
    %c0_125 = arith.constant 0 : index
    %317 = vector.load %arg2[%c472, %c0_125] : memref<488x32xf32, #tpu.memory_space<vmem>>, vector<1x32xf32>
    %c473 = arith.constant 473 : index
    %c0_126 = arith.constant 0 : index
    %318 = vector.load %arg2[%c473, %c0_126] : memref<488x32xf32, #tpu.memory_space<vmem>>, vector<1x32xf32>
    %c474 = arith.constant 474 : index
    %c0_127 = arith.constant 0 : index
    %319 = vector.load %arg2[%c474, %c0_127] : memref<488x32xf32, #tpu.memory_space<vmem>>, vector<1x32xf32>
    %c475 = arith.constant 475 : index
    %c0_128 = arith.constant 0 : index
    %320 = vector.load %arg2[%c475, %c0_128] : memref<488x32xf32, #tpu.memory_space<vmem>>, vector<1x32xf32>
    %c476 = arith.constant 476 : index
    %c0_129 = arith.constant 0 : index
    %321 = vector.load %arg2[%c476, %c0_129] : memref<488x32xf32, #tpu.memory_space<vmem>>, vector<1x32xf32>
    %c477 = arith.constant 477 : index
    %c0_130 = arith.constant 0 : index
    %322 = vector.load %arg2[%c477, %c0_130] : memref<488x32xf32, #tpu.memory_space<vmem>>, vector<1x32xf32>
    %c478 = arith.constant 478 : index
    %c0_131 = arith.constant 0 : index
    %323 = vector.load %arg2[%c478, %c0_131] : memref<488x32xf32, #tpu.memory_space<vmem>>, vector<1x32xf32>
    %c479 = arith.constant 479 : index
    %c0_132 = arith.constant 0 : index
    %324 = vector.load %arg2[%c479, %c0_132] : memref<488x32xf32, #tpu.memory_space<vmem>>, vector<1x32xf32>
    %c480 = arith.constant 480 : index
    %c0_133 = arith.constant 0 : index
    %325 = vector.load %arg2[%c480, %c0_133] : memref<488x32xf32, #tpu.memory_space<vmem>>, vector<1x32xf32>
    %c40_134 = arith.constant 40 : index
    %c0_135 = arith.constant 0 : index
    %326 = vector.load %arg3[%c40_134, %c0_135] : memref<80x64xf32, #tpu.memory_space<vmem>>, vector<32x64xf32>
    %c72_136 = arith.constant 72 : index
    %c0_137 = arith.constant 0 : index
    %327 = vector.load %arg3[%c72_136, %c0_137] : memref<80x64xf32, #tpu.memory_space<vmem>>, vector<1x64xf32>
    %cst_138 = arith.constant dense<0.000000e+00> : vector<24x32xf32>
    %328 = tpu.matmul %197, %312, %cst_138 {dimension_numbers = #tpu.dot_dimension_numbers<[1], [0], [0], [1], [0, 0, 1, 1], [], []>} : vector<24x32xf32>, vector<32x32xf32>, vector<24x32xf32> -> vector<24x32xf32>
    %329 = vector.broadcast %317 : vector<1x32xf32> to vector<24x32xf32>
    %330 = arith.addf %328, %329 : vector<24x32xf32>
    %cst_139 = arith.constant dense<0.000000e+00> : vector<24x32xf32>
    %331 = tpu.matmul %311, %312, %cst_139 {dimension_numbers = #tpu.dot_dimension_numbers<[1], [0], [0], [1], [0, 0, 1, 1], [], []>} : vector<24x32xf32>, vector<32x32xf32>, vector<24x32xf32> -> vector<24x32xf32>
    %332 = vector.broadcast %317 : vector<1x32xf32> to vector<24x32xf32>
    %333 = arith.addf %331, %332 : vector<24x32xf32>
    %cst_140 = arith.constant dense<0.000000e+00> : vector<24x32xf32>
    %334 = tpu.matmul %197, %313, %cst_140 {dimension_numbers = #tpu.dot_dimension_numbers<[1], [0], [0], [1], [0, 0, 1, 1], [], []>} : vector<24x32xf32>, vector<32x32xf32>, vector<24x32xf32> -> vector<24x32xf32>
    %335 = vector.broadcast %318 : vector<1x32xf32> to vector<24x32xf32>
    %336 = arith.addf %334, %335 : vector<24x32xf32>
    %cst_141 = arith.constant dense<0.000000e+00> : vector<24x32xf32>
    %337 = tpu.matmul %311, %313, %cst_141 {dimension_numbers = #tpu.dot_dimension_numbers<[1], [0], [0], [1], [0, 0, 1, 1], [], []>} : vector<24x32xf32>, vector<32x32xf32>, vector<24x32xf32> -> vector<24x32xf32>
    %338 = vector.broadcast %318 : vector<1x32xf32> to vector<24x32xf32>
    %339 = arith.addf %337, %338 : vector<24x32xf32>
    %cst_142 = arith.constant dense<0.000000e+00> : vector<24x32xf32>
    %340 = tpu.matmul %197, %314, %cst_142 {dimension_numbers = #tpu.dot_dimension_numbers<[1], [0], [0], [1], [0, 0, 1, 1], [], []>} : vector<24x32xf32>, vector<32x32xf32>, vector<24x32xf32> -> vector<24x32xf32>
    %341 = vector.broadcast %319 : vector<1x32xf32> to vector<24x32xf32>
    %342 = arith.addf %340, %341 : vector<24x32xf32>
    %cst_143 = arith.constant dense<0.000000e+00> : vector<24x32xf32>
    %343 = tpu.matmul %311, %314, %cst_143 {dimension_numbers = #tpu.dot_dimension_numbers<[1], [0], [0], [1], [0, 0, 1, 1], [], []>} : vector<24x32xf32>, vector<32x32xf32>, vector<24x32xf32> -> vector<24x32xf32>
    %344 = vector.broadcast %319 : vector<1x32xf32> to vector<24x32xf32>
    %345 = arith.addf %343, %344 : vector<24x32xf32>
    %346 = arith.mulf %330, %336 : vector<24x32xf32>
    %cst_144 = arith.constant dense<0.000000e+00> : vector<24x4xf32>
    %347 = tpu.matmul %346, %13, %cst_144 {dimension_numbers = #tpu.dot_dimension_numbers<[1], [0], [0], [1], [0, 0, 1, 1], [], []>} : vector<24x32xf32>, vector<32x4xf32>, vector<24x4xf32> -> vector<24x4xf32>
    %cst_145 = arith.constant 0.353553385 : f32
    %348 = vector.broadcast %cst_145 : f32 to vector<24x4xf32>
    %349 = arith.mulf %347, %348 : vector<24x4xf32>
    %350 = arith.mulf %330, %339 : vector<24x32xf32>
    %cst_146 = arith.constant dense<0.000000e+00> : vector<24x4xf32>
    %351 = tpu.matmul %350, %13, %cst_146 {dimension_numbers = #tpu.dot_dimension_numbers<[1], [0], [0], [1], [0, 0, 1, 1], [], []>} : vector<24x32xf32>, vector<32x4xf32>, vector<24x4xf32> -> vector<24x4xf32>
    %cst_147 = arith.constant 0.353553385 : f32
    %352 = vector.broadcast %cst_147 : f32 to vector<24x4xf32>
    %353 = arith.mulf %351, %352 : vector<24x4xf32>
    %354 = arith.maximumf %349, %353 : vector<24x4xf32>
    %355 = arith.subf %349, %354 : vector<24x4xf32>
    %356 = math.exp %355 : vector<24x4xf32>
    %357 = arith.subf %353, %354 : vector<24x4xf32>
    %358 = math.exp %357 : vector<24x4xf32>
    %359 = arith.addf %356, %358 : vector<24x4xf32>
    %360 = tpu.reciprocal %359 {approx = true} : vector<24x4xf32> -> vector<24x4xf32>
    %361 = arith.mulf %356, %360 : vector<24x4xf32>
    %cst_148 = arith.constant dense<0.000000e+00> : vector<24x32xf32>
    %362 = tpu.matmul %361, %27, %cst_148 {dimension_numbers = #tpu.dot_dimension_numbers<[1], [0], [0], [1], [0, 0, 1, 1], [], []>} : vector<24x4xf32>, vector<4x32xf32>, vector<24x32xf32> -> vector<24x32xf32>
    %363 = arith.mulf %362, %342 : vector<24x32xf32>
    %364 = arith.mulf %358, %360 : vector<24x4xf32>
    %cst_149 = arith.constant dense<0.000000e+00> : vector<24x32xf32>
    %365 = tpu.matmul %364, %27, %cst_149 {dimension_numbers = #tpu.dot_dimension_numbers<[1], [0], [0], [1], [0, 0, 1, 1], [], []>} : vector<24x4xf32>, vector<4x32xf32>, vector<24x32xf32> -> vector<24x32xf32>
    %366 = arith.mulf %365, %345 : vector<24x32xf32>
    %367 = arith.addf %363, %366 : vector<24x32xf32>
    %cst_150 = arith.constant dense<0.000000e+00> : vector<24x32xf32>
    %368 = tpu.matmul %367, %315, %cst_150 {dimension_numbers = #tpu.dot_dimension_numbers<[1], [0], [0], [1], [0, 0, 1, 1], [], []>} : vector<24x32xf32>, vector<32x32xf32>, vector<24x32xf32> -> vector<24x32xf32>
    %369 = vector.broadcast %320 : vector<1x32xf32> to vector<24x32xf32>
    %370 = arith.addf %368, %369 : vector<24x32xf32>
    %371 = arith.addf %197, %370 : vector<24x32xf32>
    %cst_151 = arith.constant dense<0.000000e+00> : vector<24xf32>
    %372 = vector.multi_reduction <add>, %371, %cst_151 [1] : vector<24x32xf32> to vector<24xf32>
    %373 = vector.shape_cast %372 : vector<24xf32> to vector<24x1xf32>
    %cst_152 = arith.constant 3.200000e+01 : f32
    %374 = vector.broadcast %cst_152 : f32 to vector<24x1xf32>
    %375 = arith.divf %373, %374 : vector<24x1xf32>
    %376 = vector.broadcast %375 : vector<24x1xf32> to vector<24x32xf32>
    %377 = arith.subf %371, %376 : vector<24x32xf32>
    %378 = arith.mulf %377, %377 : vector<24x32xf32>
    %cst_153 = arith.constant dense<0.000000e+00> : vector<24xf32>
    %379 = vector.multi_reduction <add>, %378, %cst_153 [1] : vector<24x32xf32> to vector<24xf32>
    %380 = vector.shape_cast %379 : vector<24xf32> to vector<24x1xf32>
    %cst_154 = arith.constant 3.200000e+01 : f32
    %381 = vector.broadcast %cst_154 : f32 to vector<24x1xf32>
    %382 = arith.divf %380, %381 : vector<24x1xf32>
    %cst_155 = arith.constant 9.99999974E-6 : f32
    %383 = vector.broadcast %cst_155 : f32 to vector<24x1xf32>
    %384 = arith.addf %382, %383 : vector<24x1xf32>
    %385 = math.rsqrt %384 : vector<24x1xf32>
    %386 = vector.broadcast %385 : vector<24x1xf32> to vector<24x32xf32>
    %387 = arith.mulf %377, %386 : vector<24x32xf32>
    %388 = vector.broadcast %322 : vector<1x32xf32> to vector<24x32xf32>
    %389 = arith.mulf %387, %388 : vector<24x32xf32>
    %390 = vector.broadcast %323 : vector<1x32xf32> to vector<24x32xf32>
    %391 = arith.addf %389, %390 : vector<24x32xf32>
    %cst_156 = arith.constant dense<0.000000e+00> : vector<24x64xf32>
    %392 = tpu.matmul %391, %326, %cst_156 {dimension_numbers = #tpu.dot_dimension_numbers<[1], [0], [0], [1], [0, 0, 1, 1], [], []>} : vector<24x32xf32>, vector<32x64xf32>, vector<24x64xf32> -> vector<24x64xf32>
    %393 = vector.broadcast %327 : vector<1x64xf32> to vector<24x64xf32>
    %394 = arith.addf %392, %393 : vector<24x64xf32>
    %cst_157 = arith.constant 5.000000e-01 : f32
    %395 = vector.broadcast %cst_157 : f32 to vector<24x64xf32>
    %396 = arith.mulf %395, %394 : vector<24x64xf32>
    %cst_158 = arith.constant 0.707106769 : f32
    %397 = vector.broadcast %cst_158 : f32 to vector<24x64xf32>
    %398 = arith.mulf %394, %397 : vector<24x64xf32>
    %cst_159 = arith.constant 0.000000e+00 : f32
    %399 = vector.broadcast %cst_159 : f32 to vector<24x64xf32>
    %400 = arith.cmpf oge, %398, %399 : vector<24x64xf32>
    %cst_160 = arith.constant 1.000000e+00 : f32
    %cst_161 = arith.constant -1.000000e+00 : f32
    %401 = vector.broadcast %cst_160 : f32 to vector<24x64xf32>
    %402 = vector.broadcast %cst_161 : f32 to vector<24x64xf32>
    %403 = arith.select %400, %401, %402 : vector<24x64xi1>, vector<24x64xf32>
    %404 = math.absf %398 : vector<24x64xf32>
    %cst_162 = arith.constant 0.327591091 : f32
    %405 = vector.broadcast %cst_162 : f32 to vector<24x64xf32>
    %406 = arith.mulf %405, %404 : vector<24x64xf32>
    %cst_163 = arith.constant 1.000000e+00 : f32
    %407 = vector.broadcast %cst_163 : f32 to vector<24x64xf32>
    %408 = arith.addf %407, %406 : vector<24x64xf32>
    %cst_164 = arith.constant 1.000000e+00 : f32
    %409 = vector.broadcast %cst_164 : f32 to vector<24x64xf32>
    %410 = arith.divf %409, %408 : vector<24x64xf32>
    %cst_165 = arith.constant 1.06140542 : f32
    %411 = vector.broadcast %cst_165 : f32 to vector<24x64xf32>
    %412 = arith.mulf %411, %410 : vector<24x64xf32>
    %cst_166 = arith.constant -1.45315206 : f32
    %413 = vector.broadcast %cst_166 : f32 to vector<24x64xf32>
    %414 = arith.addf %412, %413 : vector<24x64xf32>
    %415 = arith.mulf %414, %410 : vector<24x64xf32>
    %cst_167 = arith.constant 1.42141378 : f32
    %416 = vector.broadcast %cst_167 : f32 to vector<24x64xf32>
    %417 = arith.addf %415, %416 : vector<24x64xf32>
    %418 = arith.mulf %417, %410 : vector<24x64xf32>
    %cst_168 = arith.constant -0.284496725 : f32
    %419 = vector.broadcast %cst_168 : f32 to vector<24x64xf32>
    %420 = arith.addf %418, %419 : vector<24x64xf32>
    %421 = arith.mulf %420, %410 : vector<24x64xf32>
    %cst_169 = arith.constant 0.254829586 : f32
    %422 = vector.broadcast %cst_169 : f32 to vector<24x64xf32>
    %423 = arith.addf %421, %422 : vector<24x64xf32>
    %424 = arith.mulf %423, %410 : vector<24x64xf32>
    %cst_170 = arith.constant 0.000000e+00 : f32
    %425 = vector.broadcast %cst_170 : f32 to vector<24x64xf32>
    %426 = arith.subf %425, %404 : vector<24x64xf32>
    %427 = arith.mulf %426, %404 : vector<24x64xf32>
    %428 = math.exp %427 : vector<24x64xf32>
    %429 = arith.mulf %424, %428 : vector<24x64xf32>
    %cst_171 = arith.constant 1.000000e+00 : f32
    %430 = vector.broadcast %cst_171 : f32 to vector<24x64xf32>
    %431 = arith.subf %430, %429 : vector<24x64xf32>
    %432 = arith.mulf %403, %431 : vector<24x64xf32>
    %cst_172 = arith.constant 1.000000e+00 : f32
    %433 = vector.broadcast %cst_172 : f32 to vector<24x64xf32>
    %434 = arith.addf %433, %432 : vector<24x64xf32>
    %435 = arith.mulf %396, %434 : vector<24x64xf32>
    %cst_173 = arith.constant dense<0.000000e+00> : vector<24x32xf32>
    %436 = tpu.matmul %435, %316, %cst_173 {dimension_numbers = #tpu.dot_dimension_numbers<[1], [0], [0], [1], [0, 0, 1, 1], [], []>} : vector<24x64xf32>, vector<64x32xf32>, vector<24x32xf32> -> vector<24x32xf32>
    %437 = vector.broadcast %321 : vector<1x32xf32> to vector<24x32xf32>
    %438 = arith.addf %436, %437 : vector<24x32xf32>
    %439 = arith.addf %391, %438 : vector<24x32xf32>
    %cst_174 = arith.constant dense<0.000000e+00> : vector<24xf32>
    %440 = vector.multi_reduction <add>, %439, %cst_174 [1] : vector<24x32xf32> to vector<24xf32>
    %441 = vector.shape_cast %440 : vector<24xf32> to vector<24x1xf32>
    %cst_175 = arith.constant 3.200000e+01 : f32
    %442 = vector.broadcast %cst_175 : f32 to vector<24x1xf32>
    %443 = arith.divf %441, %442 : vector<24x1xf32>
    %444 = vector.broadcast %443 : vector<24x1xf32> to vector<24x32xf32>
    %445 = arith.subf %439, %444 : vector<24x32xf32>
    %446 = arith.mulf %445, %445 : vector<24x32xf32>
    %cst_176 = arith.constant dense<0.000000e+00> : vector<24xf32>
    %447 = vector.multi_reduction <add>, %446, %cst_176 [1] : vector<24x32xf32> to vector<24xf32>
    %448 = vector.shape_cast %447 : vector<24xf32> to vector<24x1xf32>
    %cst_177 = arith.constant 3.200000e+01 : f32
    %449 = vector.broadcast %cst_177 : f32 to vector<24x1xf32>
    %450 = arith.divf %448, %449 : vector<24x1xf32>
    %cst_178 = arith.constant 9.99999974E-6 : f32
    %451 = vector.broadcast %cst_178 : f32 to vector<24x1xf32>
    %452 = arith.addf %450, %451 : vector<24x1xf32>
    %453 = math.rsqrt %452 : vector<24x1xf32>
    %454 = vector.broadcast %453 : vector<24x1xf32> to vector<24x32xf32>
    %455 = arith.mulf %445, %454 : vector<24x32xf32>
    %456 = vector.broadcast %324 : vector<1x32xf32> to vector<24x32xf32>
    %457 = arith.mulf %455, %456 : vector<24x32xf32>
    %458 = vector.broadcast %325 : vector<1x32xf32> to vector<24x32xf32>
    %459 = arith.addf %457, %458 : vector<24x32xf32>
    %460 = arith.mulf %333, %336 : vector<24x32xf32>
    %cst_179 = arith.constant dense<0.000000e+00> : vector<24x4xf32>
    %461 = tpu.matmul %460, %13, %cst_179 {dimension_numbers = #tpu.dot_dimension_numbers<[1], [0], [0], [1], [0, 0, 1, 1], [], []>} : vector<24x32xf32>, vector<32x4xf32>, vector<24x4xf32> -> vector<24x4xf32>
    %cst_180 = arith.constant 0.353553385 : f32
    %462 = vector.broadcast %cst_180 : f32 to vector<24x4xf32>
    %463 = arith.mulf %461, %462 : vector<24x4xf32>
    %464 = arith.mulf %333, %339 : vector<24x32xf32>
    %cst_181 = arith.constant dense<0.000000e+00> : vector<24x4xf32>
    %465 = tpu.matmul %464, %13, %cst_181 {dimension_numbers = #tpu.dot_dimension_numbers<[1], [0], [0], [1], [0, 0, 1, 1], [], []>} : vector<24x32xf32>, vector<32x4xf32>, vector<24x4xf32> -> vector<24x4xf32>
    %cst_182 = arith.constant 0.353553385 : f32
    %466 = vector.broadcast %cst_182 : f32 to vector<24x4xf32>
    %467 = arith.mulf %465, %466 : vector<24x4xf32>
    %468 = arith.maximumf %463, %467 : vector<24x4xf32>
    %469 = arith.subf %463, %468 : vector<24x4xf32>
    %470 = math.exp %469 : vector<24x4xf32>
    %471 = arith.subf %467, %468 : vector<24x4xf32>
    %472 = math.exp %471 : vector<24x4xf32>
    %473 = arith.addf %470, %472 : vector<24x4xf32>
    %474 = tpu.reciprocal %473 {approx = true} : vector<24x4xf32> -> vector<24x4xf32>
    %475 = arith.mulf %470, %474 : vector<24x4xf32>
    %cst_183 = arith.constant dense<0.000000e+00> : vector<24x32xf32>
    %476 = tpu.matmul %475, %27, %cst_183 {dimension_numbers = #tpu.dot_dimension_numbers<[1], [0], [0], [1], [0, 0, 1, 1], [], []>} : vector<24x4xf32>, vector<4x32xf32>, vector<24x32xf32> -> vector<24x32xf32>
    %477 = arith.mulf %476, %342 : vector<24x32xf32>
    %478 = arith.mulf %472, %474 : vector<24x4xf32>
    %cst_184 = arith.constant dense<0.000000e+00> : vector<24x32xf32>
    %479 = tpu.matmul %478, %27, %cst_184 {dimension_numbers = #tpu.dot_dimension_numbers<[1], [0], [0], [1], [0, 0, 1, 1], [], []>} : vector<24x4xf32>, vector<4x32xf32>, vector<24x32xf32> -> vector<24x32xf32>
    %480 = arith.mulf %479, %345 : vector<24x32xf32>
    %481 = arith.addf %477, %480 : vector<24x32xf32>
    %cst_185 = arith.constant dense<0.000000e+00> : vector<24x32xf32>
    %482 = tpu.matmul %481, %315, %cst_185 {dimension_numbers = #tpu.dot_dimension_numbers<[1], [0], [0], [1], [0, 0, 1, 1], [], []>} : vector<24x32xf32>, vector<32x32xf32>, vector<24x32xf32> -> vector<24x32xf32>
    %483 = vector.broadcast %320 : vector<1x32xf32> to vector<24x32xf32>
    %484 = arith.addf %482, %483 : vector<24x32xf32>
    %485 = arith.addf %311, %484 : vector<24x32xf32>
    %cst_186 = arith.constant dense<0.000000e+00> : vector<24xf32>
    %486 = vector.multi_reduction <add>, %485, %cst_186 [1] : vector<24x32xf32> to vector<24xf32>
    %487 = vector.shape_cast %486 : vector<24xf32> to vector<24x1xf32>
    %cst_187 = arith.constant 3.200000e+01 : f32
    %488 = vector.broadcast %cst_187 : f32 to vector<24x1xf32>
    %489 = arith.divf %487, %488 : vector<24x1xf32>
    %490 = vector.broadcast %489 : vector<24x1xf32> to vector<24x32xf32>
    %491 = arith.subf %485, %490 : vector<24x32xf32>
    %492 = arith.mulf %491, %491 : vector<24x32xf32>
    %cst_188 = arith.constant dense<0.000000e+00> : vector<24xf32>
    %493 = vector.multi_reduction <add>, %492, %cst_188 [1] : vector<24x32xf32> to vector<24xf32>
    %494 = vector.shape_cast %493 : vector<24xf32> to vector<24x1xf32>
    %cst_189 = arith.constant 3.200000e+01 : f32
    %495 = vector.broadcast %cst_189 : f32 to vector<24x1xf32>
    %496 = arith.divf %494, %495 : vector<24x1xf32>
    %cst_190 = arith.constant 9.99999974E-6 : f32
    %497 = vector.broadcast %cst_190 : f32 to vector<24x1xf32>
    %498 = arith.addf %496, %497 : vector<24x1xf32>
    %499 = math.rsqrt %498 : vector<24x1xf32>
    %500 = vector.broadcast %499 : vector<24x1xf32> to vector<24x32xf32>
    %501 = arith.mulf %491, %500 : vector<24x32xf32>
    %502 = vector.broadcast %322 : vector<1x32xf32> to vector<24x32xf32>
    %503 = arith.mulf %501, %502 : vector<24x32xf32>
    %504 = vector.broadcast %323 : vector<1x32xf32> to vector<24x32xf32>
    %505 = arith.addf %503, %504 : vector<24x32xf32>
    %cst_191 = arith.constant dense<0.000000e+00> : vector<24x64xf32>
    %506 = tpu.matmul %505, %326, %cst_191 {dimension_numbers = #tpu.dot_dimension_numbers<[1], [0], [0], [1], [0, 0, 1, 1], [], []>} : vector<24x32xf32>, vector<32x64xf32>, vector<24x64xf32> -> vector<24x64xf32>
    %507 = vector.broadcast %327 : vector<1x64xf32> to vector<24x64xf32>
    %508 = arith.addf %506, %507 : vector<24x64xf32>
    %cst_192 = arith.constant 5.000000e-01 : f32
    %509 = vector.broadcast %cst_192 : f32 to vector<24x64xf32>
    %510 = arith.mulf %509, %508 : vector<24x64xf32>
    %cst_193 = arith.constant 0.707106769 : f32
    %511 = vector.broadcast %cst_193 : f32 to vector<24x64xf32>
    %512 = arith.mulf %508, %511 : vector<24x64xf32>
    %cst_194 = arith.constant 0.000000e+00 : f32
    %513 = vector.broadcast %cst_194 : f32 to vector<24x64xf32>
    %514 = arith.cmpf oge, %512, %513 : vector<24x64xf32>
    %cst_195 = arith.constant 1.000000e+00 : f32
    %cst_196 = arith.constant -1.000000e+00 : f32
    %515 = vector.broadcast %cst_195 : f32 to vector<24x64xf32>
    %516 = vector.broadcast %cst_196 : f32 to vector<24x64xf32>
    %517 = arith.select %514, %515, %516 : vector<24x64xi1>, vector<24x64xf32>
    %518 = math.absf %512 : vector<24x64xf32>
    %cst_197 = arith.constant 0.327591091 : f32
    %519 = vector.broadcast %cst_197 : f32 to vector<24x64xf32>
    %520 = arith.mulf %519, %518 : vector<24x64xf32>
    %cst_198 = arith.constant 1.000000e+00 : f32
    %521 = vector.broadcast %cst_198 : f32 to vector<24x64xf32>
    %522 = arith.addf %521, %520 : vector<24x64xf32>
    %cst_199 = arith.constant 1.000000e+00 : f32
    %523 = vector.broadcast %cst_199 : f32 to vector<24x64xf32>
    %524 = arith.divf %523, %522 : vector<24x64xf32>
    %cst_200 = arith.constant 1.06140542 : f32
    %525 = vector.broadcast %cst_200 : f32 to vector<24x64xf32>
    %526 = arith.mulf %525, %524 : vector<24x64xf32>
    %cst_201 = arith.constant -1.45315206 : f32
    %527 = vector.broadcast %cst_201 : f32 to vector<24x64xf32>
    %528 = arith.addf %526, %527 : vector<24x64xf32>
    %529 = arith.mulf %528, %524 : vector<24x64xf32>
    %cst_202 = arith.constant 1.42141378 : f32
    %530 = vector.broadcast %cst_202 : f32 to vector<24x64xf32>
    %531 = arith.addf %529, %530 : vector<24x64xf32>
    %532 = arith.mulf %531, %524 : vector<24x64xf32>
    %cst_203 = arith.constant -0.284496725 : f32
    %533 = vector.broadcast %cst_203 : f32 to vector<24x64xf32>
    %534 = arith.addf %532, %533 : vector<24x64xf32>
    %535 = arith.mulf %534, %524 : vector<24x64xf32>
    %cst_204 = arith.constant 0.254829586 : f32
    %536 = vector.broadcast %cst_204 : f32 to vector<24x64xf32>
    %537 = arith.addf %535, %536 : vector<24x64xf32>
    %538 = arith.mulf %537, %524 : vector<24x64xf32>
    %cst_205 = arith.constant 0.000000e+00 : f32
    %539 = vector.broadcast %cst_205 : f32 to vector<24x64xf32>
    %540 = arith.subf %539, %518 : vector<24x64xf32>
    %541 = arith.mulf %540, %518 : vector<24x64xf32>
    %542 = math.exp %541 : vector<24x64xf32>
    %543 = arith.mulf %538, %542 : vector<24x64xf32>
    %cst_206 = arith.constant 1.000000e+00 : f32
    %544 = vector.broadcast %cst_206 : f32 to vector<24x64xf32>
    %545 = arith.subf %544, %543 : vector<24x64xf32>
    %546 = arith.mulf %517, %545 : vector<24x64xf32>
    %cst_207 = arith.constant 1.000000e+00 : f32
    %547 = vector.broadcast %cst_207 : f32 to vector<24x64xf32>
    %548 = arith.addf %547, %546 : vector<24x64xf32>
    %549 = arith.mulf %510, %548 : vector<24x64xf32>
    %cst_208 = arith.constant dense<0.000000e+00> : vector<24x32xf32>
    %550 = tpu.matmul %549, %316, %cst_208 {dimension_numbers = #tpu.dot_dimension_numbers<[1], [0], [0], [1], [0, 0, 1, 1], [], []>} : vector<24x64xf32>, vector<64x32xf32>, vector<24x32xf32> -> vector<24x32xf32>
    %551 = vector.broadcast %321 : vector<1x32xf32> to vector<24x32xf32>
    %552 = arith.addf %550, %551 : vector<24x32xf32>
    %553 = arith.addf %505, %552 : vector<24x32xf32>
    %cst_209 = arith.constant dense<0.000000e+00> : vector<24xf32>
    %554 = vector.multi_reduction <add>, %553, %cst_209 [1] : vector<24x32xf32> to vector<24xf32>
    %555 = vector.shape_cast %554 : vector<24xf32> to vector<24x1xf32>
    %cst_210 = arith.constant 3.200000e+01 : f32
    %556 = vector.broadcast %cst_210 : f32 to vector<24x1xf32>
    %557 = arith.divf %555, %556 : vector<24x1xf32>
    %558 = vector.broadcast %557 : vector<24x1xf32> to vector<24x32xf32>
    %559 = arith.subf %553, %558 : vector<24x32xf32>
    %560 = arith.mulf %559, %559 : vector<24x32xf32>
    %cst_211 = arith.constant dense<0.000000e+00> : vector<24xf32>
    %561 = vector.multi_reduction <add>, %560, %cst_211 [1] : vector<24x32xf32> to vector<24xf32>
    %562 = vector.shape_cast %561 : vector<24xf32> to vector<24x1xf32>
    %cst_212 = arith.constant 3.200000e+01 : f32
    %563 = vector.broadcast %cst_212 : f32 to vector<24x1xf32>
    %564 = arith.divf %562, %563 : vector<24x1xf32>
    %cst_213 = arith.constant 9.99999974E-6 : f32
    %565 = vector.broadcast %cst_213 : f32 to vector<24x1xf32>
    %566 = arith.addf %564, %565 : vector<24x1xf32>
    %567 = math.rsqrt %566 : vector<24x1xf32>
    %568 = vector.broadcast %567 : vector<24x1xf32> to vector<24x32xf32>
    %569 = arith.mulf %559, %568 : vector<24x32xf32>
    %570 = vector.broadcast %324 : vector<1x32xf32> to vector<24x32xf32>
    %571 = arith.mulf %569, %570 : vector<24x32xf32>
    %572 = vector.broadcast %325 : vector<1x32xf32> to vector<24x32xf32>
    %573 = arith.addf %571, %572 : vector<24x32xf32>
    %c67 = arith.constant 67 : index
    %c0_214 = arith.constant 0 : index
    %574 = vector.load %arg2[%c67, %c0_214] : memref<488x32xf32, #tpu.memory_space<vmem>>, vector<1x32xf32>
    %c68 = arith.constant 68 : index
    %c0_215 = arith.constant 0 : index
    %575 = vector.load %arg2[%c68, %c0_215] : memref<488x32xf32, #tpu.memory_space<vmem>>, vector<1x32xf32>
    %c69 = arith.constant 69 : index
    %c0_216 = arith.constant 0 : index
    %576 = vector.load %arg2[%c69, %c0_216] : memref<488x32xf32, #tpu.memory_space<vmem>>, vector<1x32xf32>
    %c70 = arith.constant 70 : index
    %c0_217 = arith.constant 0 : index
    %577 = vector.load %arg2[%c70, %c0_217] : memref<488x32xf32, #tpu.memory_space<vmem>>, vector<1x32xf32>
    %c0_218 = arith.constant 0 : index
    %c0_219 = arith.constant 0 : index
    %578 = vector.load %arg4[%c0_218, %c0_219] : memref<40x128xf32, #tpu.memory_space<vmem>>, vector<32x128xf32>
    %c32_220 = arith.constant 32 : index
    %c0_221 = arith.constant 0 : index
    %579 = vector.load %arg4[%c32_220, %c0_221] : memref<40x128xf32, #tpu.memory_space<vmem>>, vector<1x128xf32>
    %580 = vector.extract_strided_slice %459 {offsets = [16, 0], sizes = [1, 32], strides = [1, 1]} : vector<24x32xf32> to vector<1x32xf32>
    %cst_222 = arith.constant dense<0.000000e+00> : vector<1xf32>
    %581 = vector.multi_reduction <add>, %580, %cst_222 [1] : vector<1x32xf32> to vector<1xf32>
    %582 = vector.shape_cast %581 : vector<1xf32> to vector<1x1xf32>
    %cst_223 = arith.constant 3.200000e+01 : f32
    %583 = vector.broadcast %cst_223 : f32 to vector<1x1xf32>
    %584 = arith.divf %582, %583 : vector<1x1xf32>
    %585 = vector.broadcast %584 : vector<1x1xf32> to vector<1x32xf32>
    %586 = arith.subf %580, %585 : vector<1x32xf32>
    %587 = arith.mulf %586, %586 : vector<1x32xf32>
    %cst_224 = arith.constant dense<0.000000e+00> : vector<1xf32>
    %588 = vector.multi_reduction <add>, %587, %cst_224 [1] : vector<1x32xf32> to vector<1xf32>
    %589 = vector.shape_cast %588 : vector<1xf32> to vector<1x1xf32>
    %cst_225 = arith.constant 3.200000e+01 : f32
    %590 = vector.broadcast %cst_225 : f32 to vector<1x1xf32>
    %591 = arith.divf %589, %590 : vector<1x1xf32>
    %cst_226 = arith.constant 9.99999974E-6 : f32
    %592 = vector.broadcast %cst_226 : f32 to vector<1x1xf32>
    %593 = arith.addf %591, %592 : vector<1x1xf32>
    %594 = math.rsqrt %593 : vector<1x1xf32>
    %595 = vector.broadcast %594 : vector<1x1xf32> to vector<1x32xf32>
    %596 = arith.mulf %586, %595 : vector<1x32xf32>
    %597 = arith.mulf %596, %574 : vector<1x32xf32>
    %598 = arith.addf %597, %575 : vector<1x32xf32>
    %cst_227 = arith.constant dense<0.000000e+00> : vector<1xf32>
    %599 = vector.multi_reduction <add>, %598, %cst_227 [1] : vector<1x32xf32> to vector<1xf32>
    %600 = vector.shape_cast %599 : vector<1xf32> to vector<1x1xf32>
    %cst_228 = arith.constant 3.200000e+01 : f32
    %601 = vector.broadcast %cst_228 : f32 to vector<1x1xf32>
    %602 = arith.divf %600, %601 : vector<1x1xf32>
    %603 = vector.broadcast %602 : vector<1x1xf32> to vector<1x32xf32>
    %604 = arith.subf %598, %603 : vector<1x32xf32>
    %605 = arith.mulf %604, %604 : vector<1x32xf32>
    %cst_229 = arith.constant dense<0.000000e+00> : vector<1xf32>
    %606 = vector.multi_reduction <add>, %605, %cst_229 [1] : vector<1x32xf32> to vector<1xf32>
    %607 = vector.shape_cast %606 : vector<1xf32> to vector<1x1xf32>
    %cst_230 = arith.constant 3.200000e+01 : f32
    %608 = vector.broadcast %cst_230 : f32 to vector<1x1xf32>
    %609 = arith.divf %607, %608 : vector<1x1xf32>
    %cst_231 = arith.constant 9.99999974E-6 : f32
    %610 = vector.broadcast %cst_231 : f32 to vector<1x1xf32>
    %611 = arith.addf %609, %610 : vector<1x1xf32>
    %612 = math.rsqrt %611 : vector<1x1xf32>
    %613 = vector.broadcast %612 : vector<1x1xf32> to vector<1x32xf32>
    %614 = arith.mulf %604, %613 : vector<1x32xf32>
    %615 = arith.mulf %614, %576 : vector<1x32xf32>
    %616 = arith.addf %615, %577 : vector<1x32xf32>
    %cst_232 = arith.constant dense<0.000000e+00> : vector<1x128xf32>
    %617 = tpu.matmul %616, %578, %cst_232 {dimension_numbers = #tpu.dot_dimension_numbers<[1], [0], [0], [1], [0, 0, 1, 1], [], []>} : vector<1x32xf32>, vector<32x128xf32>, vector<1x128xf32> -> vector<1x128xf32>
    %618 = arith.addf %617, %579 : vector<1x128xf32>
    %c0_233 = arith.constant 0 : index
    %c0_234 = arith.constant 0 : index
    %619 = vector.load %arg5[%c0_233, %c0_234] : memref<2x128xf32, #tpu.memory_space<vmem>>, vector<1x128xf32>
    tpu.vector_store %arg5[%c0_233, %c0_234], %618 {strides = array<i32>} : memref<2x128xf32, #tpu.memory_space<vmem>>, vector<1x128xf32>,
    %620 = vector.extract_strided_slice %573 {offsets = [16, 0], sizes = [1, 32], strides = [1, 1]} : vector<24x32xf32> to vector<1x32xf32>
    %cst_235 = arith.constant dense<0.000000e+00> : vector<1xf32>
    %621 = vector.multi_reduction <add>, %620, %cst_235 [1] : vector<1x32xf32> to vector<1xf32>
    %622 = vector.shape_cast %621 : vector<1xf32> to vector<1x1xf32>
    %cst_236 = arith.constant 3.200000e+01 : f32
    %623 = vector.broadcast %cst_236 : f32 to vector<1x1xf32>
    %624 = arith.divf %622, %623 : vector<1x1xf32>
    %625 = vector.broadcast %624 : vector<1x1xf32> to vector<1x32xf32>
    %626 = arith.subf %620, %625 : vector<1x32xf32>
    %627 = arith.mulf %626, %626 : vector<1x32xf32>
    %cst_237 = arith.constant dense<0.000000e+00> : vector<1xf32>
    %628 = vector.multi_reduction <add>, %627, %cst_237 [1] : vector<1x32xf32> to vector<1xf32>
    %629 = vector.shape_cast %628 : vector<1xf32> to vector<1x1xf32>
    %cst_238 = arith.constant 3.200000e+01 : f32
    %630 = vector.broadcast %cst_238 : f32 to vector<1x1xf32>
    %631 = arith.divf %629, %630 : vector<1x1xf32>
    %cst_239 = arith.constant 9.99999974E-6 : f32
    %632 = vector.broadcast %cst_239 : f32 to vector<1x1xf32>
    %633 = arith.addf %631, %632 : vector<1x1xf32>
    %634 = math.rsqrt %633 : vector<1x1xf32>
    %635 = vector.broadcast %634 : vector<1x1xf32> to vector<1x32xf32>
    %636 = arith.mulf %626, %635 : vector<1x32xf32>
    %637 = arith.mulf %636, %574 : vector<1x32xf32>
    %638 = arith.addf %637, %575 : vector<1x32xf32>
    %cst_240 = arith.constant dense<0.000000e+00> : vector<1xf32>
    %639 = vector.multi_reduction <add>, %638, %cst_240 [1] : vector<1x32xf32> to vector<1xf32>
    %640 = vector.shape_cast %639 : vector<1xf32> to vector<1x1xf32>
    %cst_241 = arith.constant 3.200000e+01 : f32
    %641 = vector.broadcast %cst_241 : f32 to vector<1x1xf32>
    %642 = arith.divf %640, %641 : vector<1x1xf32>
    %643 = vector.broadcast %642 : vector<1x1xf32> to vector<1x32xf32>
    %644 = arith.subf %638, %643 : vector<1x32xf32>
    %645 = arith.mulf %644, %644 : vector<1x32xf32>
    %cst_242 = arith.constant dense<0.000000e+00> : vector<1xf32>
    %646 = vector.multi_reduction <add>, %645, %cst_242 [1] : vector<1x32xf32> to vector<1xf32>
    %647 = vector.shape_cast %646 : vector<1xf32> to vector<1x1xf32>
    %cst_243 = arith.constant 3.200000e+01 : f32
    %648 = vector.broadcast %cst_243 : f32 to vector<1x1xf32>
    %649 = arith.divf %647, %648 : vector<1x1xf32>
    %cst_244 = arith.constant 9.99999974E-6 : f32
    %650 = vector.broadcast %cst_244 : f32 to vector<1x1xf32>
    %651 = arith.addf %649, %650 : vector<1x1xf32>
    %652 = math.rsqrt %651 : vector<1x1xf32>
    %653 = vector.broadcast %652 : vector<1x1xf32> to vector<1x32xf32>
    %654 = arith.mulf %644, %653 : vector<1x32xf32>
    %655 = arith.mulf %654, %576 : vector<1x32xf32>
    %656 = arith.addf %655, %577 : vector<1x32xf32>
    %cst_245 = arith.constant dense<0.000000e+00> : vector<1x128xf32>
    %657 = tpu.matmul %656, %578, %cst_245 {dimension_numbers = #tpu.dot_dimension_numbers<[1], [0], [0], [1], [0, 0, 1, 1], [], []>} : vector<1x32xf32>, vector<32x128xf32>, vector<1x128xf32> -> vector<1x128xf32>
    %658 = arith.addf %657, %579 : vector<1x128xf32>
    %c1 = arith.constant 1 : index
    %c0_246 = arith.constant 0 : index
    %659 = vector.load %arg5[%c1, %c0_246] : memref<2x128xf32, #tpu.memory_space<vmem>>, vector<1x128xf32>
    tpu.vector_store %arg5[%c1, %c0_246], %658 {strides = array<i32>} : memref<2x128xf32, #tpu.memory_space<vmem>>, vector<1x128xf32>,
    return
  }
  func.func @transform_0(%arg0: i32) -> (i32, i32) {
    %c0_i32 = arith.constant 0 : i32
    %c0_i32_0 = arith.constant 0 : i32
    %c0_i32_1 = arith.constant 0 : i32
    return %c0_i32, %c0_i32_0 : i32, i32
  }
  func.func @transform_1(%arg0: i32) -> (i32, i32) {
    %c0_i32 = arith.constant 0 : i32
    %c0_i32_0 = arith.constant 0 : i32
    %c0_i32_1 = arith.constant 0 : i32
    return %c0_i32, %c0_i32_0 : i32, i32
  }
  func.func @transform_2(%arg0: i32) -> (i32, i32) {
    %c0_i32 = arith.constant 0 : i32
    %c0_i32_0 = arith.constant 0 : i32
    %c0_i32_1 = arith.constant 0 : i32
    return %c0_i32, %c0_i32_0 : i32, i32
  }
  func.func @transform_3(%arg0: i32) -> (i32, i32) {
    %c0_i32 = arith.constant 0 : i32
    %c0_i32_0 = arith.constant 0 : i32
    %c0_i32_1 = arith.constant 0 : i32
    return %c0_i32, %c0_i32_0 : i32, i32
  }
  func.func @transform_4(%arg0: i32) -> (i32, i32) {
    %c0_i32 = arith.constant 0 : i32
    %c0_i32_0 = arith.constant 0 : i32
    %c0_i32_1 = arith.constant 0 : i32
    return %c0_i32, %c0_i32_0 : i32, i32
  }
}

</mosaic_0001>

<llo_original>
// kernel: vit_forward.1
$region0: #{vit_forward.1}
  #allocation0 [shape = 'u32[]', space=smem, size = 0x4, offset = 0x4, fixed_abs, tag = 'smem constant byte address 0x4 - core index']
  #allocation1 [shape = 'u32[144,128]{1,0:T(1,128)}', space=vmem, size = 0x12000, scoped, tag = 'internal scratch']
  #allocation2 [shape = 'f32[48,32]{1,0:T(8,128)}', space=vmem, size = 0x6000, scoped, tag = 'scratch operand']
  %s0 = inlined_call_operand.vmem [shape: f32[32,48], index: 0, kind: input, shape index: {}]
  %s1 = inlined_call_operand.vmem [shape: f32[488,32], index: 1, kind: input, shape index: {}]
  %s2 = inlined_call_operand.vmem [shape: f32[80,64], index: 2, kind: input, shape index: {}]
  %s3 = inlined_call_operand.vmem [shape: f32[40,128], index: 3, kind: input, shape index: {}]
  %s4 = inlined_call_operand.hbm [shape: f32[2,128], index: 4, kind: output, shape index: {}]
  %s5 = sld [smem:[#allocation0]]
  $region26: #{vit_forward.1} parent=0
    _
  %s7 = ssub.s32 1, %s5
  %s8 = scalar_select 0, %s7, %s5
  $region1: #{vit_forward.1} parent=0
    #allocation3 [shape = 'u8[1024]{0}', space=vmem, size = 0x400, scoped, tag = 'output window, operand 0, single buffered']
    #allocation4 [shape = 's32[1]{0}', space=sflag, size = 0x4, scoped, tag = 'scoped memory for vit_forward.1']
    %9 = vsyncpa [#allocation4], 0
    // Predicated region
    $region2: #{vit_forward.1} parent=1 // pred_check
      _
    $region3: #{vit_forward.1} parent=1 // pred_check_branch
      %11 = sbr.rel (0) target = $region5
    $region4: #{vit_forward.1} parent=1 // pred_region
      _
    $region5: #{vit_forward.1} parent=1 // pred_fallthru
      _
    // Predicated region
    $region6: #{vit_forward.1} parent=1 // pred_check
      _
    $region7: #{vit_forward.1} parent=1 // pred_check_branch
      %13 = sbr.rel (0) target = $region9
    $region8: #{vit_forward.1} parent=1 // pred_region
      _
    $region9: #{vit_forward.1} parent=1 // pred_fallthru
      _
    // Predicated region
    $region10: #{vit_forward.1} parent=1 // pred_check
      _
    $region11: #{vit_forward.1} parent=1 // pred_check_branch
      %15 = sbr.rel (0) target = $region13
    $region12: #{vit_forward.1} parent=1 // pred_region
      _
    $region13: #{vit_forward.1} parent=1 // pred_fallthru
      _
    // Predicated region
    $region14: #{vit_forward.1} parent=1 // pred_check
      _
    $region15: #{vit_forward.1} parent=1 // pred_check_branch
      %17 = sbr.rel (0) target = $region17
    $region16: #{vit_forward.1} parent=1 // pred_region
      _
    $region17: #{vit_forward.1} parent=1 // pred_fallthru
      _
    %v18 = vlaneseq
    %v19 = vshrl.u32 %v18, 7
    %v20 = vadd.s32 %v19, 8
    %v21 = vadd.s32 %v19, 16
    %v22 = vadd.s32 %v19, 24
    %v23 = vlaneseq
    %v24 = vand.u32 %v23, 127
    %v25 = vmul.u32 %v24, 8
    %vm26 = vcmp.ge.s32.totalorder %v19, %v25
    %vm27 = vcmp.ge.s32.totalorder %v20, %v25
    %vm28 = vcmp.ge.s32.totalorder %v21, %v25
    %vm29 = vcmp.ge.s32.totalorder %v22, %v25
    %v30 = vadd.s32 %v24, 1
    %v31 = vmul.u32 %v30, 8
    %vm32 = vcmp.lt.s32.totalorder %v19, %v31
    %vm33 = vcmp.lt.s32.totalorder %v20, %v31
    %vm34 = vcmp.lt.s32.totalorder %v21, %v31
    %vm35 = vcmp.lt.s32.totalorder %v22, %v31
    %vm36 = vmand %vm26, %vm32
    %vm37 = vmand %vm27, %vm33
    %vm38 = vmand %vm28, %vm34
    %vm39 = vmand %vm29, %vm35
    %v40 = vsel %vm36, 1.0, 0.0
    %v41 = vsel %vm37, 1.0, 0.0
    %v42 = vsel %vm38, 1.0, 0.0
    %v43 = vsel %vm39, 1.0, 0.0
    %v44 = vmul.u32 %v19, 8
    %vm45 = vcmp.ge.s32.totalorder %v24, %v44
    %v46 = vadd.s32 %v19, 1
    %v47 = vmul.u32 %v46, 8
    %vm48 = vcmp.lt.s32.totalorder %v24, %v47
    %vm49 = vmand %vm45, %vm48
    %v50 = vsel %vm49, 1.0, 0.0
    %v51 = vld [vmem:[%s1] sm:$0xff]
    %v52 = vld [vmem:[%s1 + $0x8] sm:$0xff]
    %v53 = vld [vmem:[%s1 + $0x10] sm:$0xff]
    %v54 = vld [vmem:[%s1 + $0x18] sm:$0xff]
    %v55 = vld [vmem:[%s1 + $0x20] sm:$0xff]
    %v56 = vld [vmem:[%s1 + $0x28] sm:$0xff]
    %v57 = vld [vmem:[%s0] sm:$0xff]
    %v58 = vld [vmem:[%s0 + $0x8] sm:$0xff]
    %v59 = vld [vmem:[%s0 + $0x10] sm:$0xff]
    %v60 = vld [vmem:[%s0 + $0x18] sm:$0xff]
    %v61 = vld [vmem:[%s1 + $0x40] sm:$0x1]
    %v62 = vlaneseq
    %v63 = vshrl.u32 %v62, 7
    %v64 = vsub.s32 0, %v63
    %v65 = vrot.slane %v61, %v64
    %vm66 = vcmask 392192
    %v68 = vsel %vm66, %v57, 0
    %v71 = vsel %vm66, %v58, 0
    %v74 = vsel %vm66, %v59, 0
    %v77 = vsel %vm66, %v60, 0
    %79 = vmatprep.subr.mxu0 0.0
    %80 = vmatpush1.msra.mxu0 %v51
    %81 = vmatprep.subr.mxu0 0.0
    %82 = vmatpush1.msra.mxu0 %v52
    %83 = vmatprep.subr.mxu0 0.0
    %84 = vmatpush1.msra.mxu0 %v53
    %85 = vmatprep.subr.mxu0 0.0
    %86 = vmatpush1.msra.mxu0 %v54
    %87 = vmatprep.subr.mxu0 0.0
    %88 = vmatpush1.msra.mxu0 %v55
    %89 = vmatprep.subr.mxu0 0.0
    %90 = vmatpush1.msra.mxu0 %v56
    %91 = vmatprep.subr.mxu0 0.0
    %92 = vmatpush1.msra.mxu0 0.0
    %93 = vmatprep.subr.mxu0 0.0
    %94 = vmatpush1.msra.mxu0 0.0
    %95 = vmatprep.subr.mxu0 0.0
    %96 = vmatpush1.msra.mxu0 0.0
    %97 = vmatprep.subr.mxu0 0.0
    %98 = vmatpush1.msra.mxu0 0.0
    %99 = vmatprep.subr.mxu0 0.0
    %100 = vmatpush1.msra.mxu0 0.0
    %101 = vmatprep.subr.mxu0 0.0
    %102 = vmatpush1.msra.mxu0 0.0
    %103 = vmatprep.subr.mxu0 0.0
    %104 = vmatpush1.msra.mxu0 0.0
    %105 = vmatprep.subr.mxu0 0.0
    %106 = vmatpush1.msra.mxu0 0.0
    %107 = vmatprep.subr.mxu0 0.0
    %108 = vmatpush1.msra.mxu0 0.0
    %109 = vmatprep.subr.mxu0 0.0
    %110 = vmatpush1.msra.mxu0 0.0
    %111 = vmatprep.subr.mxu0 0.0
    %112 = vmatpush1.msra.mxu0 0.0
    %113 = vmatprep.subr.mxu0 0.0
    %114 = vmatpush1.msra.mxu0 0.0
    %115 = vmatprep.subr.mxu0 0.0
    %116 = vmatpush1.msra.mxu0 0.0
    %117 = vmatprep.subr.mxu0 0.0
    %118 = vmatpush1.msra.mxu0 0.0
    %119 = vmatprep.subr.mxu0 0.0
    %120 = vmatpush1.msra.mxu0 0.0
    %121 = vmatprep.subr.mxu0 0.0
    %122 = vmatpush1.msra.mxu0 0.0
    %123 = vmatprep.subr.mxu0 0.0
    %124 = vmatpush1.msra.mxu0 0.0
    %125 = vmatprep.subr.mxu0 0.0
    %126 = vmatpush1.msra.mxu0 0.0
    %127 = vmatprep.subr.mxu0 0.0
    %128 = vmatpush1.msra.mxu0 0.0
    %129 = vmatprep.subr.mxu0 0.0
    %130 = vmatpush1.msra.mxu0 0.0
    %131 = vmatprep.subr.mxu0 0.0
    %132 = vmatpush1.msra.mxu0 0.0
    %133 = vmatprep.subr.mxu0 0.0
    %134 = vmatpush1.msra.mxu0 0.0
    %135 = vmatprep.subr.mxu0 0.0
    %136 = vmatpush1.msra.mxu0 0.0
    %137 = vmatprep.subr.mxu0 0.0
    %138 = vmatpush1.msra.mxu0 0.0
    %139 = vmatprep.subr.mxu0 0.0
    %140 = vmatpush1.msra.mxu0 0.0
    %141 = vmatprep.subr.mxu0 0.0
    %142 = vmatpush1.msra.mxu0 0.0
    %143 = vmatprep.mubr.f32.mxu0 0.0
    %144 = vmatmul.mubr.f32.gmra.mrb[0].mxu0 %v68
    %v145 = vpop.f32.mrb[0].mxu0
    %v146 = vadd.f32 %v65, %v145
    %v147 = vpop.f32.mrb[0].mxu0
    %148 = vmatprep.mubr.f32.mxu0 0.0
    %149 = vmatmul.mubr.f32.gmra.mrb[0].mxu0 %v71
    %v150 = vpop.f32.mrb[0].mxu0
    %v151 = vadd.f32 %v65, %v150
    %v152 = vpop.f32.mrb[0].mxu0
    %153 = vmatprep.mubr.f32.mxu0 0.0
    %154 = vmatmul.mubr.f32.gmra.mrb[0].mxu0 %v74
    %v155 = vpop.f32.mrb[0].mxu0
    %v156 = vadd.f32 %v65, %v155
    %v157 = vpop.f32.mrb[0].mxu0
    %158 = vmatprep.mubr.f32.mxu0 0.0
    %159 = vmatmul.mubr.f32.gmra.mrb[0].mxu0 %v77
    %v160 = vpop.f32.mrb[0].mxu0
    %v161 = vadd.f32 %v65, %v160
    %v162 = vpop.f32.mrb[0].mxu0
    %163 = vdwg.mxu0
    %v164 = vld [vmem:[%s1 + $0x41] sm:$0x1]
    %v165 = vld [vmem:[%s1 + $0x42] sm:$0x1]
    %v166 = vadd.f32 %v164, %v165
    %v167 = vld [vmem:[%s1 + $0x30] sm:$0xff]
    %v168 = vld [vmem:[%s1 + $0x38] sm:$0xff]
    %vm169 = vcmask 261120
    %170 = vst.msk [vmem:[#allocation2] sm:$0xff] %vm169, 0.0
    %171 = vst.msk [vmem:[#allocation2 + $0x8] sm:$0xff] %vm169, 0.0
    %172 = vst.msk [vmem:[#allocation2 + $0x10] sm:$0xff] %vm169, 0.0
    %173 = vst.msk [vmem:[#allocation2 + $0x18] sm:$0xff] %vm169, 0.0
    %174 = vst.msk [vmem:[#allocation2 + $0x20] sm:$0xff] %vm169, 0.0
    %175 = vst.msk [vmem:[#allocation2 + $0x28] sm:$0xff] %vm169, 0.0
    %v176 = vadd.f32 %v146, %v167
    %v177 = vadd.f32 %v151, %v168
    %178 = vst.msk [vmem:[#allocation2] sm:$0xff] %vm169, %v176
    %179 = vst.msk [vmem:[#allocation2 + $0x8] sm:$0xff] %vm169, %v177
    %vm180 = vcmask 253952
    %181 = vst.msk [vmem:[#allocation2 + $0x10] sm:$0x1] %vm180, %v166
    %v182 = vadd.f32 %v156, %v167
    %v183 = vadd.f32 %v161, %v168
    %184 = vst.msk [vmem:[#allocation2 + $0x18] sm:$0xff] %vm169, %v182
    %185 = vst.msk [vmem:[#allocation2 + $0x20] sm:$0xff] %vm169, %v183
    %186 = vst.msk [vmem:[#allocation2 + $0x28] sm:$0x1] %vm180, %v166
    %v187 = vld [vmem:[#allocation2] sm:$0xff]
    %v188 = vld [vmem:[#allocation2 + $0x8] sm:$0xff]
    %v189 = vld [vmem:[#allocation2 + $0x10] sm:$0xff]
    %v190 = vld [vmem:[#allocation2 + $0x18] sm:$0xff]
    %v191 = vld [vmem:[#allocation2 + $0x20] sm:$0xff]
    %v192 = vld [vmem:[#allocation2 + $0x28] sm:$0xff]
    %v193 = vld [vmem:[%s1 + $0x48] sm:$0xff]
    %v194 = vld [vmem:[%s1 + $0x50] sm:$0xff]
    %v195 = vld [vmem:[%s1 + $0x58] sm:$0xff]
    %v196 = vld [vmem:[%s1 + $0x60] sm:$0xff]
    %v197 = vld [vmem:[%s1 + $0x68] sm:$0xff]
    %v198 = vld [vmem:[%s1 + $0x70] sm:$0xff]
    %v199 = vld [vmem:[%s1 + $0x78] sm:$0xff]
    %v200 = vld [vmem:[%s1 + $0x80] sm:$0xff]
    %v201 = vld [vmem:[%s1 + $0x88] sm:$0xff]
    %v202 = vld [vmem:[%s1 + $0x90] sm:$0xff]
    %v203 = vld [vmem:[%s1 + $0x98] sm:$0xff]
    %v204 = vld [vmem:[%s1 + $0xa0] sm:$0xff]
    %v205 = vld [vmem:[%s1 + $0xa8] sm:$0xff]
    %v206 = vld [vmem:[%s1 + $0xb0] sm:$0xff]
    %v207 = vld [vmem:[%s1 + $0xb8] sm:$0xff]
    %v208 = vld [vmem:[%s1 + $0xc0] sm:$0xff]
    %v209 = vld [vmem:[%s1 + $0xc8] sm:$0xff]
    %v210 = vld [vmem:[%s1 + $0xd0] sm:$0xff]
    %v211 = vld [vmem:[%s1 + $0xd8] sm:$0xff]
    %v212 = vld [vmem:[%s1 + $0xe0] sm:$0xff]
    %v213 = vld [vmem:[%s1 + $0xe8] sm:$0xff]
    %v214 = vld [vmem:[%s1 + $0xf0] sm:$0xff]
    %v215 = vld [vmem:[%s1 + $0xf8] sm:$0xff]
    %v216 = vld [vmem:[%s1 + $0x100] sm:$0xff]
    %v217 = vld [vmem:[%s1 + $0x108] sm:$0x1]
    %v218 = vld [vmem:[%s1 + $0x109] sm:$0x1]
    %v219 = vld [vmem:[%s1 + $0x10a] sm:$0x1]
    %v220 = vld [vmem:[%s1 + $0x10b] sm:$0x1]
    %v221 = vld [vmem:[%s1 + $0x10c] sm:$0x1]
    %v222 = vld [vmem:[%s1 + $0x10d] sm:$0x1]
    %v223 = vld [vmem:[%s1 + $0x10e] sm:$0x1]
    %v224 = vld [vmem:[%s1 + $0x10f] sm:$0x1]
    %v225 = vld [vmem:[%s1 + $0x110] sm:$0x1]
    %v226 = vld [vmem:[%s2] sm:$0xff]
    %v227 = vld [vmem:[%s2 + $0x8] sm:$0xff]
    %v228 = vld [vmem:[%s2 + $0x10] sm:$0xff]
    %v229 = vld [vmem:[%s2 + $0x18] sm:$0xff]
    %v230 = vld [vmem:[%s2 + $0x20] sm:$0x1]
    %v231 = vlaneseq
    %v232 = vshrl.u32 %v231, 7
    %v233 = vsub.s32 0, %v232
    %v234 = vrot.slane %v217, %v233
    %v236 = vsel %vm169, %v187, 0
    %v239 = vsel %vm169, %v188, 0
    %v242 = vsel %vm169, %v189, 0
    %244 = vmatprep.subr.mxu0 0.0
    %245 = vmatpush1.msra.mxu0 %v193
    %246 = vmatprep.subr.mxu0 0.0
    %247 = vmatpush1.msra.mxu0 %v194
    %248 = vmatprep.subr.mxu0 0.0
    %249 = vmatpush1.msra.mxu0 %v195
    %250 = vmatprep.subr.mxu0 0.0
    %251 = vmatpush1.msra.mxu0 %v196
    %252 = vmatprep.subr.mxu0 0.0
    %253 = vmatpush1.msra.mxu0 0.0
    %254 = vmatprep.subr.mxu0 0.0
    %255 = vmatpush1.msra.mxu0 0.0
    %256 = vmatprep.subr.mxu0 0.0
    %257 = vmatpush1.msra.mxu0 0.0
    %258 = vmatprep.subr.mxu0 0.0
    %259 = vmatpush1.msra.mxu0 0.0
    %260 = vmatprep.subr.mxu0 0.0
    %261 = vmatpush1.msra.mxu0 0.0
    %262 = vmatprep.subr.mxu0 0.0
    %263 = vmatpush1.msra.mxu0 0.0
    %264 = vmatprep.subr.mxu0 0.0
    %265 = vmatpush1.msra.mxu0 0.0
    %266 = vmatprep.subr.mxu0 0.0
    %267 = vmatpush1.msra.mxu0 0.0
    %268 = vmatprep.subr.mxu0 0.0
    %269 = vmatpush1.msra.mxu0 0.0
    %270 = vmatprep.subr.mxu0 0.0
    %271 = vmatpush1.msra.mxu0 0.0
    %272 = vmatprep.subr.mxu0 0.0
    %273 = vmatpush1.msra.mxu0 0.0
    %274 = vmatprep.subr.mxu0 0.0
    %275 = vmatpush1.msra.mxu0 0.0
    %276 = vmatprep.subr.mxu0 0.0
    %277 = vmatpush1.msra.mxu0 0.0
    %278 = vmatprep.subr.mxu0 0.0
    %279 = vmatpush1.msra.mxu0 0.0
    %280 = vmatprep.subr.mxu0 0.0
    %281 = vmatpush1.msra.mxu0 0.0
    %282 = vmatprep.subr.mxu0 0.0
    %283 = vmatpush1.msra.mxu0 0.0
    %284 = vmatprep.subr.mxu0 0.0
    %285 = vmatpush1.msra.mxu0 0.0
    %286 = vmatprep.subr.mxu0 0.0
    %287 = vmatpush1.msra.mxu0 0.0
    %288 = vmatprep.subr.mxu0 0.0
    %289 = vmatpush1.msra.mxu0 0.0
    %290 = vmatprep.subr.mxu0 0.0
    %291 = vmatpush1.msra.mxu0 0.0
    %292 = vmatprep.subr.mxu0 0.0
    %293 = vmatpush1.msra.mxu0 0.0
    %294 = vmatprep.subr.mxu0 0.0
    %295 = vmatpush1.msra.mxu0 0.0
    %296 = vmatprep.subr.mxu0 0.0
    %297 = vmatpush1.msra.mxu0 0.0
    %298 = vmatprep.subr.mxu0 0.0
    %299 = vmatpush1.msra.mxu0 0.0
    %300 = vmatprep.subr.mxu0 0.0
    %301 = vmatpush1.msra.mxu0 0.0
    %302 = vmatprep.subr.mxu0 0.0
    %303 = vmatpush1.msra.mxu0 0.0
    %304 = vmatprep.subr.mxu0 0.0
    %305 = vmatpush1.msra.mxu0 0.0
    %306 = vmatprep.subr.mxu0 0.0
    %307 = vmatpush1.msra.mxu0 0.0
    %308 = vmatprep.mubr.f32.mxu0 0.0
    %309 = vmatmul.mubr.f32.gmra.mrb[0].mxu0 %v236
    %v310 = vpop.f32.mrb[0].mxu0
    %v311 = vadd.f32 %v234, %v310
    %v312 = vpop.f32.mrb[0].mxu0
    %313 = vmatprep.mubr.f32.mxu0 0.0
    %314 = vmatmul.mubr.f32.gmra.mrb[0].mxu0 %v239
    %v315 = vpop.f32.mrb[0].mxu0
    %v316 = vadd.f32 %v234, %v315
    %v317 = vpop.f32.mrb[0].mxu0
    %318 = vmatprep.mubr.f32.mxu0 0.0
    %319 = vmatmul.mubr.f32.gmra.mrb[0].mxu0 %v242
    %v320 = vpop.f32.mrb[0].mxu0
    %v321 = vadd.f32 %v234, %v320
    %v322 = vpop.f32.mrb[0].mxu0
    %323 = vdwg.mxu0
    %v325 = vsel %vm169, %v190, 0
    %v328 = vsel %vm169, %v191, 0
    %v331 = vsel %vm169, %v192, 0
    %333 = vmatprep.subr.mxu0 0.0
    %334 = vmatpush1.msra.mxu0 %v193
    %335 = vmatprep.subr.mxu0 0.0
    %336 = vmatpush1.msra.mxu0 %v194
    %337 = vmatprep.subr.mxu0 0.0
    %338 = vmatpush1.msra.mxu0 %v195
    %339 = vmatprep.subr.mxu0 0.0
    %340 = vmatpush1.msra.mxu0 %v196
    %341 = vmatprep.subr.mxu0 0.0
    %342 = vmatpush1.msra.mxu0 0.0
    %343 = vmatprep.subr.mxu0 0.0
    %344 = vmatpush1.msra.mxu0 0.0
    %345 = vmatprep.subr.mxu0 0.0
    %346 = vmatpush1.msra.mxu0 0.0
    %347 = vmatprep.subr.mxu0 0.0
    %348 = vmatpush1.msra.mxu0 0.0
    %349 = vmatprep.subr.mxu0 0.0
    %350 = vmatpush1.msra.mxu0 0.0
    %351 = vmatprep.subr.mxu0 0.0
    %352 = vmatpush1.msra.mxu0 0.0
    %353 = vmatprep.subr.mxu0 0.0
    %354 = vmatpush1.msra.mxu0 0.0
    %355 = vmatprep.subr.mxu0 0.0
    %356 = vmatpush1.msra.mxu0 0.0
    %357 = vmatprep.subr.mxu0 0.0
    %358 = vmatpush1.msra.mxu0 0.0
    %359 = vmatprep.subr.mxu0 0.0
    %360 = vmatpush1.msra.mxu0 0.0
    %361 = vmatprep.subr.mxu0 0.0
    %362 = vmatpush1.msra.mxu0 0.0
    %363 = vmatprep.subr.mxu0 0.0
    %364 = vmatpush1.msra.mxu0 0.0
    %365 = vmatprep.subr.mxu0 0.0
    %366 = vmatpush1.msra.mxu0 0.0
    %367 = vmatprep.subr.mxu0 0.0
    %368 = vmatpush1.msra.mxu0 0.0
    %369 = vmatprep.subr.mxu0 0.0
    %370 = vmatpush1.msra.mxu0 0.0
    %371 = vmatprep.subr.mxu0 0.0
    %372 = vmatpush1.msra.mxu0 0.0
    %373 = vmatprep.subr.mxu0 0.0
    %374 = vmatpush1.msra.mxu0 0.0
    %375 = vmatprep.subr.mxu0 0.0
    %376 = vmatpush1.msra.mxu0 0.0
    %377 = vmatprep.subr.mxu0 0.0
    %378 = vmatpush1.msra.mxu0 0.0
    %379 = vmatprep.subr.mxu0 0.0
    %380 = vmatpush1.msra.mxu0 0.0
    %381 = vmatprep.subr.mxu0 0.0
    %382 = vmatpush1.msra.mxu0 0.0
    %383 = vmatprep.subr.mxu0 0.0
    %384 = vmatpush1.msra.mxu0 0.0
    %385 = vmatprep.subr.mxu0 0.0
    %386 = vmatpush1.msra.mxu0 0.0
    %387 = vmatprep.subr.mxu0 0.0
    %388 = vmatpush1.msra.mxu0 0.0
    %389 = vmatprep.subr.mxu0 0.0
    %390 = vmatpush1.msra.mxu0 0.0
    %391 = vmatprep.subr.mxu0 0.0
    %392 = vmatpush1.msra.mxu0 0.0
    %393 = vmatprep.subr.mxu0 0.0
    %394 = vmatpush1.msra.mxu0 0.0
    %395 = vmatprep.subr.mxu0 0.0
    %396 = vmatpush1.msra.mxu0 0.0
    %397 = vmatprep.mubr.f32.mxu0 0.0
    %398 = vmatmul.mubr.f32.gmra.mrb[0].mxu0 %v325
    %v399 = vpop.f32.mrb[0].mxu0
    %v400 = vadd.f32 %v234, %v399
    %v401 = vpop.f32.mrb[0].mxu0
    %402 = vmatprep.mubr.f32.mxu0 0.0
    %403 = vmatmul.mubr.f32.gmra.mrb[0].mxu0 %v328
    %v404 = vpop.f32.mrb[0].mxu0
    %v405 = vadd.f32 %v234, %v404
    %v406 = vpop.f32.mrb[0].mxu0
    %407 = vmatprep.mubr.f32.mxu0 0.0
    %408 = vmatmul.mubr.f32.gmra.mrb[0].mxu0 %v331
    %v409 = vpop.f32.mrb[0].mxu0
    %v410 = vadd.f32 %v234, %v409
    %v411 = vpop.f32.mrb[0].mxu0
    %412 = vdwg.mxu0
    %v413 = vlaneseq
    %v414 = vshrl.u32 %v413, 7
    %v415 = vsub.s32 0, %v414
    %v416 = vrot.slane %v218, %v415
    %417 = vmatprep.subr.mxu0 0.0
    %418 = vmatpush1.msra.mxu0 %v197
    %419 = vmatprep.subr.mxu0 0.0
    %420 = vmatpush1.msra.mxu0 %v198
    %421 = vmatprep.subr.mxu0 0.0
    %422 = vmatpush1.msra.mxu0 %v199
    %423 = vmatprep.subr.mxu0 0.0
    %424 = vmatpush1.msra.mxu0 %v200
    %425 = vmatprep.subr.mxu0 0.0
    %426 = vmatpush1.msra.mxu0 0.0
    %427 = vmatprep.subr.mxu0 0.0
    %428 = vmatpush1.msra.mxu0 0.0
    %429 = vmatprep.subr.mxu0 0.0
    %430 = vmatpush1.msra.mxu0 0.0
    %431 = vmatprep.subr.mxu0 0.0
    %432 = vmatpush1.msra.mxu0 0.0
    %433 = vmatprep.subr.mxu0 0.0
    %434 = vmatpush1.msra.mxu0 0.0
    %435 = vmatprep.subr.mxu0 0.0
    %436 = vmatpush1.msra.mxu0 0.0
    %437 = vmatprep.subr.mxu0 0.0
    %438 = vmatpush1.msra.mxu0 0.0
    %439 = vmatprep.subr.mxu0 0.0
    %440 = vmatpush1.msra.mxu0 0.0
    %441 = vmatprep.subr.mxu0 0.0
    %442 = vmatpush1.msra.mxu0 0.0
    %443 = vmatprep.subr.mxu0 0.0
    %444 = vmatpush1.msra.mxu0 0.0
    %445 = vmatprep.subr.mxu0 0.0
    %446 = vmatpush1.msra.mxu0 0.0
    %447 = vmatprep.subr.mxu0 0.0
    %448 = vmatpush1.msra.mxu0 0.0
    %449 = vmatprep.subr.mxu0 0.0
    %450 = vmatpush1.msra.mxu0 0.0
    %451 = vmatprep.subr.mxu0 0.0
    %452 = vmatpush1.msra.mxu0 0.0
    %453 = vmatprep.subr.mxu0 0.0
    %454 = vmatpush1.msra.mxu0 0.0
    %455 = vmatprep.subr.mxu0 0.0
    %456 = vmatpush1.msra.mxu0 0.0
    %457 = vmatprep.subr.mxu0 0.0
    %458 = vmatpush1.msra.mxu0 0.0
    %459 = vmatprep.subr.mxu0 0.0
    %460 = vmatpush1.msra.mxu0 0.0
    %461 = vmatprep.subr.mxu0 0.0
    %462 = vmatpush1.msra.mxu0 0.0
    %463 = vmatprep.subr.mxu0 0.0
    %464 = vmatpush1.msra.mxu0 0.0
    %465 = vmatprep.subr.mxu0 0.0
    %466 = vmatpush1.msra.mxu0 0.0
    %467 = vmatprep.subr.mxu0 0.0
    %468 = vmatpush1.msra.mxu0 0.0
    %469 = vmatprep.subr.mxu0 0.0
    %470 = vmatpush1.msra.mxu0 0.0
    %471 = vmatprep.subr.mxu0 0.0
    %472 = vmatpush1.msra.mxu0 0.0
    %473 = vmatprep.subr.mxu0 0.0
    %474 = vmatpush1.msra.mxu0 0.0
    %475 = vmatprep.subr.mxu0 0.0
    %476 = vmatpush1.msra.mxu0 0.0
    %477 = vmatprep.subr.mxu0 0.0
    %478 = vmatpush1.msra.mxu0 0.0
    %479 = vmatprep.subr.mxu0 0.0
    %480 = vmatpush1.msra.mxu0 0.0
    %481 = vmatprep.mubr.f32.mxu0 0.0
    %482 = vmatmul.mubr.f32.gmra.mrb[0].mxu0 %v236
    %v483 = vpop.f32.mrb[0].mxu0
    %v484 = vadd.f32 %v416, %v483
    %v485 = vpop.f32.mrb[0].mxu0
    %486 = vmatprep.mubr.f32.mxu0 0.0
    %487 = vmatmul.mubr.f32.gmra.mrb[0].mxu0 %v239
    %v488 = vpop.f32.mrb[0].mxu0
    %v489 = vadd.f32 %v416, %v488
    %v490 = vpop.f32.mrb[0].mxu0
    %491 = vmatprep.mubr.f32.mxu0 0.0
    %492 = vmatmul.mubr.f32.gmra.mrb[0].mxu0 %v242
    %v493 = vpop.f32.mrb[0].mxu0
    %v494 = vadd.f32 %v416, %v493
    %v495 = vpop.f32.mrb[0].mxu0
    %496 = vdwg.mxu0
    %497 = vmatprep.subr.mxu0 0.0
    %498 = vmatpush1.msra.mxu0 %v197
    %499 = vmatprep.subr.mxu0 0.0
    %500 = vmatpush1.msra.mxu0 %v198
    %501 = vmatprep.subr.mxu0 0.0
    %502 = vmatpush1.msra.mxu0 %v199
    %503 = vmatprep.subr.mxu0 0.0
    %504 = vmatpush1.msra.mxu0 %v200
    %505 = vmatprep.subr.mxu0 0.0
    %506 = vmatpush1.msra.mxu0 0.0
    %507 = vmatprep.subr.mxu0 0.0
    %508 = vmatpush1.msra.mxu0 0.0
    %509 = vmatprep.subr.mxu0 0.0
    %510 = vmatpush1.msra.mxu0 0.0
    %511 = vmatprep.subr.mxu0 0.0
    %512 = vmatpush1.msra.mxu0 0.0
    %513 = vmatprep.subr.mxu0 0.0
    %514 = vmatpush1.msra.mxu0 0.0
    %515 = vmatprep.subr.mxu0 0.0
    %516 = vmatpush1.msra.mxu0 0.0
    %517 = vmatprep.subr.mxu0 0.0
    %518 = vmatpush1.msra.mxu0 0.0
    %519 = vmatprep.subr.mxu0 0.0
    %520 = vmatpush1.msra.mxu0 0.0
    %521 = vmatprep.subr.mxu0 0.0
    %522 = vmatpush1.msra.mxu0 0.0
    %523 = vmatprep.subr.mxu0 0.0
    %524 = vmatpush1.msra.mxu0 0.0
    %525 = vmatprep.subr.mxu0 0.0
    %526 = vmatpush1.msra.mxu0 0.0
    %527 = vmatprep.subr.mxu0 0.0
    %528 = vmatpush1.msra.mxu0 0.0
    %529 = vmatprep.subr.mxu0 0.0
    %530 = vmatpush1.msra.mxu0 0.0
    %531 = vmatprep.subr.mxu0 0.0
    %532 = vmatpush1.msra.mxu0 0.0
    %533 = vmatprep.subr.mxu0 0.0
    %534 = vmatpush1.msra.mxu0 0.0
    %535 = vmatprep.subr.mxu0 0.0
    %536 = vmatpush1.msra.mxu0 0.0
    %537 = vmatprep.subr.mxu0 0.0
    %538 = vmatpush1.msra.mxu0 0.0
    %539 = vmatprep.subr.mxu0 0.0
    %540 = vmatpush1.msra.mxu0 0.0
    %541 = vmatprep.subr.mxu0 0.0
    %542 = vmatpush1.msra.mxu0 0.0
    %543 = vmatprep.subr.mxu0 0.0
    %544 = vmatpush1.msra.mxu0 0.0
    %545 = vmatprep.subr.mxu0 0.0
    %546 = vmatpush1.msra.mxu0 0.0
    %547 = vmatprep.subr.mxu0 0.0
    %548 = vmatpush1.msra.mxu0 0.0
    %549 = vmatprep.subr.mxu0 0.0
    %550 = vmatpush1.msra.mxu0 0.0
    %551 = vmatprep.subr.mxu0 0.0
    %552 = vmatpush1.msra.mxu0 0.0
    %553 = vmatprep.subr.mxu0 0.0
    %554 = vmatpush1.msra.mxu0 0.0
    %555 = vmatprep.subr.mxu0 0.0
    %556 = vmatpush1.msra.mxu0 0.0
    %557 = vmatprep.subr.mxu0 0.0
    %558 = vmatpush1.msra.mxu0 0.0
    %559 = vmatprep.subr.mxu0 0.0
    %560 = vmatpush1.msra.mxu0 0.0
    %561 = vmatprep.mubr.f32.mxu0 0.0
    %562 = vmatmul.mubr.f32.gmra.mrb[0].mxu0 %v325
    %v563 = vpop.f32.mrb[0].mxu0
    %v564 = vadd.f32 %v416, %v563
    %v565 = vpop.f32.mrb[0].mxu0
    %566 = vmatprep.mubr.f32.mxu0 0.0
    %567 = vmatmul.mubr.f32.gmra.mrb[0].mxu0 %v328
    %v568 = vpop.f32.mrb[0].mxu0
    %v569 = vadd.f32 %v416, %v568
    %v570 = vpop.f32.mrb[0].mxu0
    %571 = vmatprep.mubr.f32.mxu0 0.0
    %572 = vmatmul.mubr.f32.gmra.mrb[0].mxu0 %v331
    %v573 = vpop.f32.mrb[0].mxu0
    %v574 = vadd.f32 %v416, %v573
    %v575 = vpop.f32.mrb[0].mxu0
    %576 = vdwg.mxu0
    %v577 = vlaneseq
    %v578 = vshrl.u32 %v577, 7
    %v579 = vsub.s32 0, %v578
    %v580 = vrot.slane %v219, %v579
    %581 = vmatprep.subr.mxu0 0.0
    %582 = vmatpush1.msra.mxu0 %v201
    %583 = vmatprep.subr.mxu0 0.0
    %584 = vmatpush1.msra.mxu0 %v202
    %585 = vmatprep.subr.mxu0 0.0
    %586 = vmatpush1.msra.mxu0 %v203
    %587 = vmatprep.subr.mxu0 0.0
    %588 = vmatpush1.msra.mxu0 %v204
    %589 = vmatprep.subr.mxu0 0.0
    %590 = vmatpush1.msra.mxu0 0.0
    %591 = vmatprep.subr.mxu0 0.0
    %592 = vmatpush1.msra.mxu0 0.0
    %593 = vmatprep.subr.mxu0 0.0
    %594 = vmatpush1.msra.mxu0 0.0
    %595 = vmatprep.subr.mxu0 0.0
    %596 = vmatpush1.msra.mxu0 0.0
    %597 = vmatprep.subr.mxu0 0.0
    %598 = vmatpush1.msra.mxu0 0.0
    %599 = vmatprep.subr.mxu0 0.0
    %600 = vmatpush1.msra.mxu0 0.0
    %601 = vmatprep.subr.mxu0 0.0
    %602 = vmatpush1.msra.mxu0 0.0
    %603 = vmatprep.subr.mxu0 0.0
    %604 = vmatpush1.msra.mxu0 0.0
    %605 = vmatprep.subr.mxu0 0.0
    %606 = vmatpush1.msra.mxu0 0.0
    %607 = vmatprep.subr.mxu0 0.0
    %608 = vmatpush1.msra.mxu0 0.0
    %609 = vmatprep.subr.mxu0 0.0
    %610 = vmatpush1.msra.mxu0 0.0
    %611 = vmatprep.subr.mxu0 0.0
    %612 = vmatpush1.msra.mxu0 0.0
    %613 = vmatprep.subr.mxu0 0.0
    %614 = vmatpush1.msra.mxu0 0.0
    %615 = vmatprep.subr.mxu0 0.0
    %616 = vmatpush1.msra.mxu0 0.0
    %617 = vmatprep.subr.mxu0 0.0
    %618 = vmatpush1.msra.mxu0 0.0
    %619 = vmatprep.subr.mxu0 0.0
    %620 = vmatpush1.msra.mxu0 0.0
    %621 = vmatprep.subr.mxu0 0.0
    %622 = vmatpush1.msra.mxu0 0.0
    %623 = vmatprep.subr.mxu0 0.0
    %624 = vmatpush1.msra.mxu0 0.0
    %625 = vmatprep.subr.mxu0 0.0
    %626 = vmatpush1.msra.mxu0 0.0
    %627 = vmatprep.subr.mxu0 0.0
    %628 = vmatpush1.msra.mxu0 0.0
    %629 = vmatprep.subr.mxu0 0.0
    %630 = vmatpush1.msra.mxu0 0.0
    %631 = vmatprep.subr.mxu0 0.0
    %632 = vmatpush1.msra.mxu0 0.0
    %633 = vmatprep.subr.mxu0 0.0
    %634 = vmatpush1.msra.mxu0 0.0
    %635 = vmatprep.subr.mxu0 0.0
    %636 = vmatpush1.msra.mxu0 0.0
    %637 = vmatprep.subr.mxu0 0.0
    %638 = vmatpush1.msra.mxu0 0.0
    %639 = vmatprep.subr.mxu0 0.0
    %640 = vmatpush1.msra.mxu0 0.0
    %641 = vmatprep.subr.mxu0 0.0
    %642 = vmatpush1.msra.mxu0 0.0
    %643 = vmatprep.subr.mxu0 0.0
    %644 = vmatpush1.msra.mxu0 0.0
    %645 = vmatprep.mubr.f32.mxu0 0.0
    %646 = vmatmul.mubr.f32.gmra.mrb[0].mxu0 %v236
    %v647 = vpop.f32.mrb[0].mxu0
    %v648 = vadd.f32 %v580, %v647
    %v649 = vpop.f32.mrb[0].mxu0
    %650 = vmatprep.mubr.f32.mxu0 0.0
    %651 = vmatmul.mubr.f32.gmra.mrb[0].mxu0 %v239
    %v652 = vpop.f32.mrb[0].mxu0
    %v653 = vadd.f32 %v580, %v652
    %v654 = vpop.f32.mrb[0].mxu0
    %655 = vmatprep.mubr.f32.mxu0 0.0
    %656 = vmatmul.mubr.f32.gmra.mrb[0].mxu0 %v242
    %v657 = vpop.f32.mrb[0].mxu0
    %v658 = vadd.f32 %v580, %v657
    %v659 = vpop.f32.mrb[0].mxu0
    %660 = vdwg.mxu0
    %661 = vmatprep.subr.mxu0 0.0
    %662 = vmatpush1.msra.mxu0 %v201
    %663 = vmatprep.subr.mxu0 0.0
    %664 = vmatpush1.msra.mxu0 %v202
    %665 = vmatprep.subr.mxu0 0.0
    %666 = vmatpush1.msra.mxu0 %v203
    %667 = vmatprep.subr.mxu0 0.0
    %668 = vmatpush1.msra.mxu0 %v204
    %669 = vmatprep.subr.mxu0 0.0
    %670 = vmatpush1.msra.mxu0 0.0
    %671 = vmatprep.subr.mxu0 0.0
    %672 = vmatpush1.msra.mxu0 0.0
    %673 = vmatprep.subr.mxu0 0.0
    %674 = vmatpush1.msra.mxu0 0.0
    %675 = vmatprep.subr.mxu0 0.0
    %676 = vmatpush1.msra.mxu0 0.0
    %677 = vmatprep.subr.mxu0 0.0
    %678 = vmatpush1.msra.mxu0 0.0
    %679 = vmatprep.subr.mxu0 0.0
    %680 = vmatpush1.msra.mxu0 0.0
    %681 = vmatprep.subr.mxu0 0.0
    %682 = vmatpush1.msra.mxu0 0.0
    %683 = vmatprep.subr.mxu0 0.0
    %684 = vmatpush1.msra.mxu0 0.0
    %685 = vmatprep.subr.mxu0 0.0
    %686 = vmatpush1.msra.mxu0 0.0
    %687 = vmatprep.subr.mxu0 0.0
    %688 = vmatpush1.msra.mxu0 0.0
    %689 = vmatprep.subr.mxu0 0.0
    %690 = vmatpush1.msra.mxu0 0.0
    %691 = vmatprep.subr.mxu0 0.0
    %692 = vmatpush1.msra.mxu0 0.0
    %693 = vmatprep.subr.mxu0 0.0
    %694 = vmatpush1.msra.mxu0 0.0
    %695 = vmatprep.subr.mxu0 0.0
    %696 = vmatpush1.msra.mxu0 0.0
    %697 = vmatprep.subr.mxu0 0.0
    %698 = vmatpush1.msra.mxu0 0.0
    %699 = vmatprep.subr.mxu0 0.0
    %700 = vmatpush1.msra.mxu0 0.0
    %701 = vmatprep.subr.mxu0 0.0
    %702 = vmatpush1.msra.mxu0 0.0
    %703 = vmatprep.subr.mxu0 0.0
    %704 = vmatpush1.msra.mxu0 0.0
    %705 = vmatprep.subr.mxu0 0.0
    %706 = vmatpush1.msra.mxu0 0.0
    %707 = vmatprep.subr.mxu0 0.0
    %708 = vmatpush1.msra.mxu0 0.0
    %709 = vmatprep.subr.mxu0 0.0
    %710 = vmatpush1.msra.mxu0 0.0
    %711 = vmatprep.subr.mxu0 0.0
    %712 = vmatpush1.msra.mxu0 0.0
    %713 = vmatprep.subr.mxu0 0.0
    %714 = vmatpush1.msra.mxu0 0.0
    %715 = vmatprep.subr.mxu0 0.0
    %716 = vmatpush1.msra.mxu0 0.0
    %717 = vmatprep.subr.mxu0 0.0
    %718 = vmatpush1.msra.mxu0 0.0
    %719 = vmatprep.subr.mxu0 0.0
    %720 = vmatpush1.msra.mxu0 0.0
    %721 = vmatprep.subr.mxu0 0.0
    %722 = vmatpush1.msra.mxu0 0.0
    %723 = vmatprep.subr.mxu0 0.0
    %724 = vmatpush1.msra.mxu0 0.0
    %725 = vmatprep.mubr.f32.mxu0 0.0
    %726 = vmatmul.mubr.f32.gmra.mrb[0].mxu0 %v325
    %v727 = vpop.f32.mrb[0].mxu0
    %v728 = vadd.f32 %v580, %v727
    %v729 = vpop.f32.mrb[0].mxu0
    %730 = vmatprep.mubr.f32.mxu0 0.0
    %731 = vmatmul.mubr.f32.gmra.mrb[0].mxu0 %v328
    %v732 = vpop.f32.mrb[0].mxu0
    %v733 = vadd.f32 %v580, %v732
    %v734 = vpop.f32.mrb[0].mxu0
    %735 = vmatprep.mubr.f32.mxu0 0.0
    %736 = vmatmul.mubr.f32.gmra.mrb[0].mxu0 %v331
    %v737 = vpop.f32.mrb[0].mxu0
    %v738 = vadd.f32 %v580, %v737
    %v739 = vpop.f32.mrb[0].mxu0
    %740 = vdwg.mxu0
    %v741 = vmul.f32 %v311, %v484
    %v742 = vmul.f32 %v316, %v489
    %v743 = vmul.f32 %v321, %v494
    %v745 = vsel %vm169, %v741, 0
    %v748 = vsel %vm169, %v742, 0
    %v751 = vsel %vm169, %v743, 0
    %753 = vmatprep.subr.mxu0 0.0
    %754 = vmatpush1.msra.mxu0 %v40
    %755 = vmatprep.subr.mxu0 0.0
    %756 = vmatpush1.msra.mxu0 %v41
    %757 = vmatprep.subr.mxu0 0.0
    %758 = vmatpush1.msra.mxu0 %v42
    %759 = vmatprep.subr.mxu0 0.0
    %760 = vmatpush1.msra.mxu0 %v43
    %761 = vmatprep.subr.mxu0 0.0
    %762 = vmatpush1.msra.mxu0 0.0
    %763 = vmatprep.subr.mxu0 0.0
    %764 = vmatpush1.msra.mxu0 0.0
    %765 = vmatprep.subr.mxu0 0.0
    %766 = vmatpush1.msra.mxu0 0.0
    %767 = vmatprep.subr.mxu0 0.0
    %768 = vmatpush1.msra.mxu0 0.0
    %769 = vmatprep.subr.mxu0 0.0
    %770 = vmatpush1.msra.mxu0 0.0
    %771 = vmatprep.subr.mxu0 0.0
    %772 = vmatpush1.msra.mxu0 0.0
    %773 = vmatprep.subr.mxu0 0.0
    %774 = vmatpush1.msra.mxu0 0.0
    %775 = vmatprep.subr.mxu0 0.0
    %776 = vmatpush1.msra.mxu0 0.0
    %777 = vmatprep.subr.mxu0 0.0
    %778 = vmatpush1.msra.mxu0 0.0
    %779 = vmatprep.subr.mxu0 0.0
    %780 = vmatpush1.msra.mxu0 0.0
    %781 = vmatprep.subr.mxu0 0.0
    %782 = vmatpush1.msra.mxu0 0.0
    %783 = vmatprep.subr.mxu0 0.0
    %784 = vmatpush1.msra.mxu0 0.0
    %785 = vmatprep.subr.mxu0 0.0
    %786 = vmatpush1.msra.mxu0 0.0
    %787 = vmatprep.subr.mxu0 0.0
    %788 = vmatpush1.msra.mxu0 0.0
    %789 = vmatprep.subr.mxu0 0.0
    %790 = vmatpush1.msra.mxu0 0.0
    %791 = vmatprep.subr.mxu0 0.0
    %792 = vmatpush1.msra.mxu0 0.0
    %793 = vmatprep.subr.mxu0 0.0
    %794 = vmatpush1.msra.mxu0 0.0
    %795 = vmatprep.subr.mxu0 0.0
    %796 = vmatpush1.msra.mxu0 0.0
    %797 = vmatprep.subr.mxu0 0.0
    %798 = vmatpush1.msra.mxu0 0.0
    %799 = vmatprep.subr.mxu0 0.0
    %800 = vmatpush1.msra.mxu0 0.0
    %801 = vmatprep.subr.mxu0 0.0
    %802 = vmatpush1.msra.mxu0 0.0
    %803 = vmatprep.subr.mxu0 0.0
    %804 = vmatpush1.msra.mxu0 0.0
    %805 = vmatprep.subr.mxu0 0.0
    %806 = vmatpush1.msra.mxu0 0.0
    %807 = vmatprep.subr.mxu0 0.0
    %808 = vmatpush1.msra.mxu0 0.0
    %809 = vmatprep.subr.mxu0 0.0
    %810 = vmatpush1.msra.mxu0 0.0
    %811 = vmatprep.subr.mxu0 0.0
    %812 = vmatpush1.msra.mxu0 0.0
    %813 = vmatprep.subr.mxu0 0.0
    %814 = vmatpush1.msra.mxu0 0.0
    %815 = vmatprep.subr.mxu0 0.0
    %816 = vmatpush1.msra.mxu0 0.0
    %817 = vmatprep.mubr.f32.mxu0 0.0
    %818 = vmatmul.mubr.f32.gmra.mrb[0].mxu0 %v745
    %v819 = vpop.f32.mrb[0].mxu0
    %v820 = vadd.f32 0.0, %v819
    %v821 = vpop.f32.mrb[0].mxu0
    %822 = vmatprep.mubr.f32.mxu0 0.0
    %823 = vmatmul.mubr.f32.gmra.mrb[0].mxu0 %v748
    %v824 = vpop.f32.mrb[0].mxu0
    %v825 = vadd.f32 0.0, %v824
    %v826 = vpop.f32.mrb[0].mxu0
    %827 = vmatprep.mubr.f32.mxu0 0.0
    %828 = vmatmul.mubr.f32.gmra.mrb[0].mxu0 %v751
    %v829 = vpop.f32.mrb[0].mxu0
    %v830 = vadd.f32 0.0, %v829
    %v831 = vpop.f32.mrb[0].mxu0
    %832 = vdwg.mxu0
    %v833 = vmul.f32 %v820, 0.35355338
    %v834 = vmul.f32 %v825, 0.35355338
    %v835 = vmul.f32 %v830, 0.35355338
    %v836 = vmul.f32 %v311, %v564
    %v837 = vmul.f32 %v316, %v569
    %v838 = vmul.f32 %v321, %v574
    %v840 = vsel %vm169, %v836, 0
    %v843 = vsel %vm169, %v837, 0
    %v846 = vsel %vm169, %v838, 0
    %848 = vmatprep.subr.mxu0 0.0
    %849 = vmatpush1.msra.mxu0 %v40
    %850 = vmatprep.subr.mxu0 0.0
    %851 = vmatpush1.msra.mxu0 %v41
    %852 = vmatprep.subr.mxu0 0.0
    %853 = vmatpush1.msra.mxu0 %v42
    %854 = vmatprep.subr.mxu0 0.0
    %855 = vmatpush1.msra.mxu0 %v43
    %856 = vmatprep.subr.mxu0 0.0
    %857 = vmatpush1.msra.mxu0 0.0
    %858 = vmatprep.subr.mxu0 0.0
    %859 = vmatpush1.msra.mxu0 0.0
    %860 = vmatprep.subr.mxu0 0.0
    %861 = vmatpush1.msra.mxu0 0.0
    %862 = vmatprep.subr.mxu0 0.0
    %863 = vmatpush1.msra.mxu0 0.0
    %864 = vmatprep.subr.mxu0 0.0
    %865 = vmatpush1.msra.mxu0 0.0
    %866 = vmatprep.subr.mxu0 0.0
    %867 = vmatpush1.msra.mxu0 0.0
    %868 = vmatprep.subr.mxu0 0.0
    %869 = vmatpush1.msra.mxu0 0.0
    %870 = vmatprep.subr.mxu0 0.0
    %871 = vmatpush1.msra.mxu0 0.0
    %872 = vmatprep.subr.mxu0 0.0
    %873 = vmatpush1.msra.mxu0 0.0
    %874 = vmatprep.subr.mxu0 0.0
    %875 = vmatpush1.msra.mxu0 0.0
    %876 = vmatprep.subr.mxu0 0.0
    %877 = vmatpush1.msra.mxu0 0.0
    %878 = vmatprep.subr.mxu0 0.0
    %879 = vmatpush1.msra.mxu0 0.0
    %880 = vmatprep.subr.mxu0 0.0
    %881 = vmatpush1.msra.mxu0 0.0
    %882 = vmatprep.subr.mxu0 0.0
    %883 = vmatpush1.msra.mxu0 0.0
    %884 = vmatprep.subr.mxu0 0.0
    %885 = vmatpush1.msra.mxu0 0.0
    %886 = vmatprep.subr.mxu0 0.0
    %887 = vmatpush1.msra.mxu0 0.0
    %888 = vmatprep.subr.mxu0 0.0
    %889 = vmatpush1.msra.mxu0 0.0
    %890 = vmatprep.subr.mxu0 0.0
    %891 = vmatpush1.msra.mxu0 0.0
    %892 = vmatprep.subr.mxu0 0.0
    %893 = vmatpush1.msra.mxu0 0.0
    %894 = vmatprep.subr.mxu0 0.0
    %895 = vmatpush1.msra.mxu0 0.0
    %896 = vmatprep.subr.mxu0 0.0
    %897 = vmatpush1.msra.mxu0 0.0
    %898 = vmatprep.subr.mxu0 0.0
    %899 = vmatpush1.msra.mxu0 0.0
    %900 = vmatprep.subr.mxu0 0.0
    %901 = vmatpush1.msra.mxu0 0.0
    %902 = vmatprep.subr.mxu0 0.0
    %903 = vmatpush1.msra.mxu0 0.0
    %904 = vmatprep.subr.mxu0 0.0
    %905 = vmatpush1.msra.mxu0 0.0
    %906 = vmatprep.subr.mxu0 0.0
    %907 = vmatpush1.msra.mxu0 0.0
    %908 = vmatprep.subr.mxu0 0.0
    %909 = vmatpush1.msra.mxu0 0.0
    %910 = vmatprep.subr.mxu0 0.0
    %911 = vmatpush1.msra.mxu0 0.0
    %912 = vmatprep.mubr.f32.mxu0 0.0
    %913 = vmatmul.mubr.f32.gmra.mrb[0].mxu0 %v840
    %v914 = vpop.f32.mrb[0].mxu0
    %v915 = vadd.f32 0.0, %v914
    %v916 = vpop.f32.mrb[0].mxu0
    %917 = vmatprep.mubr.f32.mxu0 0.0
    %918 = vmatmul.mubr.f32.gmra.mrb[0].mxu0 %v843
    %v919 = vpop.f32.mrb[0].mxu0
    %v920 = vadd.f32 0.0, %v919
    %v921 = vpop.f32.mrb[0].mxu0
    %922 = vmatprep.mubr.f32.mxu0 0.0
    %923 = vmatmul.mubr.f32.gmra.mrb[0].mxu0 %v846
    %v924 = vpop.f32.mrb[0].mxu0
    %v925 = vadd.f32 0.0, %v924
    %v926 = vpop.f32.mrb[0].mxu0
    %927 = vdwg.mxu0
    %v928 = vmul.f32 %v915, 0.35355338
    %v929 = vmul.f32 %v920, 0.35355338
    %v930 = vmul.f32 %v925, 0.35355338
    %v931 = vmax.f32 %v833, %v928
    %v932 = vmax.f32 %v834, %v929
    %v933 = vmax.f32 %v835, %v930
    %v934 = vsub.f32 %v833, %v931
    %v935 = vsub.f32 %v834, %v932
    %v936 = vsub.f32 %v835, %v933
    %v937 = vmul.f32 %v934, 1.442695
    %v938 = vpow.pop %v937
    %v939 = vmul.f32 %v935, 1.442695
    %v940 = vpow.pop %v939
    %v941 = vmul.f32 %v936, 1.442695
    %v942 = vpow.pop %v941
    %v943 = vsub.f32 %v928, %v931
    %v944 = vsub.f32 %v929, %v932
    %v945 = vsub.f32 %v930, %v933
    %v946 = vmul.f32 %v943, 1.442695
    %v947 = vpow.pop %v946
    %v948 = vmul.f32 %v944, 1.442695
    %v949 = vpow.pop %v948
    %v950 = vmul.f32 %v945, 1.442695
    %v951 = vpow.pop %v950
    %v952 = vadd.f32 %v938, %v947
    %v953 = vadd.f32 %v940, %v949
    %v954 = vadd.f32 %v942, %v951
    %v955 = vrcp.pop %v952
    %v956 = vrcp.pop %v953
    %v957 = vrcp.pop %v954
    %v958 = vmul.f32 %v938, %v955
    %v959 = vmul.f32 %v940, %v956
    %v960 = vmul.f32 %v942, %v957
    %vm961 = vcmask 31744
    %v963 = vsel %vm961, %v958, 0
    %v966 = vsel %vm961, %v959, 0
    %v969 = vsel %vm961, %v960, 0
    %vm971 = vcmask 1043456
    %v973 = vsel %vm971, %v50, 0
    %975 = vmatprep.subr.mxu0 0.0
    %976 = vmatpush1.msra.mxu0 %v973
    %977 = vmatprep.subr.mxu0 0.0
    %978 = vmatpush1.msra.mxu0 0.0
    %979 = vmatprep.subr.mxu0 0.0
    %980 = vmatpush1.msra.mxu0 0.0
    %981 = vmatprep.subr.mxu0 0.0
    %982 = vmatpush1.msra.mxu0 0.0
    %983 = vmatprep.subr.mxu0 0.0
    %984 = vmatpush1.msra.mxu0 0.0
    %985 = vmatprep.subr.mxu0 0.0
    %986 = vmatpush1.msra.mxu0 0.0
    %987 = vmatprep.subr.mxu0 0.0
    %988 = vmatpush1.msra.mxu0 0.0
    %989 = vmatprep.subr.mxu0 0.0
    %990 = vmatpush1.msra.mxu0 0.0
    %991 = vmatprep.subr.mxu0 0.0
    %992 = vmatpush1.msra.mxu0 0.0
    %993 = vmatprep.subr.mxu0 0.0
    %994 = vmatpush1.msra.mxu0 0.0
    %995 = vmatprep.subr.mxu0 0.0
    %996 = vmatpush1.msra.mxu0 0.0
    %997 = vmatprep.subr.mxu0 0.0
    %998 = vmatpush1.msra.mxu0 0.0
    %999 = vmatprep.subr.mxu0 0.0
    %1000 = vmatpush1.msra.mxu0 0.0
    %1001 = vmatprep.subr.mxu0 0.0
    %1002 = vmatpush1.msra.mxu0 0.0
    %1003 = vmatprep.subr.mxu0 0.0
    %1004 = vmatpush1.msra.mxu0 0.0
    %1005 = vmatprep.subr.mxu0 0.0
    %1006 = vmatpush1.msra.mxu0 0.0
    %1007 = vmatprep.subr.mxu0 0.0
    %1008 = vmatpush1.msra.mxu0 0.0
    %1009 = vmatprep.subr.mxu0 0.0
    %1010 = vmatpush1.msra.mxu0 0.0
    %1011 = vmatprep.subr.mxu0 0.0
    %1012 = vmatpush1.msra.mxu0 0.0
    %1013 = vmatprep.subr.mxu0 0.0
    %1014 = vmatpush1.msra.mxu0 0.0
    %1015 = vmatprep.subr.mxu0 0.0
    %1016 = vmatpush1.msra.mxu0 0.0
    %1017 = vmatprep.subr.mxu0 0.0
    %1018 = vmatpush1.msra.mxu0 0.0
    %1019 = vmatprep.subr.mxu0 0.0
    %1020 = vmatpush1.msra.mxu0 0.0
    %1021 = vmatprep.subr.mxu0 0.0
    %1022 = vmatpush1.msra.mxu0 0.0
    %1023 = vmatprep.subr.mxu0 0.0
    %1024 = vmatpush1.msra.mxu0 0.0
    %1025 = vmatprep.subr.mxu0 0.0
    %1026 = vmatpush1.msra.mxu0 0.0
    %1027 = vmatprep.subr.mxu0 0.0
    %1028 = vmatpush1.msra.mxu0 0.0
    %1029 = vmatprep.subr.mxu0 0.0
    %1030 = vmatpush1.msra.mxu0 0.0
    %1031 = vmatprep.subr.mxu0 0.0
    %1032 = vmatpush1.msra.mxu0 0.0
    %1033 = vmatprep.subr.mxu0 0.0
    %1034 = vmatpush1.msra.mxu0 0.0
    %1035 = vmatprep.subr.mxu0 0.0
    %1036 = vmatpush1.msra.mxu0 0.0
    %1037 = vmatprep.subr.mxu0 0.0
    %1038 = vmatpush1.msra.mxu0 0.0
    %1039 = vmatprep.mubr.f32.mxu0 0.0
    %1040 = vmatmul.mubr.f32.gmra.mrb[0].mxu0 %v963
    %v1041 = vpop.f32.mrb[0].mxu0
    %v1042 = vadd.f32 0.0, %v1041
    %v1043 = vpop.f32.mrb[0].mxu0
    %1044 = vmatprep.mubr.f32.mxu0 0.0
    %1045 = vmatmul.mubr.f32.gmra.mrb[0].mxu0 %v966
    %v1046 = vpop.f32.mrb[0].mxu0
    %v1047 = vadd.f32 0.0, %v1046
    %v1048 = vpop.f32.mrb[0].mxu0
    %1049 = vmatprep.mubr.f32.mxu0 0.0
    %1050 = vmatmul.mubr.f32.gmra.mrb[0].mxu0 %v969
    %v1051 = vpop.f32.mrb[0].mxu0
    %v1052 = vadd.f32 0.0, %v1051
    %v1053 = vpop.f32.mrb[0].mxu0
    %1054 = vdwg.mxu0
    %v1055 = vmul.f32 %v1042, %v648
    %v1056 = vmul.f32 %v1047, %v653
    %v1057 = vmul.f32 %v1052, %v658
    %v1058 = vmul.f32 %v947, %v955
    %v1059 = vmul.f32 %v949, %v956
    %v1060 = vmul.f32 %v951, %v957
    %v1062 = vsel %vm961, %v1058, 0
    %v1065 = vsel %vm961, %v1059, 0
    %v1068 = vsel %vm961, %v1060, 0
    %1070 = vmatprep.subr.mxu0 0.0
    %1071 = vmatpush1.msra.mxu0 %v973
    %1072 = vmatprep.subr.mxu0 0.0
    %1073 = vmatpush1.msra.mxu0 0.0
    %1074 = vmatprep.subr.mxu0 0.0
    %1075 = vmatpush1.msra.mxu0 0.0
    %1076 = vmatprep.subr.mxu0 0.0
    %1077 = vmatpush1.msra.mxu0 0.0
    %1078 = vmatprep.subr.mxu0 0.0
    %1079 = vmatpush1.msra.mxu0 0.0
    %1080 = vmatprep.subr.mxu0 0.0
    %1081 = vmatpush1.msra.mxu0 0.0
    %1082 = vmatprep.subr.mxu0 0.0
    %1083 = vmatpush1.msra.mxu0 0.0
    %1084 = vmatprep.subr.mxu0 0.0
    %1085 = vmatpush1.msra.mxu0 0.0
    %1086 = vmatprep.subr.mxu0 0.0
    %1087 = vmatpush1.msra.mxu0 0.0
    %1088 = vmatprep.subr.mxu0 0.0
    %1089 = vmatpush1.msra.mxu0 0.0
    %1090 = vmatprep.subr.mxu0 0.0
    %1091 = vmatpush1.msra.mxu0 0.0
    %1092 = vmatprep.subr.mxu0 0.0
    %1093 = vmatpush1.msra.mxu0 0.0
    %1094 = vmatprep.subr.mxu0 0.0
    %1095 = vmatpush1.msra.mxu0 0.0
    %1096 = vmatprep.subr.mxu0 0.0
    %1097 = vmatpush1.msra.mxu0 0.0
    %1098 = vmatprep.subr.mxu0 0.0
    %1099 = vmatpush1.msra.mxu0 0.0
    %1100 = vmatprep.subr.mxu0 0.0
    %1101 = vmatpush1.msra.mxu0 0.0
    %1102 = vmatprep.subr.mxu0 0.0
    %1103 = vmatpush1.msra.mxu0 0.0
    %1104 = vmatprep.subr.mxu0 0.0
    %1105 = vmatpush1.msra.mxu0 0.0
    %1106 = vmatprep.subr.mxu0 0.0
    %1107 = vmatpush1.msra.mxu0 0.0
    %1108 = vmatprep.subr.mxu0 0.0
    %1109 = vmatpush1.msra.mxu0 0.0
    %1110 = vmatprep.subr.mxu0 0.0
    %1111 = vmatpush1.msra.mxu0 0.0
    %1112 = vmatprep.subr.mxu0 0.0
    %1113 = vmatpush1.msra.mxu0 0.0
    %1114 = vmatprep.subr.mxu0 0.0
    %1115 = vmatpush1.msra.mxu0 0.0
    %1116 = vmatprep.subr.mxu0 0.0
    %1117 = vmatpush1.msra.mxu0 0.0
    %1118 = vmatprep.subr.mxu0 0.0
    %1119 = vmatpush1.msra.mxu0 0.0
    %1120 = vmatprep.subr.mxu0 0.0
    %1121 = vmatpush1.msra.mxu0 0.0
    %1122 = vmatprep.subr.mxu0 0.0
    %1123 = vmatpush1.msra.mxu0 0.0
    %1124 = vmatprep.subr.mxu0 0.0
    %1125 = vmatpush1.msra.mxu0 0.0
    %1126 = vmatprep.subr.mxu0 0.0
    %1127 = vmatpush1.msra.mxu0 0.0
    %1128 = vmatprep.subr.mxu0 0.0
    %1129 = vmatpush1.msra.mxu0 0.0
    %1130 = vmatprep.subr.mxu0 0.0
    %1131 = vmatpush1.msra.mxu0 0.0
    %1132 = vmatprep.subr.mxu0 0.0
    %1133 = vmatpush1.msra.mxu0 0.0
    %1134 = vmatprep.mubr.f32.mxu0 0.0
    %1135 = vmatmul.mubr.f32.gmra.mrb[0].mxu0 %v1062
    %v1136 = vpop.f32.mrb[0].mxu0
    %v1137 = vadd.f32 0.0, %v1136
    %v1138 = vpop.f32.mrb[0].mxu0
    %1139 = vmatprep.mubr.f32.mxu0 0.0
    %1140 = vmatmul.mubr.f32.gmra.mrb[0].mxu0 %v1065
    %v1141 = vpop.f32.mrb[0].mxu0
    %v1142 = vadd.f32 0.0, %v1141
    %v1143 = vpop.f32.mrb[0].mxu0
    %1144 = vmatprep.mubr.f32.mxu0 0.0
    %1145 = vmatmul.mubr.f32.gmra.mrb[0].mxu0 %v1068
    %v1146 = vpop.f32.mrb[0].mxu0
    %v1147 = vadd.f32 0.0, %v1146
    %v1148 = vpop.f32.mrb[0].mxu0
    %1149 = vdwg.mxu0
    %v1150 = vmul.f32 %v1137, %v728
    %v1151 = vmul.f32 %v1142, %v733
    %v1152 = vmul.f32 %v1147, %v738
    %v1153 = vadd.f32 %v1055, %v1150
    %v1154 = vadd.f32 %v1056, %v1151
    %v1155 = vadd.f32 %v1057, %v1152
    %v1156 = vlaneseq
    %v1157 = vshrl.u32 %v1156, 7
    %v1158 = vsub.s32 0, %v1157
    %v1159 = vrot.slane %v220, %v1158
    %v1161 = vsel %vm169, %v1153, 0
    %v1164 = vsel %vm169, %v1154, 0
    %v1167 = vsel %vm169, %v1155, 0
    %1169 = vmatprep.subr.mxu0 0.0
    %1170 = vmatpush1.msra.mxu0 %v205
    %1171 = vmatprep.subr.mxu0 0.0
    %1172 = vmatpush1.msra.mxu0 %v206
    %1173 = vmatprep.subr.mxu0 0.0
    %1174 = vmatpush1.msra.mxu0 %v207
    %1175 = vmatprep.subr.mxu0 0.0
    %1176 = vmatpush1.msra.mxu0 %v208
    %1177 = vmatprep.subr.mxu0 0.0
    %1178 = vmatpush1.msra.mxu0 0.0
    %1179 = vmatprep.subr.mxu0 0.0
    %1180 = vmatpush1.msra.mxu0 0.0
    %1181 = vmatprep.subr.mxu0 0.0
    %1182 = vmatpush1.msra.mxu0 0.0
    %1183 = vmatprep.subr.mxu0 0.0
    %1184 = vmatpush1.msra.mxu0 0.0
    %1185 = vmatprep.subr.mxu0 0.0
    %1186 = vmatpush1.msra.mxu0 0.0
    %1187 = vmatprep.subr.mxu0 0.0
    %1188 = vmatpush1.msra.mxu0 0.0
    %1189 = vmatprep.subr.mxu0 0.0
    %1190 = vmatpush1.msra.mxu0 0.0
    %1191 = vmatprep.subr.mxu0 0.0
    %1192 = vmatpush1.msra.mxu0 0.0
    %1193 = vmatprep.subr.mxu0 0.0
    %1194 = vmatpush1.msra.mxu0 0.0
    %1195 = vmatprep.subr.mxu0 0.0
    %1196 = vmatpush1.msra.mxu0 0.0
    %1197 = vmatprep.subr.mxu0 0.0
    %1198 = vmatpush1.msra.mxu0 0.0
    %1199 = vmatprep.subr.mxu0 0.0
    %1200 = vmatpush1.msra.mxu0 0.0
    %1201 = vmatprep.subr.mxu0 0.0
    %1202 = vmatpush1.msra.mxu0 0.0
    %1203 = vmatprep.subr.mxu0 0.0
    %1204 = vmatpush1.msra.mxu0 0.0
    %1205 = vmatprep.subr.mxu0 0.0
    %1206 = vmatpush1.msra.mxu0 0.0
    %1207 = vmatprep.subr.mxu0 0.0
    %1208 = vmatpush1.msra.mxu0 0.0
    %1209 = vmatprep.subr.mxu0 0.0
    %1210 = vmatpush1.msra.mxu0 0.0
    %1211 = vmatprep.subr.mxu0 0.0
    %1212 = vmatpush1.msra.mxu0 0.0
    %1213 = vmatprep.subr.mxu0 0.0
    %1214 = vmatpush1.msra.mxu0 0.0
    %1215 = vmatprep.subr.mxu0 0.0
    %1216 = vmatpush1.msra.mxu0 0.0
    %1217 = vmatprep.subr.mxu0 0.0
    %1218 = vmatpush1.msra.mxu0 0.0
    %1219 = vmatprep.subr.mxu0 0.0
    %1220 = vmatpush1.msra.mxu0 0.0
    %1221 = vmatprep.subr.mxu0 0.0
    %1222 = vmatpush1.msra.mxu0 0.0
    %1223 = vmatprep.subr.mxu0 0.0
    %1224 = vmatpush1.msra.mxu0 0.0
    %1225 = vmatprep.subr.mxu0 0.0
    %1226 = vmatpush1.msra.mxu0 0.0
    %1227 = vmatprep.subr.mxu0 0.0
    %1228 = vmatpush1.msra.mxu0 0.0
    %1229 = vmatprep.subr.mxu0 0.0
    %1230 = vmatpush1.msra.mxu0 0.0
    %1231 = vmatprep.subr.mxu0 0.0
    %1232 = vmatpush1.msra.mxu0 0.0
    %1233 = vmatprep.mubr.f32.mxu0 0.0
    %1234 = vmatmul.mubr.f32.gmra.mrb[0].mxu0 %v1161
    %v1235 = vpop.f32.mrb[0].mxu0
    %v1236 = vadd.f32 %v1159, %v1235
    %v1237 = vpop.f32.mrb[0].mxu0
    %1238 = vmatprep.mubr.f32.mxu0 0.0
    %1239 = vmatmul.mubr.f32.gmra.mrb[0].mxu0 %v1164
    %v1240 = vpop.f32.mrb[0].mxu0
    %v1241 = vadd.f32 %v1159, %v1240
    %v1242 = vpop.f32.mrb[0].mxu0
    %1243 = vmatprep.mubr.f32.mxu0 0.0
    %1244 = vmatmul.mubr.f32.gmra.mrb[0].mxu0 %v1167
    %v1245 = vpop.f32.mrb[0].mxu0
    %v1246 = vadd.f32 %v1159, %v1245
    %v1247 = vpop.f32.mrb[0].mxu0
    %1248 = vdwg.mxu0
    %v1249 = vadd.f32 %v187, %v1236
    %v1250 = vadd.f32 %v188, %v1241
    %v1251 = vadd.f32 %v189, %v1246
    %v1252 = vsel %vm169, %v1249, 0.0
    %1253 = vadd.xlane.f32.xlu0 %v1252
    %v1254 = vpop.xlane.xlu0 %1253
    %v1255 = vsel %vm169, %v1250, 0.0
    %1256 = vadd.xlane.f32.xlu0 %v1255
    %v1257 = vpop.xlane.xlu0 %1256
    %v1258 = vsel %vm169, %v1251, 0.0
    %1259 = vadd.xlane.f32.xlu0 %v1258
    %v1260 = vpop.xlane.xlu0 %1259
    %v1261 = vrcp.pop 32.0
    %v1262 = vmul.f32 %v1254, %v1261
    %v1263 = vmul.f32 %v1257, %v1261
    %v1264 = vmul.f32 %v1260, %v1261
    %v1265 = vsub.f32 %v1249, %v1262
    %v1266 = vsub.f32 %v1250, %v1263
    %v1267 = vsub.f32 %v1251, %v1264
    %v1268 = vmul.f32 %v1265, %v1265
    %v1269 = vmul.f32 %v1266, %v1266
    %v1270 = vmul.f32 %v1267, %v1267
    %v1271 = vsel %vm169, %v1268, 0.0
    %1272 = vadd.xlane.f32.xlu0 %v1271
    %v1273 = vpop.xlane.xlu0 %1272
    %v1274 = vsel %vm169, %v1269, 0.0
    %1275 = vadd.xlane.f32.xlu0 %v1274
    %v1276 = vpop.xlane.xlu0 %1275
    %v1277 = vsel %vm169, %v1270, 0.0
    %1278 = vadd.xlane.f32.xlu0 %v1277
    %v1279 = vpop.xlane.xlu0 %1278
    %v1280 = vmul.f32 %v1273, %v1261
    %v1281 = vmul.f32 %v1276, %v1261
    %v1282 = vmul.f32 %v1279, %v1261
    %v1283 = vadd.f32 %v1280, 1e-05
    %v1284 = vadd.f32 %v1281, 1e-05
    %v1285 = vadd.f32 %v1282, 1e-05
    %v1286 = vrsqrt.pop %v1283
    %v1287 = vrsqrt.pop %v1284
    %v1288 = vrsqrt.pop %v1285
    %v1289 = vmul.f32 %v1265, %v1286
    %v1290 = vmul.f32 %v1266, %v1287
    %v1291 = vmul.f32 %v1267, %v1288
    %v1292 = vlaneseq
    %v1293 = vshrl.u32 %v1292, 7
    %v1294 = vsub.s32 0, %v1293
    %v1295 = vrot.slane %v222, %v1294
    %v1296 = vmul.f32 %v1289, %v1295
    %v1297 = vmul.f32 %v1290, %v1295
    %v1298 = vmul.f32 %v1291, %v1295
    %v1299 = vlaneseq
    %v1300 = vshrl.u32 %v1299, 7
    %v1301 = vsub.s32 0, %v1300
    %v1302 = vrot.slane %v223, %v1301
    %v1303 = vadd.f32 %v1296, %v1302
    %v1304 = vadd.f32 %v1297, %v1302
    %v1305 = vadd.f32 %v1298, %v1302
    %v1306 = vlaneseq
    %v1307 = vshrl.u32 %v1306, 7
    %v1308 = vsub.s32 0, %v1307
    %v1309 = vrot.slane %v230, %v1308
    %v1311 = vsel %vm169, %v1303, 0
    %v1314 = vsel %vm169, %v1304, 0
    %v1317 = vsel %vm169, %v1305, 0
    %1319 = vmatprep.subr.mxu0 0.0
    %1320 = vmatpush1.msra.mxu0 %v226
    %1321 = vmatprep.subr.mxu0 0.0
    %1322 = vmatpush1.msra.mxu0 %v227
    %1323 = vmatprep.subr.mxu0 0.0
    %1324 = vmatpush1.msra.mxu0 %v228
    %1325 = vmatprep.subr.mxu0 0.0
    %1326 = vmatpush1.msra.mxu0 %v229
    %1327 = vmatprep.subr.mxu0 0.0
    %1328 = vmatpush1.msra.mxu0 0.0
    %1329 = vmatprep.subr.mxu0 0.0
    %1330 = vmatpush1.msra.mxu0 0.0
    %1331 = vmatprep.subr.mxu0 0.0
    %1332 = vmatpush1.msra.mxu0 0.0
    %1333 = vmatprep.subr.mxu0 0.0
    %1334 = vmatpush1.msra.mxu0 0.0
    %1335 = vmatprep.subr.mxu0 0.0
    %1336 = vmatpush1.msra.mxu0 0.0
    %1337 = vmatprep.subr.mxu0 0.0
    %1338 = vmatpush1.msra.mxu0 0.0
    %1339 = vmatprep.subr.mxu0 0.0
    %1340 = vmatpush1.msra.mxu0 0.0
    %1341 = vmatprep.subr.mxu0 0.0
    %1342 = vmatpush1.msra.mxu0 0.0
    %1343 = vmatprep.subr.mxu0 0.0
    %1344 = vmatpush1.msra.mxu0 0.0
    %1345 = vmatprep.subr.mxu0 0.0
    %1346 = vmatpush1.msra.mxu0 0.0
    %1347 = vmatprep.subr.mxu0 0.0
    %1348 = vmatpush1.msra.mxu0 0.0
    %1349 = vmatprep.subr.mxu0 0.0
    %1350 = vmatpush1.msra.mxu0 0.0
    %1351 = vmatprep.subr.mxu0 0.0
    %1352 = vmatpush1.msra.mxu0 0.0
    %1353 = vmatprep.subr.mxu0 0.0
    %1354 = vmatpush1.msra.mxu0 0.0
    %1355 = vmatprep.subr.mxu0 0.0
    %1356 = vmatpush1.msra.mxu0 0.0
    %1357 = vmatprep.subr.mxu0 0.0
    %1358 = vmatpush1.msra.mxu0 0.0
    %1359 = vmatprep.subr.mxu0 0.0
    %1360 = vmatpush1.msra.mxu0 0.0
    %1361 = vmatprep.subr.mxu0 0.0
    %1362 = vmatpush1.msra.mxu0 0.0
    %1363 = vmatprep.subr.mxu0 0.0
    %1364 = vmatpush1.msra.mxu0 0.0
    %1365 = vmatprep.subr.mxu0 0.0
    %1366 = vmatpush1.msra.mxu0 0.0
    %1367 = vmatprep.subr.mxu0 0.0
    %1368 = vmatpush1.msra.mxu0 0.0
    %1369 = vmatprep.subr.mxu0 0.0
    %1370 = vmatpush1.msra.mxu0 0.0
    %1371 = vmatprep.subr.mxu0 0.0
    %1372 = vmatpush1.msra.mxu0 0.0
    %1373 = vmatprep.subr.mxu0 0.0
    %1374 = vmatpush1.msra.mxu0 0.0
    %1375 = vmatprep.subr.mxu0 0.0
    %1376 = vmatpush1.msra.mxu0 0.0
    %1377 = vmatprep.subr.mxu0 0.0
    %1378 = vmatpush1.msra.mxu0 0.0
    %1379 = vmatprep.subr.mxu0 0.0
    %1380 = vmatpush1.msra.mxu0 0.0
    %1381 = vmatprep.subr.mxu0 0.0
    %1382 = vmatpush1.msra.mxu0 0.0
    %1383 = vmatprep.mubr.f32.mxu0 0.0
    %1384 = vmatmul.mubr.f32.gmra.mrb[0].mxu0 %v1311
    %v1385 = vpop.f32.mrb[0].mxu0
    %v1386 = vadd.f32 %v1309, %v1385
    %v1387 = vpop.f32.mrb[0].mxu0
    %1388 = vmatprep.mubr.f32.mxu0 0.0
    %1389 = vmatmul.mubr.f32.gmra.mrb[0].mxu0 %v1314
    %v1390 = vpop.f32.mrb[0].mxu0
    %v1391 = vadd.f32 %v1309, %v1390
    %v1392 = vpop.f32.mrb[0].mxu0
    %1393 = vmatprep.mubr.f32.mxu0 0.0
    %1394 = vmatmul.mubr.f32.gmra.mrb[0].mxu0 %v1317
    %v1395 = vpop.f32.mrb[0].mxu0
    %v1396 = vadd.f32 %v1309, %v1395
    %v1397 = vpop.f32.mrb[0].mxu0
    %1398 = vdwg.mxu0
    %v1399 = vmul.f32 %v1386, 0.5
    %v1400 = vmul.f32 %v1391, 0.5
    %v1401 = vmul.f32 %v1396, 0.5
    %v1402 = vmul.f32 %v1386, 0.70710677
    %v1403 = vmul.f32 %v1391, 0.70710677
    %v1404 = vmul.f32 %v1396, 0.70710677
    %vm1405 = vcmp.ge.f32.partialorder %v1402, 0.0
    %vm1406 = vcmp.ge.f32.partialorder %v1403, 0.0
    %vm1407 = vcmp.ge.f32.partialorder %v1404, 0.0
    %v1408 = vsel %vm1405, 1.0, -1.0
    %v1409 = vsel %vm1406, 1.0, -1.0
    %v1410 = vsel %vm1407, 1.0, -1.0
    %v1411 = vand.u32 2147483647, %v1402
    %v1412 = vand.u32 2147483647, %v1403
    %v1413 = vand.u32 2147483647, %v1404
    %v1414 = vmul.f32 %v1411, 0.3275911
    %v1415 = vmul.f32 %v1412, 0.3275911
    %v1416 = vmul.f32 %v1413, 0.3275911
    %v1417 = vadd.f32 %v1414, 1.0
    %v1418 = vadd.f32 %v1415, 1.0
    %v1419 = vadd.f32 %v1416, 1.0
    %v1420 = vrcp.pop %v1417
    %v1421 = vmul.f32 1.0, %v1420
    %v1422 = vrcp.pop %v1418
    %v1423 = vmul.f32 1.0, %v1422
    %v1424 = vrcp.pop %v1419
    %v1425 = vmul.f32 1.0, %v1424
    %v1426 = vmul.f32 %v1421, 1.0614054
    %v1427 = vmul.f32 %v1423, 1.0614054
    %v1428 = vmul.f32 %v1425, 1.0614054
    %v1429 = vadd.f32 %v1426, -1.4531521
    %v1430 = vadd.f32 %v1427, -1.4531521
    %v1431 = vadd.f32 %v1428, -1.4531521
    %v1432 = vmul.f32 %v1429, %v1421
    %v1433 = vmul.f32 %v1430, %v1423
    %v1434 = vmul.f32 %v1431, %v1425
    %v1435 = vadd.f32 %v1432, 1.4214138
    %v1436 = vadd.f32 %v1433, 1.4214138
    %v1437 = vadd.f32 %v1434, 1.4214138
    %v1438 = vmul.f32 %v1435, %v1421
    %v1439 = vmul.f32 %v1436, %v1423
    %v1440 = vmul.f32 %v1437, %v1425
    %v1441 = vadd.f32 %v1438, -0.28449672
    %v1442 = vadd.f32 %v1439, -0.28449672
    %v1443 = vadd.f32 %v1440, -0.28449672
    %v1444 = vmul.f32 %v1441, %v1421
    %v1445 = vmul.f32 %v1442, %v1423
    %v1446 = vmul.f32 %v1443, %v1425
    %v1447 = vadd.f32 %v1444, 0.2548296
    %v1448 = vadd.f32 %v1445, 0.2548296
    %v1449 = vadd.f32 %v1446, 0.2548296
    %v1450 = vmul.f32 %v1447, %v1421
    %v1451 = vmul.f32 %v1448, %v1423
    %v1452 = vmul.f32 %v1449, %v1425
    %v1453 = vsub.f32 0.0, %v1411
    %v1454 = vsub.f32 0.0, %v1412
    %v1455 = vsub.f32 0.0, %v1413
    %v1456 = vmul.f32 %v1453, %v1411
    %v1457 = vmul.f32 %v1454, %v1412
    %v1458 = vmul.f32 %v1455, %v1413
    %v1459 = vmul.f32 %v1456, 1.442695
    %v1460 = vpow.pop %v1459
    %v1461 = vmul.f32 %v1457, 1.442695
    %v1462 = vpow.pop %v1461
    %v1463 = vmul.f32 %v1458, 1.442695
    %v1464 = vpow.pop %v1463
    %v1465 = vmul.f32 %v1450, %v1460
    %v1466 = vmul.f32 %v1451, %v1462
    %v1467 = vmul.f32 %v1452, %v1464
    %v1468 = vsub.f32 1.0, %v1465
    %v1469 = vsub.f32 1.0, %v1466
    %v1470 = vsub.f32 1.0, %v1467
    %v1471 = vmul.f32 %v1408, %v1468
    %v1472 = vmul.f32 %v1409, %v1469
    %v1473 = vmul.f32 %v1410, %v1470
    %v1474 = vadd.f32 %v1471, 1.0
    %v1475 = vadd.f32 %v1472, 1.0
    %v1476 = vadd.f32 %v1473, 1.0
    %v1477 = vmul.f32 %v1399, %v1474
    %v1478 = vmul.f32 %v1400, %v1475
    %v1479 = vmul.f32 %v1401, %v1476
    %v1480 = vlaneseq
    %v1481 = vshrl.u32 %v1480, 7
    %v1482 = vsub.s32 0, %v1481
    %v1483 = vrot.slane %v221, %v1482
    %vm1484 = vcmask 523264
    %v1486 = vsel %vm1484, %v1477, 0
    %v1489 = vsel %vm1484, %v1478, 0
    %v1492 = vsel %vm1484, %v1479, 0
    %1494 = vmatprep.subr.mxu0 0.0
    %1495 = vmatpush1.msra.mxu0 %v209
    %1496 = vmatprep.subr.mxu0 0.0
    %1497 = vmatpush1.msra.mxu0 %v210
    %1498 = vmatprep.subr.mxu0 0.0
    %1499 = vmatpush1.msra.mxu0 %v211
    %1500 = vmatprep.subr.mxu0 0.0
    %1501 = vmatpush1.msra.mxu0 %v212
    %1502 = vmatprep.subr.mxu0 0.0
    %1503 = vmatpush1.msra.mxu0 %v213
    %1504 = vmatprep.subr.mxu0 0.0
    %1505 = vmatpush1.msra.mxu0 %v214
    %1506 = vmatprep.subr.mxu0 0.0
    %1507 = vmatpush1.msra.mxu0 %v215
    %1508 = vmatprep.subr.mxu0 0.0
    %1509 = vmatpush1.msra.mxu0 %v216
    %1510 = vmatprep.subr.mxu0 0.0
    %1511 = vmatpush1.msra.mxu0 0.0
    %1512 = vmatprep.subr.mxu0 0.0
    %1513 = vmatpush1.msra.mxu0 0.0
    %1514 = vmatprep.subr.mxu0 0.0
    %1515 = vmatpush1.msra.mxu0 0.0
    %1516 = vmatprep.subr.mxu0 0.0
    %1517 = vmatpush1.msra.mxu0 0.0
    %1518 = vmatprep.subr.mxu0 0.0
    %1519 = vmatpush1.msra.mxu0 0.0
    %1520 = vmatprep.subr.mxu0 0.0
    %1521 = vmatpush1.msra.mxu0 0.0
    %1522 = vmatprep.subr.mxu0 0.0
    %1523 = vmatpush1.msra.mxu0 0.0
    %1524 = vmatprep.subr.mxu0 0.0
    %1525 = vmatpush1.msra.mxu0 0.0
    %1526 = vmatprep.subr.mxu0 0.0
    %1527 = vmatpush1.msra.mxu0 0.0
    %1528 = vmatprep.subr.mxu0 0.0
    %1529 = vmatpush1.msra.mxu0 0.0
    %1530 = vmatprep.subr.mxu0 0.0
    %1531 = vmatpush1.msra.mxu0 0.0
    %1532 = vmatprep.subr.mxu0 0.0
    %1533 = vmatpush1.msra.mxu0 0.0
    %1534 = vmatprep.subr.mxu0 0.0
    %1535 = vmatpush1.msra.mxu0 0.0
    %1536 = vmatprep.subr.mxu0 0.0
    %1537 = vmatpush1.msra.mxu0 0.0
    %1538 = vmatprep.subr.mxu0 0.0
    %1539 = vmatpush1.msra.mxu0 0.0
    %1540 = vmatprep.subr.mxu0 0.0
    %1541 = vmatpush1.msra.mxu0 0.0
    %1542 = vmatprep.subr.mxu0 0.0
    %1543 = vmatpush1.msra.mxu0 0.0
    %1544 = vmatprep.subr.mxu0 0.0
    %1545 = vmatpush1.msra.mxu0 0.0
    %1546 = vmatprep.subr.mxu0 0.0
    %1547 = vmatpush1.msra.mxu0 0.0
    %1548 = vmatprep.subr.mxu0 0.0
    %1549 = vmatpush1.msra.mxu0 0.0
    %1550 = vmatprep.subr.mxu0 0.0
    %1551 = vmatpush1.msra.mxu0 0.0
    %1552 = vmatprep.subr.mxu0 0.0
    %1553 = vmatpush1.msra.mxu0 0.0
    %1554 = vmatprep.subr.mxu0 0.0
    %1555 = vmatpush1.msra.mxu0 0.0
    %1556 = vmatprep.subr.mxu0 0.0
    %1557 = vmatpush1.msra.mxu0 0.0
    %1558 = vmatprep.mubr.f32.mxu0 0.0
    %1559 = vmatmul.mubr.f32.gmra.mrb[0].mxu0 %v1486
    %v1560 = vpop.f32.mrb[0].mxu0
    %v1561 = vadd.f32 %v1483, %v1560
    %v1562 = vpop.f32.mrb[0].mxu0
    %1563 = vmatprep.mubr.f32.mxu0 0.0
    %1564 = vmatmul.mubr.f32.gmra.mrb[0].mxu0 %v1489
    %v1565 = vpop.f32.mrb[0].mxu0
    %v1566 = vadd.f32 %v1483, %v1565
    %v1567 = vpop.f32.mrb[0].mxu0
    %1568 = vmatprep.mubr.f32.mxu0 0.0
    %1569 = vmatmul.mubr.f32.gmra.mrb[0].mxu0 %v1492
    %v1570 = vpop.f32.mrb[0].mxu0
    %v1571 = vadd.f32 %v1483, %v1570
    %v1572 = vpop.f32.mrb[0].mxu0
    %1573 = vdwg.mxu0
    %v1574 = vadd.f32 %v1303, %v1561
    %v1575 = vadd.f32 %v1304, %v1566
    %v1576 = vadd.f32 %v1305, %v1571
    %v1577 = vsel %vm169, %v1574, 0.0
    %1578 = vadd.xlane.f32.xlu0 %v1577
    %v1579 = vpop.xlane.xlu0 %1578
    %v1580 = vsel %vm169, %v1575, 0.0
    %1581 = vadd.xlane.f32.xlu0 %v1580
    %v1582 = vpop.xlane.xlu0 %1581
    %v1583 = vsel %vm169, %v1576, 0.0
    %1584 = vadd.xlane.f32.xlu0 %v1583
    %v1585 = vpop.xlane.xlu0 %1584
    %v1586 = vmul.f32 %v1579, %v1261
    %v1587 = vmul.f32 %v1582, %v1261
    %v1588 = vmul.f32 %v1585, %v1261
    %v1589 = vsub.f32 %v1574, %v1586
    %v1590 = vsub.f32 %v1575, %v1587
    %v1591 = vsub.f32 %v1576, %v1588
    %v1592 = vmul.f32 %v1589, %v1589
    %v1593 = vmul.f32 %v1590, %v1590
    %v1594 = vmul.f32 %v1591, %v1591
    %v1595 = vsel %vm169, %v1592, 0.0
    %1596 = vadd.xlane.f32.xlu0 %v1595
    %v1597 = vpop.xlane.xlu0 %1596
    %v1598 = vsel %vm169, %v1593, 0.0
    %1599 = vadd.xlane.f32.xlu0 %v1598
    %v1600 = vpop.xlane.xlu0 %1599
    %v1601 = vsel %vm169, %v1594, 0.0
    %1602 = vadd.xlane.f32.xlu0 %v1601
    %v1603 = vpop.xlane.xlu0 %1602
    %v1604 = vmul.f32 %v1597, %v1261
    %v1605 = vmul.f32 %v1600, %v1261
    %v1606 = vmul.f32 %v1603, %v1261
    %v1607 = vadd.f32 %v1604, 1e-05
    %v1608 = vadd.f32 %v1605, 1e-05
    %v1609 = vadd.f32 %v1606, 1e-05
    %v1610 = vrsqrt.pop %v1607
    %v1611 = vrsqrt.pop %v1608
    %v1612 = vrsqrt.pop %v1609
    %v1613 = vmul.f32 %v1589, %v1610
    %v1614 = vmul.f32 %v1590, %v1611
    %v1615 = vmul.f32 %v1591, %v1612
    %v1616 = vlaneseq
    %v1617 = vshrl.u32 %v1616, 7
    %v1618 = vsub.s32 0, %v1617
    %v1619 = vrot.slane %v224, %v1618
    %v1620 = vmul.f32 %v1613, %v1619
    %v1621 = vmul.f32 %v1614, %v1619
    %v1622 = vmul.f32 %v1615, %v1619
    %v1623 = vlaneseq
    %v1624 = vshrl.u32 %v1623, 7
    %v1625 = vsub.s32 0, %v1624
    %v1626 = vrot.slane %v225, %v1625
    %v1627 = vadd.f32 %v1620, %v1626
    %v1628 = vadd.f32 %v1621, %v1626
    %v1629 = vadd.f32 %v1622, %v1626
    %v1630 = vmul.f32 %v400, %v484
    %v1631 = vmul.f32 %v405, %v489
    %v1632 = vmul.f32 %v410, %v494
    %v1634 = vsel %vm169, %v1630, 0
    %v1637 = vsel %vm169, %v1631, 0
    %v1640 = vsel %vm169, %v1632, 0
    %1642 = vmatprep.subr.mxu0 0.0
    %1643 = vmatpush1.msra.mxu0 %v40
    %1644 = vmatprep.subr.mxu0 0.0
    %1645 = vmatpush1.msra.mxu0 %v41
    %1646 = vmatprep.subr.mxu0 0.0
    %1647 = vmatpush1.msra.mxu0 %v42
    %1648 = vmatprep.subr.mxu0 0.0
    %1649 = vmatpush1.msra.mxu0 %v43
    %1650 = vmatprep.subr.mxu0 0.0
    %1651 = vmatpush1.msra.mxu0 0.0
    %1652 = vmatprep.subr.mxu0 0.0
    %1653 = vmatpush1.msra.mxu0 0.0
    %1654 = vmatprep.subr.mxu0 0.0
    %1655 = vmatpush1.msra.mxu0 0.0
    %1656 = vmatprep.subr.mxu0 0.0
    %1657 = vmatpush1.msra.mxu0 0.0
    %1658 = vmatprep.subr.mxu0 0.0
    %1659 = vmatpush1.msra.mxu0 0.0
    %1660 = vmatprep.subr.mxu0 0.0
    %1661 = vmatpush1.msra.mxu0 0.0
    %1662 = vmatprep.subr.mxu0 0.0
    %1663 = vmatpush1.msra.mxu0 0.0
    %1664 = vmatprep.subr.mxu0 0.0
    %1665 = vmatpush1.msra.mxu0 0.0
    %1666 = vmatprep.subr.mxu0 0.0
    %1667 = vmatpush1.msra.mxu0 0.0
    %1668 = vmatprep.subr.mxu0 0.0
    %1669 = vmatpush1.msra.mxu0 0.0
    %1670 = vmatprep.subr.mxu0 0.0
    %1671 = vmatpush1.msra.mxu0 0.0
    %1672 = vmatprep.subr.mxu0 0.0
    %1673 = vmatpush1.msra.mxu0 0.0
    %1674 = vmatprep.subr.mxu0 0.0
    %1675 = vmatpush1.msra.mxu0 0.0
    %1676 = vmatprep.subr.mxu0 0.0
    %1677 = vmatpush1.msra.mxu0 0.0
    %1678 = vmatprep.subr.mxu0 0.0
    %1679 = vmatpush1.msra.mxu0 0.0
    %1680 = vmatprep.subr.mxu0 0.0
    %1681 = vmatpush1.msra.mxu0 0.0
    %1682 = vmatprep.subr.mxu0 0.0
    %1683 = vmatpush1.msra.mxu0 0.0
    %1684 = vmatprep.subr.mxu0 0.0
    %1685 = vmatpush1.msra.mxu0 0.0
    %1686 = vmatprep.subr.mxu0 0.0
    %1687 = vmatpush1.msra.mxu0 0.0
    %1688 = vmatprep.subr.mxu0 0.0
    %1689 = vmatpush1.msra.mxu0 0.0
    %1690 = vmatprep.subr.mxu0 0.0
    %1691 = vmatpush1.msra.mxu0 0.0
    %1692 = vmatprep.subr.mxu0 0.0
    %1693 = vmatpush1.msra.mxu0 0.0
    %1694 = vmatprep.subr.mxu0 0.0
    %1695 = vmatpush1.msra.mxu0 0.0
    %1696 = vmatprep.subr.mxu0 0.0
    %1697 = vmatpush1.msra.mxu0 0.0
    %1698 = vmatprep.subr.mxu0 0.0
    %1699 = vmatpush1.msra.mxu0 0.0
    %1700 = vmatprep.subr.mxu0 0.0
    %1701 = vmatpush1.msra.mxu0 0.0
    %1702 = vmatprep.subr.mxu0 0.0
    %1703 = vmatpush1.msra.mxu0 0.0
    %1704 = vmatprep.subr.mxu0 0.0
    %1705 = vmatpush1.msra.mxu0 0.0
    %1706 = vmatprep.mubr.f32.mxu0 0.0
    %1707 = vmatmul.mubr.f32.gmra.mrb[0].mxu0 %v1634
    %v1708 = vpop.f32.mrb[0].mxu0
    %v1709 = vadd.f32 0.0, %v1708
    %v1710 = vpop.f32.mrb[0].mxu0
    %1711 = vmatprep.mubr.f32.mxu0 0.0
    %1712 = vmatmul.mubr.f32.gmra.mrb[0].mxu0 %v1637
    %v1713 = vpop.f32.mrb[0].mxu0
    %v1714 = vadd.f32 0.0, %v1713
    %v1715 = vpop.f32.mrb[0].mxu0
    %1716 = vmatprep.mubr.f32.mxu0 0.0
    %1717 = vmatmul.mubr.f32.gmra.mrb[0].mxu0 %v1640
    %v1718 = vpop.f32.mrb[0].mxu0
    %v1719 = vadd.f32 0.0, %v1718
    %v1720 = vpop.f32.mrb[0].mxu0
    %1721 = vdwg.mxu0
    %v1722 = vmul.f32 %v1709, 0.35355338
    %v1723 = vmul.f32 %v1714, 0.35355338
    %v1724 = vmul.f32 %v1719, 0.35355338
    %v1725 = vmul.f32 %v400, %v564
    %v1726 = vmul.f32 %v405, %v569
    %v1727 = vmul.f32 %v410, %v574
    %v1729 = vsel %vm169, %v1725, 0
    %v1732 = vsel %vm169, %v1726, 0
    %v1735 = vsel %vm169, %v1727, 0
    %1737 = vmatprep.subr.mxu0 0.0
    %1738 = vmatpush1.msra.mxu0 %v40
    %1739 = vmatprep.subr.mxu0 0.0
    %1740 = vmatpush1.msra.mxu0 %v41
    %1741 = vmatprep.subr.mxu0 0.0
    %1742 = vmatpush1.msra.mxu0 %v42
    %1743 = vmatprep.subr.mxu0 0.0
    %1744 = vmatpush1.msra.mxu0 %v43
    %1745 = vmatprep.subr.mxu0 0.0
    %1746 = vmatpush1.msra.mxu0 0.0
    %1747 = vmatprep.subr.mxu0 0.0
    %1748 = vmatpush1.msra.mxu0 0.0
    %1749 = vmatprep.subr.mxu0 0.0
    %1750 = vmatpush1.msra.mxu0 0.0
    %1751 = vmatprep.subr.mxu0 0.0
    %1752 = vmatpush1.msra.mxu0 0.0
    %1753 = vmatprep.subr.mxu0 0.0
    %1754 = vmatpush1.msra.mxu0 0.0
    %1755 = vmatprep.subr.mxu0 0.0
    %1756 = vmatpush1.msra.mxu0 0.0
    %1757 = vmatprep.subr.mxu0 0.0
    %1758 = vmatpush1.msra.mxu0 0.0
    %1759 = vmatprep.subr.mxu0 0.0
    %1760 = vmatpush1.msra.mxu0 0.0
    %1761 = vmatprep.subr.mxu0 0.0
    %1762 = vmatpush1.msra.mxu0 0.0
    %1763 = vmatprep.subr.mxu0 0.0
    %1764 = vmatpush1.msra.mxu0 0.0
    %1765 = vmatprep.subr.mxu0 0.0
    %1766 = vmatpush1.msra.mxu0 0.0
    %1767 = vmatprep.subr.mxu0 0.0
    %1768 = vmatpush1.msra.mxu0 0.0
    %1769 = vmatprep.subr.mxu0 0.0
    %1770 = vmatpush1.msra.mxu0 0.0
    %1771 = vmatprep.subr.mxu0 0.0
    %1772 = vmatpush1.msra.mxu0 0.0
    %1773 = vmatprep.subr.mxu0 0.0
    %1774 = vmatpush1.msra.mxu0 0.0
    %1775 = vmatprep.subr.mxu0 0.0
    %1776 = vmatpush1.msra.mxu0 0.0
    %1777 = vmatprep.subr.mxu0 0.0
    %1778 = vmatpush1.msra.mxu0 0.0
    %1779 = vmatprep.subr.mxu0 0.0
    %1780 = vmatpush1.msra.mxu0 0.0
    %1781 = vmatprep.subr.mxu0 0.0
    %1782 = vmatpush1.msra.mxu0 0.0
    %1783 = vmatprep.subr.mxu0 0.0
    %1784 = vmatpush1.msra.mxu0 0.0
    %1785 = vmatprep.subr.mxu0 0.0
    %1786 = vmatpush1.msra.mxu0 0.0
    %1787 = vmatprep.subr.mxu0 0.0
    %1788 = vmatpush1.msra.mxu0 0.0
    %1789 = vmatprep.subr.mxu0 0.0
    %1790 = vmatpush1.msra.mxu0 0.0
    %1791 = vmatprep.subr.mxu0 0.0
    %1792 = vmatpush1.msra.mxu0 0.0
    %1793 = vmatprep.subr.mxu0 0.0
    %1794 = vmatpush1.msra.mxu0 0.0
    %1795 = vmatprep.subr.mxu0 0.0
    %1796 = vmatpush1.msra.mxu0 0.0
    %1797 = vmatprep.subr.mxu0 0.0
    %1798 = vmatpush1.msra.mxu0 0.0
    %1799 = vmatprep.subr.mxu0 0.0
    %1800 = vmatpush1.msra.mxu0 0.0
    %1801 = vmatprep.mubr.f32.mxu0 0.0
    %1802 = vmatmul.mubr.f32.gmra.mrb[0].mxu0 %v1729
    %v1803 = vpop.f32.mrb[0].mxu0
    %v1804 = vadd.f32 0.0, %v1803
    %v1805 = vpop.f32.mrb[0].mxu0
    %1806 = vmatprep.mubr.f32.mxu0 0.0
    %1807 = vmatmul.mubr.f32.gmra.mrb[0].mxu0 %v1732
    %v1808 = vpop.f32.mrb[0].mxu0
    %v1809 = vadd.f32 0.0, %v1808
    %v1810 = vpop.f32.mrb[0].mxu0
    %1811 = vmatprep.mubr.f32.mxu0 0.0
    %1812 = vmatmul.mubr.f32.gmra.mrb[0].mxu0 %v1735
    %v1813 = vpop.f32.mrb[0].mxu0
    %v1814 = vadd.f32 0.0, %v1813
    %v1815 = vpop.f32.mrb[0].mxu0
    %1816 = vdwg.mxu0
    %v1817 = vmul.f32 %v1804, 0.35355338
    %v1818 = vmul.f32 %v1809, 0.35355338
    %v1819 = vmul.f32 %v1814, 0.35355338
    %v1820 = vmax.f32 %v1722, %v1817
    %v1821 = vmax.f32 %v1723, %v1818
    %v1822 = vmax.f32 %v1724, %v1819
    %v1823 = vsub.f32 %v1722, %v1820
    %v1824 = vsub.f32 %v1723, %v1821
    %v1825 = vsub.f32 %v1724, %v1822
    %v1826 = vmul.f32 %v1823, 1.442695
    %v1827 = vpow.pop %v1826
    %v1828 = vmul.f32 %v1824, 1.442695
    %v1829 = vpow.pop %v1828
    %v1830 = vmul.f32 %v1825, 1.442695
    %v1831 = vpow.pop %v1830
    %v1832 = vsub.f32 %v1817, %v1820
    %v1833 = vsub.f32 %v1818, %v1821
    %v1834 = vsub.f32 %v1819, %v1822
    %v1835 = vmul.f32 %v1832, 1.442695
    %v1836 = vpow.pop %v1835
    %v1837 = vmul.f32 %v1833, 1.442695
    %v1838 = vpow.pop %v1837
    %v1839 = vmul.f32 %v1834, 1.442695
    %v1840 = vpow.pop %v1839
    %v1841 = vadd.f32 %v1827, %v1836
    %v1842 = vadd.f32 %v1829, %v1838
    %v1843 = vadd.f32 %v1831, %v1840
    %v1844 = vrcp.pop %v1841
    %v1845 = vrcp.pop %v1842
    %v1846 = vrcp.pop %v1843
    %v1847 = vmul.f32 %v1827, %v1844
    %v1848 = vmul.f32 %v1829, %v1845
    %v1849 = vmul.f32 %v1831, %v1846
    %v1851 = vsel %vm961, %v1847, 0
    %v1854 = vsel %vm961, %v1848, 0
    %v1857 = vsel %vm961, %v1849, 0
    %1859 = vmatprep.subr.mxu0 0.0
    %1860 = vmatpush1.msra.mxu0 %v973
    %1861 = vmatprep.subr.mxu0 0.0
    %1862 = vmatpush1.msra.mxu0 0.0
    %1863 = vmatprep.subr.mxu0 0.0
    %1864 = vmatpush1.msra.mxu0 0.0
    %1865 = vmatprep.subr.mxu0 0.0
    %1866 = vmatpush1.msra.mxu0 0.0
    %1867 = vmatprep.subr.mxu0 0.0
    %1868 = vmatpush1.msra.mxu0 0.0
    %1869 = vmatprep.subr.mxu0 0.0
    %1870 = vmatpush1.msra.mxu0 0.0
    %1871 = vmatprep.subr.mxu0 0.0
    %1872 = vmatpush1.msra.mxu0 0.0
    %1873 = vmatprep.subr.mxu0 0.0
    %1874 = vmatpush1.msra.mxu0 0.0
    %1875 = vmatprep.subr.mxu0 0.0
    %1876 = vmatpush1.msra.mxu0 0.0
    %1877 = vmatprep.subr.mxu0 0.0
    %1878 = vmatpush1.msra.mxu0 0.0
    %1879 = vmatprep.subr.mxu0 0.0
    %1880 = vmatpush1.msra.mxu0 0.0
    %1881 = vmatprep.subr.mxu0 0.0
    %1882 = vmatpush1.msra.mxu0 0.0
    %1883 = vmatprep.subr.mxu0 0.0
    %1884 = vmatpush1.msra.mxu0 0.0
    %1885 = vmatprep.subr.mxu0 0.0
    %1886 = vmatpush1.msra.mxu0 0.0
    %1887 = vmatprep.subr.mxu0 0.0
    %1888 = vmatpush1.msra.mxu0 0.0
    %1889 = vmatprep.subr.mxu0 0.0
    %1890 = vmatpush1.msra.mxu0 0.0
    %1891 = vmatprep.subr.mxu0 0.0
    %1892 = vmatpush1.msra.mxu0 0.0
    %1893 = vmatprep.subr.mxu0 0.0
    %1894 = vmatpush1.msra.mxu0 0.0
    %1895 = vmatprep.subr.mxu0 0.0
    %1896 = vmatpush1.msra.mxu0 0.0
    %1897 = vmatprep.subr.mxu0 0.0
    %1898 = vmatpush1.msra.mxu0 0.0
    %1899 = vmatprep.subr.mxu0 0.0
    %1900 = vmatpush1.msra.mxu0 0.0
    %1901 = vmatprep.subr.mxu0 0.0
    %1902 = vmatpush1.msra.mxu0 0.0
    %1903 = vmatprep.subr.mxu0 0.0
    %1904 = vmatpush1.msra.mxu0 0.0
    %1905 = vmatprep.subr.mxu0 0.0
    %1906 = vmatpush1.msra.mxu0 0.0
    %1907 = vmatprep.subr.mxu0 0.0
    %1908 = vmatpush1.msra.mxu0 0.0
    %1909 = vmatprep.subr.mxu0 0.0
    %1910 = vmatpush1.msra.mxu0 0.0
    %1911 = vmatprep.subr.mxu0 0.0
    %1912 = vmatpush1.msra.mxu0 0.0
    %1913 = vmatprep.subr.mxu0 0.0
    %1914 = vmatpush1.msra.mxu0 0.0
    %1915 = vmatprep.subr.mxu0 0.0
    %1916 = vmatpush1.msra.mxu0 0.0
    %1917 = vmatprep.subr.mxu0 0.0
    %1918 = vmatpush1.msra.mxu0 0.0
    %1919 = vmatprep.subr.mxu0 0.0
    %1920 = vmatpush1.msra.mxu0 0.0
    %1921 = vmatprep.subr.mxu0 0.0
    %1922 = vmatpush1.msra.mxu0 0.0
    %1923 = vmatprep.mubr.f32.mxu0 0.0
    %1924 = vmatmul.mubr.f32.gmra.mrb[0].mxu0 %v1851
    %v1925 = vpop.f32.mrb[0].mxu0
    %v1926 = vadd.f32 0.0, %v1925
    %v1927 = vpop.f32.mrb[0].mxu0
    %1928 = vmatprep.mubr.f32.mxu0 0.0
    %1929 = vmatmul.mubr.f32.gmra.mrb[0].mxu0 %v1854
    %v1930 = vpop.f32.mrb[0].mxu0
    %v1931 = vadd.f32 0.0, %v1930
    %v1932 = vpop.f32.mrb[0].mxu0
    %1933 = vmatprep.mubr.f32.mxu0 0.0
    %1934 = vmatmul.mubr.f32.gmra.mrb[0].mxu0 %v1857
    %v1935 = vpop.f32.mrb[0].mxu0
    %v1936 = vadd.f32 0.0, %v1935
    %v1937 = vpop.f32.mrb[0].mxu0
    %1938 = vdwg.mxu0
    %v1939 = vmul.f32 %v1926, %v648
    %v1940 = vmul.f32 %v1931, %v653
    %v1941 = vmul.f32 %v1936, %v658
    %v1942 = vmul.f32 %v1836, %v1844
    %v1943 = vmul.f32 %v1838, %v1845
    %v1944 = vmul.f32 %v1840, %v1846
    %v1946 = vsel %vm961, %v1942, 0
    %v1949 = vsel %vm961, %v1943, 0
    %v1952 = vsel %vm961, %v1944, 0
    %1954 = vmatprep.subr.mxu0 0.0
    %1955 = vmatpush1.msra.mxu0 %v973
    %1956 = vmatprep.subr.mxu0 0.0
    %1957 = vmatpush1.msra.mxu0 0.0
    %1958 = vmatprep.subr.mxu0 0.0
    %1959 = vmatpush1.msra.mxu0 0.0
    %1960 = vmatprep.subr.mxu0 0.0
    %1961 = vmatpush1.msra.mxu0 0.0
    %1962 = vmatprep.subr.mxu0 0.0
    %1963 = vmatpush1.msra.mxu0 0.0
    %1964 = vmatprep.subr.mxu0 0.0
    %1965 = vmatpush1.msra.mxu0 0.0
    %1966 = vmatprep.subr.mxu0 0.0
    %1967 = vmatpush1.msra.mxu0 0.0
    %1968 = vmatprep.subr.mxu0 0.0
    %1969 = vmatpush1.msra.mxu0 0.0
    %1970 = vmatprep.subr.mxu0 0.0
    %1971 = vmatpush1.msra.mxu0 0.0
    %1972 = vmatprep.subr.mxu0 0.0
    %1973 = vmatpush1.msra.mxu0 0.0
    %1974 = vmatprep.subr.mxu0 0.0
    %1975 = vmatpush1.msra.mxu0 0.0
    %1976 = vmatprep.subr.mxu0 0.0
    %1977 = vmatpush1.msra.mxu0 0.0
    %1978 = vmatprep.subr.mxu0 0.0
    %1979 = vmatpush1.msra.mxu0 0.0
    %1980 = vmatprep.subr.mxu0 0.0
    %1981 = vmatpush1.msra.mxu0 0.0
    %1982 = vmatprep.subr.mxu0 0.0
    %1983 = vmatpush1.msra.mxu0 0.0
    %1984 = vmatprep.subr.mxu0 0.0
    %1985 = vmatpush1.msra.mxu0 0.0
    %1986 = vmatprep.subr.mxu0 0.0
    %1987 = vmatpush1.msra.mxu0 0.0
    %1988 = vmatprep.subr.mxu0 0.0
    %1989 = vmatpush1.msra.mxu0 0.0
    %1990 = vmatprep.subr.mxu0 0.0
    %1991 = vmatpush1.msra.mxu0 0.0
    %1992 = vmatprep.subr.mxu0 0.0
    %1993 = vmatpush1.msra.mxu0 0.0
    %1994 = vmatprep.subr.mxu0 0.0
    %1995 = vmatpush1.msra.mxu0 0.0
    %1996 = vmatprep.subr.mxu0 0.0
    %1997 = vmatpush1.msra.mxu0 0.0
    %1998 = vmatprep.subr.mxu0 0.0
    %1999 = vmatpush1.msra.mxu0 0.0
    %2000 = vmatprep.subr.mxu0 0.0
    %2001 = vmatpush1.msra.mxu0 0.0
    %2002 = vmatprep.subr.mxu0 0.0
    %2003 = vmatpush1.msra.mxu0 0.0
    %2004 = vmatprep.subr.mxu0 0.0
    %2005 = vmatpush1.msra.mxu0 0.0
    %2006 = vmatprep.subr.mxu0 0.0
    %2007 = vmatpush1.msra.mxu0 0.0
    %2008 = vmatprep.subr.mxu0 0.0
    %2009 = vmatpush1.msra.mxu0 0.0
    %2010 = vmatprep.subr.mxu0 0.0
    %2011 = vmatpush1.msra.mxu0 0.0
    %2012 = vmatprep.subr.mxu0 0.0
    %2013 = vmatpush1.msra.mxu0 0.0
    %2014 = vmatprep.subr.mxu0 0.0
    %2015 = vmatpush1.msra.mxu0 0.0
    %2016 = vmatprep.subr.mxu0 0.0
    %2017 = vmatpush1.msra.mxu0 0.0
    %2018 = vmatprep.mubr.f32.mxu0 0.0
    %2019 = vmatmul.mubr.f32.gmra.mrb[0].mxu0 %v1946
    %v2020 = vpop.f32.mrb[0].mxu0
    %v2021 = vadd.f32 0.0, %v2020
    %v2022 = vpop.f32.mrb[0].mxu0
    %2023 = vmatprep.mubr.f32.mxu0 0.0
    %2024 = vmatmul.mubr.f32.gmra.mrb[0].mxu0 %v1949
    %v2025 = vpop.f32.mrb[0].mxu0
    %v2026 = vadd.f32 0.0, %v2025
    %v2027 = vpop.f32.mrb[0].mxu0
    %2028 = vmatprep.mubr.f32.mxu0 0.0
    %2029 = vmatmul.mubr.f32.gmra.mrb[0].mxu0 %v1952
    %v2030 = vpop.f32.mrb[0].mxu0
    %v2031 = vadd.f32 0.0, %v2030
    %v2032 = vpop.f32.mrb[0].mxu0
    %2033 = vdwg.mxu0
    %v2034 = vmul.f32 %v2021, %v728
    %v2035 = vmul.f32 %v2026, %v733
    %v2036 = vmul.f32 %v2031, %v738
    %v2037 = vadd.f32 %v1939, %v2034
    %v2038 = vadd.f32 %v1940, %v2035
    %v2039 = vadd.f32 %v1941, %v2036
    %v2041 = vsel %vm169, %v2037, 0
    %v2044 = vsel %vm169, %v2038, 0
    %v2047 = vsel %vm169, %v2039, 0
    %2049 = vmatprep.subr.mxu0 0.0
    %2050 = vmatpush1.msra.mxu0 %v205
    %2051 = vmatprep.subr.mxu0 0.0
    %2052 = vmatpush1.msra.mxu0 %v206
    %2053 = vmatprep.subr.mxu0 0.0
    %2054 = vmatpush1.msra.mxu0 %v207
    %2055 = vmatprep.subr.mxu0 0.0
    %2056 = vmatpush1.msra.mxu0 %v208
    %2057 = vmatprep.subr.mxu0 0.0
    %2058 = vmatpush1.msra.mxu0 0.0
    %2059 = vmatprep.subr.mxu0 0.0
    %2060 = vmatpush1.msra.mxu0 0.0
    %2061 = vmatprep.subr.mxu0 0.0
    %2062 = vmatpush1.msra.mxu0 0.0
    %2063 = vmatprep.subr.mxu0 0.0
    %2064 = vmatpush1.msra.mxu0 0.0
    %2065 = vmatprep.subr.mxu0 0.0
    %2066 = vmatpush1.msra.mxu0 0.0
    %2067 = vmatprep.subr.mxu0 0.0
    %2068 = vmatpush1.msra.mxu0 0.0
    %2069 = vmatprep.subr.mxu0 0.0
    %2070 = vmatpush1.msra.mxu0 0.0
    %2071 = vmatprep.subr.mxu0 0.0
    %2072 = vmatpush1.msra.mxu0 0.0
    %2073 = vmatprep.subr.mxu0 0.0
    %2074 = vmatpush1.msra.mxu0 0.0
    %2075 = vmatprep.subr.mxu0 0.0
    %2076 = vmatpush1.msra.mxu0 0.0
    %2077 = vmatprep.subr.mxu0 0.0
    %2078 = vmatpush1.msra.mxu0 0.0
    %2079 = vmatprep.subr.mxu0 0.0
    %2080 = vmatpush1.msra.mxu0 0.0
    %2081 = vmatprep.subr.mxu0 0.0
    %2082 = vmatpush1.msra.mxu0 0.0
    %2083 = vmatprep.subr.mxu0 0.0
    %2084 = vmatpush1.msra.mxu0 0.0
    %2085 = vmatprep.subr.mxu0 0.0
    %2086 = vmatpush1.msra.mxu0 0.0
    %2087 = vmatprep.subr.mxu0 0.0
    %2088 = vmatpush1.msra.mxu0 0.0
    %2089 = vmatprep.subr.mxu0 0.0
    %2090 = vmatpush1.msra.mxu0 0.0
    %2091 = vmatprep.subr.mxu0 0.0
    %2092 = vmatpush1.msra.mxu0 0.0
    %2093 = vmatprep.subr.mxu0 0.0
    %2094 = vmatpush1.msra.mxu0 0.0
    %2095 = vmatprep.subr.mxu0 0.0
    %2096 = vmatpush1.msra.mxu0 0.0
    %2097 = vmatprep.subr.mxu0 0.0
    %2098 = vmatpush1.msra.mxu0 0.0
    %2099 = vmatprep.subr.mxu0 0.0
    %2100 = vmatpush1.msra.mxu0 0.0
    %2101 = vmatprep.subr.mxu0 0.0
    %2102 = vmatpush1.msra.mxu0 0.0
    %2103 = vmatprep.subr.mxu0 0.0
    %2104 = vmatpush1.msra.mxu0 0.0
    %2105 = vmatprep.subr.mxu0 0.0
    %2106 = vmatpush1.msra.mxu0 0.0
    %2107 = vmatprep.subr.mxu0 0.0
    %2108 = vmatpush1.msra.mxu0 0.0
    %2109 = vmatprep.subr.mxu0 0.0
    %2110 = vmatpush1.msra.mxu0 0.0
    %2111 = vmatprep.subr.mxu0 0.0
    %2112 = vmatpush1.msra.mxu0 0.0
    %2113 = vmatprep.mubr.f32.mxu0 0.0
    %2114 = vmatmul.mubr.f32.gmra.mrb[0].mxu0 %v2041
    %v2115 = vpop.f32.mrb[0].mxu0
    %v2116 = vadd.f32 %v1159, %v2115
    %v2117 = vpop.f32.mrb[0].mxu0
    %2118 = vmatprep.mubr.f32.mxu0 0.0
    %2119 = vmatmul.mubr.f32.gmra.mrb[0].mxu0 %v2044
    %v2120 = vpop.f32.mrb[0].mxu0
    %v2121 = vadd.f32 %v1159, %v2120
    %v2122 = vpop.f32.mrb[0].mxu0
    %2123 = vmatprep.mubr.f32.mxu0 0.0
    %2124 = vmatmul.mubr.f32.gmra.mrb[0].mxu0 %v2047
    %v2125 = vpop.f32.mrb[0].mxu0
    %v2126 = vadd.f32 %v1159, %v2125
    %v2127 = vpop.f32.mrb[0].mxu0
    %2128 = vdwg.mxu0
    %v2129 = vadd.f32 %v190, %v2116
    %v2130 = vadd.f32 %v191, %v2121
    %v2131 = vadd.f32 %v192, %v2126
    %v2132 = vsel %vm169, %v2129, 0.0
    %2133 = vadd.xlane.f32.xlu0 %v2132
    %v2134 = vpop.xlane.xlu0 %2133
    %v2135 = vsel %vm169, %v2130, 0.0
    %2136 = vadd.xlane.f32.xlu0 %v2135
    %v2137 = vpop.xlane.xlu0 %2136
    %v2138 = vsel %vm169, %v2131, 0.0
    %2139 = vadd.xlane.f32.xlu0 %v2138
    %v2140 = vpop.xlane.xlu0 %2139
    %v2141 = vmul.f32 %v2134, %v1261
    %v2142 = vmul.f32 %v2137, %v1261
    %v2143 = vmul.f32 %v2140, %v1261
    %v2144 = vsub.f32 %v2129, %v2141
    %v2145 = vsub.f32 %v2130, %v2142
    %v2146 = vsub.f32 %v2131, %v2143
    %v2147 = vmul.f32 %v2144, %v2144
    %v2148 = vmul.f32 %v2145, %v2145
    %v2149 = vmul.f32 %v2146, %v2146
    %v2150 = vsel %vm169, %v2147, 0.0
    %2151 = vadd.xlane.f32.xlu0 %v2150
    %v2152 = vpop.xlane.xlu0 %2151
    %v2153 = vsel %vm169, %v2148, 0.0
    %2154 = vadd.xlane.f32.xlu0 %v2153
    %v2155 = vpop.xlane.xlu0 %2154
    %v2156 = vsel %vm169, %v2149, 0.0
    %2157 = vadd.xlane.f32.xlu0 %v2156
    %v2158 = vpop.xlane.xlu0 %2157
    %v2159 = vmul.f32 %v2152, %v1261
    %v2160 = vmul.f32 %v2155, %v1261
    %v2161 = vmul.f32 %v2158, %v1261
    %v2162 = vadd.f32 %v2159, 1e-05
    %v2163 = vadd.f32 %v2160, 1e-05
    %v2164 = vadd.f32 %v2161, 1e-05
    %v2165 = vrsqrt.pop %v2162
    %v2166 = vrsqrt.pop %v2163
    %v2167 = vrsqrt.pop %v2164
    %v2168 = vmul.f32 %v2144, %v2165
    %v2169 = vmul.f32 %v2145, %v2166
    %v2170 = vmul.f32 %v2146, %v2167
    %v2171 = vmul.f32 %v2168, %v1295
    %v2172 = vmul.f32 %v2169, %v1295
    %v2173 = vmul.f32 %v2170, %v1295
    %v2174 = vadd.f32 %v2171, %v1302
    %v2175 = vadd.f32 %v2172, %v1302
    %v2176 = vadd.f32 %v2173, %v1302
    %v2178 = vsel %vm169, %v2174, 0
    %v2181 = vsel %vm169, %v2175, 0
    %v2184 = vsel %vm169, %v2176, 0
    %2186 = vmatprep.subr.mxu0 0.0
    %2187 = vmatpush1.msra.mxu0 %v226
    %2188 = vmatprep.subr.mxu0 0.0
    %2189 = vmatpush1.msra.mxu0 %v227
    %2190 = vmatprep.subr.mxu0 0.0
    %2191 = vmatpush1.msra.mxu0 %v228
    %2192 = vmatprep.subr.mxu0 0.0
    %2193 = vmatpush1.msra.mxu0 %v229
    %2194 = vmatprep.subr.mxu0 0.0
    %2195 = vmatpush1.msra.mxu0 0.0
    %2196 = vmatprep.subr.mxu0 0.0
    %2197 = vmatpush1.msra.mxu0 0.0
    %2198 = vmatprep.subr.mxu0 0.0
    %2199 = vmatpush1.msra.mxu0 0.0
    %2200 = vmatprep.subr.mxu0 0.0
    %2201 = vmatpush1.msra.mxu0 0.0
    %2202 = vmatprep.subr.mxu0 0.0
    %2203 = vmatpush1.msra.mxu0 0.0
    %2204 = vmatprep.subr.mxu0 0.0
    %2205 = vmatpush1.msra.mxu0 0.0
    %2206 = vmatprep.subr.mxu0 0.0
    %2207 = vmatpush1.msra.mxu0 0.0
    %2208 = vmatprep.subr.mxu0 0.0
    %2209 = vmatpush1.msra.mxu0 0.0
    %2210 = vmatprep.subr.mxu0 0.0
    %2211 = vmatpush1.msra.mxu0 0.0
    %2212 = vmatprep.subr.mxu0 0.0
    %2213 = vmatpush1.msra.mxu0 0.0
    %2214 = vmatprep.subr.mxu0 0.0
    %2215 = vmatpush1.msra.mxu0 0.0
    %2216 = vmatprep.subr.mxu0 0.0
    %2217 = vmatpush1.msra.mxu0 0.0
    %2218 = vmatprep.subr.mxu0 0.0
    %2219 = vmatpush1.msra.mxu0 0.0
    %2220 = vmatprep.subr.mxu0 0.0
    %2221 = vmatpush1.msra.mxu0 0.0
    %2222 = vmatprep.subr.mxu0 0.0
    %2223 = vmatpush1.msra.mxu0 0.0
    %2224 = vmatprep.subr.mxu0 0.0
    %2225 = vmatpush1.msra.mxu0 0.0
    %2226 = vmatprep.subr.mxu0 0.0
    %2227 = vmatpush1.msra.mxu0 0.0
    %2228 = vmatprep.subr.mxu0 0.0
    %2229 = vmatpush1.msra.mxu0 0.0
    %2230 = vmatprep.subr.mxu0 0.0
    %2231 = vmatpush1.msra.mxu0 0.0
    %2232 = vmatprep.subr.mxu0 0.0
    %2233 = vmatpush1.msra.mxu0 0.0
    %2234 = vmatprep.subr.mxu0 0.0
    %2235 = vmatpush1.msra.mxu0 0.0
    %2236 = vmatprep.subr.mxu0 0.0
    %2237 = vmatpush1.msra.mxu0 0.0
    %2238 = vmatprep.subr.mxu0 0.0
    %2239 = vmatpush1.msra.mxu0 0.0
    %2240 = vmatprep.subr.mxu0 0.0
    %2241 = vmatpush1.msra.mxu0 0.0
    %2242 = vmatprep.subr.mxu0 0.0
    %2243 = vmatpush1.msra.mxu0 0.0
    %2244 = vmatprep.subr.mxu0 0.0
    %2245 = vmatpush1.msra.mxu0 0.0
    %2246 = vmatprep.subr.mxu0 0.0
    %2247 = vmatpush1.msra.mxu0 0.0
    %2248 = vmatprep.subr.mxu0 0.0
    %2249 = vmatpush1.msra.mxu0 0.0
    %2250 = vmatprep.mubr.f32.mxu0 0.0
    %2251 = vmatmul.mubr.f32.gmra.mrb[0].mxu0 %v2178
    %v2252 = vpop.f32.mrb[0].mxu0
    %v2253 = vadd.f32 %v1309, %v2252
    %v2254 = vpop.f32.mrb[0].mxu0
    %2255 = vmatprep.mubr.f32.mxu0 0.0
    %2256 = vmatmul.mubr.f32.gmra.mrb[0].mxu0 %v2181
    %v2257 = vpop.f32.mrb[0].mxu0
    %v2258 = vadd.f32 %v1309, %v2257
    %v2259 = vpop.f32.mrb[0].mxu0
    %2260 = vmatprep.mubr.f32.mxu0 0.0
    %2261 = vmatmul.mubr.f32.gmra.mrb[0].mxu0 %v2184
    %v2262 = vpop.f32.mrb[0].mxu0
    %v2263 = vadd.f32 %v1309, %v2262
    %v2264 = vpop.f32.mrb[0].mxu0
    %2265 = vdwg.mxu0
    %v2266 = vmul.f32 %v2253, 0.5
    %v2267 = vmul.f32 %v2258, 0.5
    %v2268 = vmul.f32 %v2263, 0.5
    %v2269 = vmul.f32 %v2253, 0.70710677
    %v2270 = vmul.f32 %v2258, 0.70710677
    %v2271 = vmul.f32 %v2263, 0.70710677
    %vm2272 = vcmp.ge.f32.partialorder %v2269, 0.0
    %vm2273 = vcmp.ge.f32.partialorder %v2270, 0.0
    %vm2274 = vcmp.ge.f32.partialorder %v2271, 0.0
    %v2275 = vsel %vm2272, 1.0, -1.0
    %v2276 = vsel %vm2273, 1.0, -1.0
    %v2277 = vsel %vm2274, 1.0, -1.0
    %v2278 = vand.u32 2147483647, %v2269
    %v2279 = vand.u32 2147483647, %v2270
    %v2280 = vand.u32 2147483647, %v2271
    %v2281 = vmul.f32 %v2278, 0.3275911
    %v2282 = vmul.f32 %v2279, 0.3275911
    %v2283 = vmul.f32 %v2280, 0.3275911
    %v2284 = vadd.f32 %v2281, 1.0
    %v2285 = vadd.f32 %v2282, 1.0
    %v2286 = vadd.f32 %v2283, 1.0
    %v2287 = vrcp.pop %v2284
    %v2288 = vmul.f32 1.0, %v2287
    %v2289 = vrcp.pop %v2285
    %v2290 = vmul.f32 1.0, %v2289
    %v2291 = vrcp.pop %v2286
    %v2292 = vmul.f32 1.0, %v2291
    %v2293 = vmul.f32 %v2288, 1.0614054
    %v2294 = vmul.f32 %v2290, 1.0614054
    %v2295 = vmul.f32 %v2292, 1.0614054
    %v2296 = vadd.f32 %v2293, -1.4531521
    %v2297 = vadd.f32 %v2294, -1.4531521
    %v2298 = vadd.f32 %v2295, -1.4531521
    %v2299 = vmul.f32 %v2296, %v2288
    %v2300 = vmul.f32 %v2297, %v2290
    %v2301 = vmul.f32 %v2298, %v2292
    %v2302 = vadd.f32 %v2299, 1.4214138
    %v2303 = vadd.f32 %v2300, 1.4214138
    %v2304 = vadd.f32 %v2301, 1.4214138
    %v2305 = vmul.f32 %v2302, %v2288
    %v2306 = vmul.f32 %v2303, %v2290
    %v2307 = vmul.f32 %v2304, %v2292
    %v2308 = vadd.f32 %v2305, -0.28449672
    %v2309 = vadd.f32 %v2306, -0.28449672
    %v2310 = vadd.f32 %v2307, -0.28449672
    %v2311 = vmul.f32 %v2308, %v2288
    %v2312 = vmul.f32 %v2309, %v2290
    %v2313 = vmul.f32 %v2310, %v2292
    %v2314 = vadd.f32 %v2311, 0.2548296
    %v2315 = vadd.f32 %v2312, 0.2548296
    %v2316 = vadd.f32 %v2313, 0.2548296
    %v2317 = vmul.f32 %v2314, %v2288
    %v2318 = vmul.f32 %v2315, %v2290
    %v2319 = vmul.f32 %v2316, %v2292
    %v2320 = vsub.f32 0.0, %v2278
    %v2321 = vsub.f32 0.0, %v2279
    %v2322 = vsub.f32 0.0, %v2280
    %v2323 = vmul.f32 %v2320, %v2278
    %v2324 = vmul.f32 %v2321, %v2279
    %v2325 = vmul.f32 %v2322, %v2280
    %v2326 = vmul.f32 %v2323, 1.442695
    %v2327 = vpow.pop %v2326
    %v2328 = vmul.f32 %v2324, 1.442695
    %v2329 = vpow.pop %v2328
    %v2330 = vmul.f32 %v2325, 1.442695
    %v2331 = vpow.pop %v2330
    %v2332 = vmul.f32 %v2317, %v2327
    %v2333 = vmul.f32 %v2318, %v2329
    %v2334 = vmul.f32 %v2319, %v2331
    %v2335 = vsub.f32 1.0, %v2332
    %v2336 = vsub.f32 1.0, %v2333
    %v2337 = vsub.f32 1.0, %v2334
    %v2338 = vmul.f32 %v2275, %v2335
    %v2339 = vmul.f32 %v2276, %v2336
    %v2340 = vmul.f32 %v2277, %v2337
    %v2341 = vadd.f32 %v2338, 1.0
    %v2342 = vadd.f32 %v2339, 1.0
    %v2343 = vadd.f32 %v2340, 1.0
    %v2344 = vmul.f32 %v2266, %v2341
    %v2345 = vmul.f32 %v2267, %v2342
    %v2346 = vmul.f32 %v2268, %v2343
    %v2348 = vsel %vm1484, %v2344, 0
    %v2351 = vsel %vm1484, %v2345, 0
    %v2354 = vsel %vm1484, %v2346, 0
    %2356 = vmatprep.subr.mxu0 0.0
    %2357 = vmatpush1.msra.mxu0 %v209
    %2358 = vmatprep.subr.mxu0 0.0
    %2359 = vmatpush1.msra.mxu0 %v210
    %2360 = vmatprep.subr.mxu0 0.0
    %2361 = vmatpush1.msra.mxu0 %v211
    %2362 = vmatprep.subr.mxu0 0.0
    %2363 = vmatpush1.msra.mxu0 %v212
    %2364 = vmatprep.subr.mxu0 0.0
    %2365 = vmatpush1.msra.mxu0 %v213
    %2366 = vmatprep.subr.mxu0 0.0
    %2367 = vmatpush1.msra.mxu0 %v214
    %2368 = vmatprep.subr.mxu0 0.0
    %2369 = vmatpush1.msra.mxu0 %v215
    %2370 = vmatprep.subr.mxu0 0.0
    %2371 = vmatpush1.msra.mxu0 %v216
    %2372 = vmatprep.subr.mxu0 0.0
    %2373 = vmatpush1.msra.mxu0 0.0
    %2374 = vmatprep.subr.mxu0 0.0
    %2375 = vmatpush1.msra.mxu0 0.0
    %2376 = vmatprep.subr.mxu0 0.0
    %2377 = vmatpush1.msra.mxu0 0.0
    %2378 = vmatprep.subr.mxu0 0.0
    %2379 = vmatpush1.msra.mxu0 0.0
    %2380 = vmatprep.subr.mxu0 0.0
    %2381 = vmatpush1.msra.mxu0 0.0
    %2382 = vmatprep.subr.mxu0 0.0
    %2383 = vmatpush1.msra.mxu0 0.0
    %2384 = vmatprep.subr.mxu0 0.0
    %2385 = vmatpush1.msra.mxu0 0.0
    %2386 = vmatprep.subr.mxu0 0.0
    %2387 = vmatpush1.msra.mxu0 0.0
    %2388 = vmatprep.subr.mxu0 0.0
    %2389 = vmatpush1.msra.mxu0 0.0
    %2390 = vmatprep.subr.mxu0 0.0
    %2391 = vmatpush1.msra.mxu0 0.0
    %2392 = vmatprep.subr.mxu0 0.0
    %2393 = vmatpush1.msra.mxu0 0.0
    %2394 = vmatprep.subr.mxu0 0.0
    %2395 = vmatpush1.msra.mxu0 0.0
    %2396 = vmatprep.subr.mxu0 0.0
    %2397 = vmatpush1.msra.mxu0 0.0
    %2398 = vmatprep.subr.mxu0 0.0
    %2399 = vmatpush1.msra.mxu0 0.0
    %2400 = vmatprep.subr.mxu0 0.0
    %2401 = vmatpush1.msra.mxu0 0.0
    %2402 = vmatprep.subr.mxu0 0.0
    %2403 = vmatpush1.msra.mxu0 0.0
    %2404 = vmatprep.subr.mxu0 0.0
    %2405 = vmatpush1.msra.mxu0 0.0
    %2406 = vmatprep.subr.mxu0 0.0
    %2407 = vmatpush1.msra.mxu0 0.0
    %2408 = vmatprep.subr.mxu0 0.0
    %2409 = vmatpush1.msra.mxu0 0.0
    %2410 = vmatprep.subr.mxu0 0.0
    %2411 = vmatpush1.msra.mxu0 0.0
    %2412 = vmatprep.subr.mxu0 0.0
    %2413 = vmatpush1.msra.mxu0 0.0
    %2414 = vmatprep.subr.mxu0 0.0
    %2415 = vmatpush1.msra.mxu0 0.0
    %2416 = vmatprep.subr.mxu0 0.0
    %2417 = vmatpush1.msra.mxu0 0.0
    %2418 = vmatprep.subr.mxu0 0.0
    %2419 = vmatpush1.msra.mxu0 0.0
    %2420 = vmatprep.mubr.f32.mxu0 0.0
    %2421 = vmatmul.mubr.f32.gmra.mrb[0].mxu0 %v2348
    %v2422 = vpop.f32.mrb[0].mxu0
    %v2423 = vadd.f32 %v1483, %v2422
    %v2424 = vpop.f32.mrb[0].mxu0
    %2425 = vmatprep.mubr.f32.mxu0 0.0
    %2426 = vmatmul.mubr.f32.gmra.mrb[0].mxu0 %v2351
    %v2427 = vpop.f32.mrb[0].mxu0
    %v2428 = vadd.f32 %v1483, %v2427
    %v2429 = vpop.f32.mrb[0].mxu0
    %2430 = vmatprep.mubr.f32.mxu0 0.0
    %2431 = vmatmul.mubr.f32.gmra.mrb[0].mxu0 %v2354
    %v2432 = vpop.f32.mrb[0].mxu0
    %v2433 = vadd.f32 %v1483, %v2432
    %v2434 = vpop.f32.mrb[0].mxu0
    %2435 = vdwg.mxu0
    %v2436 = vadd.f32 %v2174, %v2423
    %v2437 = vadd.f32 %v2175, %v2428
    %v2438 = vadd.f32 %v2176, %v2433
    %v2439 = vsel %vm169, %v2436, 0.0
    %2440 = vadd.xlane.f32.xlu0 %v2439
    %v2441 = vpop.xlane.xlu0 %2440
    %v2442 = vsel %vm169, %v2437, 0.0
    %2443 = vadd.xlane.f32.xlu0 %v2442
    %v2444 = vpop.xlane.xlu0 %2443
    %v2445 = vsel %vm169, %v2438, 0.0
    %2446 = vadd.xlane.f32.xlu0 %v2445
    %v2447 = vpop.xlane.xlu0 %2446
    %v2448 = vmul.f32 %v2441, %v1261
    %v2449 = vmul.f32 %v2444, %v1261
    %v2450 = vmul.f32 %v2447, %v1261
    %v2451 = vsub.f32 %v2436, %v2448
    %v2452 = vsub.f32 %v2437, %v2449
    %v2453 = vsub.f32 %v2438, %v2450
    %v2454 = vmul.f32 %v2451, %v2451
    %v2455 = vmul.f32 %v2452, %v2452
    %v2456 = vmul.f32 %v2453, %v2453
    %v2457 = vsel %vm169, %v2454, 0.0
    %2458 = vadd.xlane.f32.xlu0 %v2457
    %v2459 = vpop.xlane.xlu0 %2458
    %v2460 = vsel %vm169, %v2455, 0.0
    %2461 = vadd.xlane.f32.xlu0 %v2460
    %v2462 = vpop.xlane.xlu0 %2461
    %v2463 = vsel %vm169, %v2456, 0.0
    %2464 = vadd.xlane.f32.xlu0 %v2463
    %v2465 = vpop.xlane.xlu0 %2464
    %v2466 = vmul.f32 %v2459, %v1261
    %v2467 = vmul.f32 %v2462, %v1261
    %v2468 = vmul.f32 %v2465, %v1261
    %v2469 = vadd.f32 %v2466, 1e-05
    %v2470 = vadd.f32 %v2467, 1e-05
    %v2471 = vadd.f32 %v2468, 1e-05
    %v2472 = vrsqrt.pop %v2469
    %v2473 = vrsqrt.pop %v2470
    %v2474 = vrsqrt.pop %v2471
    %v2475 = vmul.f32 %v2451, %v2472
    %v2476 = vmul.f32 %v2452, %v2473
    %v2477 = vmul.f32 %v2453, %v2474
    %v2478 = vmul.f32 %v2475, %v1619
    %v2479 = vmul.f32 %v2476, %v1619
    %v2480 = vmul.f32 %v2477, %v1619
    %v2481 = vadd.f32 %v2478, %v1626
    %v2482 = vadd.f32 %v2479, %v1626
    %v2483 = vadd.f32 %v2480, %v1626
    %v2484 = vld [vmem:[%s1 + $0x118] sm:$0xff]
    %v2485 = vld [vmem:[%s1 + $0x120] sm:$0xff]
    %v2486 = vld [vmem:[%s1 + $0x128] sm:$0xff]
    %v2487 = vld [vmem:[%s1 + $0x130] sm:$0xff]
    %v2488 = vld [vmem:[%s1 + $0x138] sm:$0xff]
    %v2489 = vld [vmem:[%s1 + $0x140] sm:$0xff]
    %v2490 = vld [vmem:[%s1 + $0x148] sm:$0xff]
    %v2491 = vld [vmem:[%s1 + $0x150] sm:$0xff]
    %v2492 = vld [vmem:[%s1 + $0x158] sm:$0xff]
    %v2493 = vld [vmem:[%s1 + $0x160] sm:$0xff]
    %v2494 = vld [vmem:[%s1 + $0x168] sm:$0xff]
    %v2495 = vld [vmem:[%s1 + $0x170] sm:$0xff]
    %v2496 = vld [vmem:[%s1 + $0x178] sm:$0xff]
    %v2497 = vld [vmem:[%s1 + $0x180] sm:$0xff]
    %v2498 = vld [vmem:[%s1 + $0x188] sm:$0xff]
    %v2499 = vld [vmem:[%s1 + $0x190] sm:$0xff]
    %v2500 = vld [vmem:[%s1 + $0x198] sm:$0xff]
    %v2501 = vld [vmem:[%s1 + $0x1a0] sm:$0xff]
    %v2502 = vld [vmem:[%s1 + $0x1a8] sm:$0xff]
    %v2503 = vld [vmem:[%s1 + $0x1b0] sm:$0xff]
    %v2504 = vld [vmem:[%s1 + $0x1b8] sm:$0xff]
    %v2505 = vld [vmem:[%s1 + $0x1c0] sm:$0xff]
    %v2506 = vld [vmem:[%s1 + $0x1c8] sm:$0xff]
    %v2507 = vld [vmem:[%s1 + $0x1d0] sm:$0xff]
    %v2508 = vld [vmem:[%s1 + $0x1d8] sm:$0x1]
    %v2509 = vld [vmem:[%s1 + $0x1d9] sm:$0x1]
    %v2510 = vld [vmem:[%s1 + $0x1da] sm:$0x1]
    %v2511 = vld [vmem:[%s1 + $0x1db] sm:$0x1]
    %v2512 = vld [vmem:[%s1 + $0x1dc] sm:$0x1]
    %v2513 = vld [vmem:[%s1 + $0x1dd] sm:$0x1]
    %v2514 = vld [vmem:[%s1 + $0x1de] sm:$0x1]
    %v2515 = vld [vmem:[%s1 + $0x1df] sm:$0x1]
    %v2516 = vld [vmem:[%s1 + $0x1e0] sm:$0x1]
    %v2517 = vld [vmem:[%s2 + $0x28] sm:$0xff]
    %v2518 = vld [vmem:[%s2 + $0x30] sm:$0xff]
    %v2519 = vld [vmem:[%s2 + $0x38] sm:$0xff]
    %v2520 = vld [vmem:[%s2 + $0x40] sm:$0xff]
    %v2521 = vld [vmem:[%s2 + $0x48] sm:$0x1]
    %v2522 = vlaneseq
    %v2523 = vshrl.u32 %v2522, 7
    %v2524 = vsub.s32 0, %v2523
    %v2525 = vrot.slane %v2508, %v2524
    %v2527 = vsel %vm169, %v1627, 0
    %v2530 = vsel %vm169, %v1628, 0
    %v2533 = vsel %vm169, %v1629, 0
    %2535 = vmatprep.subr.mxu0 0.0
    %2536 = vmatpush1.msra.mxu0 %v2484
    %2537 = vmatprep.subr.mxu0 0.0
    %2538 = vmatpush1.msra.mxu0 %v2485
    %2539 = vmatprep.subr.mxu0 0.0
    %2540 = vmatpush1.msra.mxu0 %v2486
    %2541 = vmatprep.subr.mxu0 0.0
    %2542 = vmatpush1.msra.mxu0 %v2487
    %2543 = vmatprep.subr.mxu0 0.0
    %2544 = vmatpush1.msra.mxu0 0.0
    %2545 = vmatprep.subr.mxu0 0.0
    %2546 = vmatpush1.msra.mxu0 0.0
    %2547 = vmatprep.subr.mxu0 0.0
    %2548 = vmatpush1.msra.mxu0 0.0
    %2549 = vmatprep.subr.mxu0 0.0
    %2550 = vmatpush1.msra.mxu0 0.0
    %2551 = vmatprep.subr.mxu0 0.0
    %2552 = vmatpush1.msra.mxu0 0.0
    %2553 = vmatprep.subr.mxu0 0.0
    %2554 = vmatpush1.msra.mxu0 0.0
    %2555 = vmatprep.subr.mxu0 0.0
    %2556 = vmatpush1.msra.mxu0 0.0
    %2557 = vmatprep.subr.mxu0 0.0
    %2558 = vmatpush1.msra.mxu0 0.0
    %2559 = vmatprep.subr.mxu0 0.0
    %2560 = vmatpush1.msra.mxu0 0.0
    %2561 = vmatprep.subr.mxu0 0.0
    %2562 = vmatpush1.msra.mxu0 0.0
    %2563 = vmatprep.subr.mxu0 0.0
    %2564 = vmatpush1.msra.mxu0 0.0
    %2565 = vmatprep.subr.mxu0 0.0
    %2566 = vmatpush1.msra.mxu0 0.0
    %2567 = vmatprep.subr.mxu0 0.0
    %2568 = vmatpush1.msra.mxu0 0.0
    %2569 = vmatprep.subr.mxu0 0.0
    %2570 = vmatpush1.msra.mxu0 0.0
    %2571 = vmatprep.subr.mxu0 0.0
    %2572 = vmatpush1.msra.mxu0 0.0
    %2573 = vmatprep.subr.mxu0 0.0
    %2574 = vmatpush1.msra.mxu0 0.0
    %2575 = vmatprep.subr.mxu0 0.0
    %2576 = vmatpush1.msra.mxu0 0.0
    %2577 = vmatprep.subr.mxu0 0.0
    %2578 = vmatpush1.msra.mxu0 0.0
    %2579 = vmatprep.subr.mxu0 0.0
    %2580 = vmatpush1.msra.mxu0 0.0
    %2581 = vmatprep.subr.mxu0 0.0
    %2582 = vmatpush1.msra.mxu0 0.0
    %2583 = vmatprep.subr.mxu0 0.0
    %2584 = vmatpush1.msra.mxu0 0.0
    %2585 = vmatprep.subr.mxu0 0.0
    %2586 = vmatpush1.msra.mxu0 0.0
    %2587 = vmatprep.subr.mxu0 0.0
    %2588 = vmatpush1.msra.mxu0 0.0
    %2589 = vmatprep.subr.mxu0 0.0
    %2590 = vmatpush1.msra.mxu0 0.0
    %2591 = vmatprep.subr.mxu0 0.0
    %2592 = vmatpush1.msra.mxu0 0.0
    %2593 = vmatprep.subr.mxu0 0.0
    %2594 = vmatpush1.msra.mxu0 0.0
    %2595 = vmatprep.subr.mxu0 0.0
    %2596 = vmatpush1.msra.mxu0 0.0
    %2597 = vmatprep.subr.mxu0 0.0
    %2598 = vmatpush1.msra.mxu0 0.0
    %2599 = vmatprep.mubr.f32.mxu0 0.0
    %2600 = vmatmul.mubr.f32.gmra.mrb[0].mxu0 %v2527
    %v2601 = vpop.f32.mrb[0].mxu0
    %v2602 = vadd.f32 %v2525, %v2601
    %v2603 = vpop.f32.mrb[0].mxu0
    %2604 = vmatprep.mubr.f32.mxu0 0.0
    %2605 = vmatmul.mubr.f32.gmra.mrb[0].mxu0 %v2530
    %v2606 = vpop.f32.mrb[0].mxu0
    %v2607 = vadd.f32 %v2525, %v2606
    %v2608 = vpop.f32.mrb[0].mxu0
    %2609 = vmatprep.mubr.f32.mxu0 0.0
    %2610 = vmatmul.mubr.f32.gmra.mrb[0].mxu0 %v2533
    %v2611 = vpop.f32.mrb[0].mxu0
    %v2612 = vadd.f32 %v2525, %v2611
    %v2613 = vpop.f32.mrb[0].mxu0
    %2614 = vdwg.mxu0
    %v2616 = vsel %vm169, %v2481, 0
    %v2619 = vsel %vm169, %v2482, 0
    %v2622 = vsel %vm169, %v2483, 0
    %2624 = vmatprep.subr.mxu0 0.0
    %2625 = vmatpush1.msra.mxu0 %v2484
    %2626 = vmatprep.subr.mxu0 0.0
    %2627 = vmatpush1.msra.mxu0 %v2485
    %2628 = vmatprep.subr.mxu0 0.0
    %2629 = vmatpush1.msra.mxu0 %v2486
    %2630 = vmatprep.subr.mxu0 0.0
    %2631 = vmatpush1.msra.mxu0 %v2487
    %2632 = vmatprep.subr.mxu0 0.0
    %2633 = vmatpush1.msra.mxu0 0.0
    %2634 = vmatprep.subr.mxu0 0.0
    %2635 = vmatpush1.msra.mxu0 0.0
    %2636 = vmatprep.subr.mxu0 0.0
    %2637 = vmatpush1.msra.mxu0 0.0
    %2638 = vmatprep.subr.mxu0 0.0
    %2639 = vmatpush1.msra.mxu0 0.0
    %2640 = vmatprep.subr.mxu0 0.0
    %2641 = vmatpush1.msra.mxu0 0.0
    %2642 = vmatprep.subr.mxu0 0.0
    %2643 = vmatpush1.msra.mxu0 0.0
    %2644 = vmatprep.subr.mxu0 0.0
    %2645 = vmatpush1.msra.mxu0 0.0
    %2646 = vmatprep.subr.mxu0 0.0
    %2647 = vmatpush1.msra.mxu0 0.0
    %2648 = vmatprep.subr.mxu0 0.0
    %2649 = vmatpush1.msra.mxu0 0.0
    %2650 = vmatprep.subr.mxu0 0.0
    %2651 = vmatpush1.msra.mxu0 0.0
    %2652 = vmatprep.subr.mxu0 0.0
    %2653 = vmatpush1.msra.mxu0 0.0
    %2654 = vmatprep.subr.mxu0 0.0
    %2655 = vmatpush1.msra.mxu0 0.0
    %2656 = vmatprep.subr.mxu0 0.0
    %2657 = vmatpush1.msra.mxu0 0.0
    %2658 = vmatprep.subr.mxu0 0.0
    %2659 = vmatpush1.msra.mxu0 0.0
    %2660 = vmatprep.subr.mxu0 0.0
    %2661 = vmatpush1.msra.mxu0 0.0
    %2662 = vmatprep.subr.mxu0 0.0
    %2663 = vmatpush1.msra.mxu0 0.0
    %2664 = vmatprep.subr.mxu0 0.0
    %2665 = vmatpush1.msra.mxu0 0.0
    %2666 = vmatprep.subr.mxu0 0.0
    %2667 = vmatpush1.msra.mxu0 0.0
    %2668 = vmatprep.subr.mxu0 0.0
    %2669 = vmatpush1.msra.mxu0 0.0
    %2670 = vmatprep.subr.mxu0 0.0
    %2671 = vmatpush1.msra.mxu0 0.0
    %2672 = vmatprep.subr.mxu0 0.0
    %2673 = vmatpush1.msra.mxu0 0.0
    %2674 = vmatprep.subr.mxu0 0.0
    %2675 = vmatpush1.msra.mxu0 0.0
    %2676 = vmatprep.subr.mxu0 0.0
    %2677 = vmatpush1.msra.mxu0 0.0
    %2678 = vmatprep.subr.mxu0 0.0
    %2679 = vmatpush1.msra.mxu0 0.0
    %2680 = vmatprep.subr.mxu0 0.0
    %2681 = vmatpush1.msra.mxu0 0.0
    %2682 = vmatprep.subr.mxu0 0.0
    %2683 = vmatpush1.msra.mxu0 0.0
    %2684 = vmatprep.subr.mxu0 0.0
    %2685 = vmatpush1.msra.mxu0 0.0
    %2686 = vmatprep.subr.mxu0 0.0
    %2687 = vmatpush1.msra.mxu0 0.0
    %2688 = vmatprep.mubr.f32.mxu0 0.0
    %2689 = vmatmul.mubr.f32.gmra.mrb[0].mxu0 %v2616
    %v2690 = vpop.f32.mrb[0].mxu0
    %v2691 = vadd.f32 %v2525, %v2690
    %v2692 = vpop.f32.mrb[0].mxu0
    %2693 = vmatprep.mubr.f32.mxu0 0.0
    %2694 = vmatmul.mubr.f32.gmra.mrb[0].mxu0 %v2619
    %v2695 = vpop.f32.mrb[0].mxu0
    %v2696 = vadd.f32 %v2525, %v2695
    %v2697 = vpop.f32.mrb[0].mxu0
    %2698 = vmatprep.mubr.f32.mxu0 0.0
    %2699 = vmatmul.mubr.f32.gmra.mrb[0].mxu0 %v2622
    %v2700 = vpop.f32.mrb[0].mxu0
    %v2701 = vadd.f32 %v2525, %v2700
    %v2702 = vpop.f32.mrb[0].mxu0
    %2703 = vdwg.mxu0
    %v2704 = vlaneseq
    %v2705 = vshrl.u32 %v2704, 7
    %v2706 = vsub.s32 0, %v2705
    %v2707 = vrot.slane %v2509, %v2706
    %2708 = vmatprep.subr.mxu0 0.0
    %2709 = vmatpush1.msra.mxu0 %v2488
    %2710 = vmatprep.subr.mxu0 0.0
    %2711 = vmatpush1.msra.mxu0 %v2489
    %2712 = vmatprep.subr.mxu0 0.0
    %2713 = vmatpush1.msra.mxu0 %v2490
    %2714 = vmatprep.subr.mxu0 0.0
    %2715 = vmatpush1.msra.mxu0 %v2491
    %2716 = vmatprep.subr.mxu0 0.0
    %2717 = vmatpush1.msra.mxu0 0.0
    %2718 = vmatprep.subr.mxu0 0.0
    %2719 = vmatpush1.msra.mxu0 0.0
    %2720 = vmatprep.subr.mxu0 0.0
    %2721 = vmatpush1.msra.mxu0 0.0
    %2722 = vmatprep.subr.mxu0 0.0
    %2723 = vmatpush1.msra.mxu0 0.0
    %2724 = vmatprep.subr.mxu0 0.0
    %2725 = vmatpush1.msra.mxu0 0.0
    %2726 = vmatprep.subr.mxu0 0.0
    %2727 = vmatpush1.msra.mxu0 0.0
    %2728 = vmatprep.subr.mxu0 0.0
    %2729 = vmatpush1.msra.mxu0 0.0
    %2730 = vmatprep.subr.mxu0 0.0
    %2731 = vmatpush1.msra.mxu0 0.0
    %2732 = vmatprep.subr.mxu0 0.0
    %2733 = vmatpush1.msra.mxu0 0.0
    %2734 = vmatprep.subr.mxu0 0.0
    %2735 = vmatpush1.msra.mxu0 0.0
    %2736 = vmatprep.subr.mxu0 0.0
    %2737 = vmatpush1.msra.mxu0 0.0
    %2738 = vmatprep.subr.mxu0 0.0
    %2739 = vmatpush1.msra.mxu0 0.0
    %2740 = vmatprep.subr.mxu0 0.0
    %2741 = vmatpush1.msra.mxu0 0.0
    %2742 = vmatprep.subr.mxu0 0.0
    %2743 = vmatpush1.msra.mxu0 0.0
    %2744 = vmatprep.subr.mxu0 0.0
    %2745 = vmatpush1.msra.mxu0 0.0
    %2746 = vmatprep.subr.mxu0 0.0
    %2747 = vmatpush1.msra.mxu0 0.0
    %2748 = vmatprep.subr.mxu0 0.0
    %2749 = vmatpush1.msra.mxu0 0.0
    %2750 = vmatprep.subr.mxu0 0.0
    %2751 = vmatpush1.msra.mxu0 0.0
    %2752 = vmatprep.subr.mxu0 0.0
    %2753 = vmatpush1.msra.mxu0 0.0
    %2754 = vmatprep.subr.mxu0 0.0
    %2755 = vmatpush1.msra.mxu0 0.0
    %2756 = vmatprep.subr.mxu0 0.0
    %2757 = vmatpush1.msra.mxu0 0.0
    %2758 = vmatprep.subr.mxu0 0.0
    %2759 = vmatpush1.msra.mxu0 0.0
    %2760 = vmatprep.subr.mxu0 0.0
    %2761 = vmatpush1.msra.mxu0 0.0
    %2762 = vmatprep.subr.mxu0 0.0
    %2763 = vmatpush1.msra.mxu0 0.0
    %2764 = vmatprep.subr.mxu0 0.0
    %2765 = vmatpush1.msra.mxu0 0.0
    %2766 = vmatprep.subr.mxu0 0.0
    %2767 = vmatpush1.msra.mxu0 0.0
    %2768 = vmatprep.subr.mxu0 0.0
    %2769 = vmatpush1.msra.mxu0 0.0
    %2770 = vmatprep.subr.mxu0 0.0
    %2771 = vmatpush1.msra.mxu0 0.0
    %2772 = vmatprep.mubr.f32.mxu0 0.0
    %2773 = vmatmul.mubr.f32.gmra.mrb[0].mxu0 %v2527
    %v2774 = vpop.f32.mrb[0].mxu0
    %v2775 = vadd.f32 %v2707, %v2774
    %v2776 = vpop.f32.mrb[0].mxu0
    %2777 = vmatprep.mubr.f32.mxu0 0.0
    %2778 = vmatmul.mubr.f32.gmra.mrb[0].mxu0 %v2530
    %v2779 = vpop.f32.mrb[0].mxu0
    %v2780 = vadd.f32 %v2707, %v2779
    %v2781 = vpop.f32.mrb[0].mxu0
    %2782 = vmatprep.mubr.f32.mxu0 0.0
    %2783 = vmatmul.mubr.f32.gmra.mrb[0].mxu0 %v2533
    %v2784 = vpop.f32.mrb[0].mxu0
    %v2785 = vadd.f32 %v2707, %v2784
    %v2786 = vpop.f32.mrb[0].mxu0
    %2787 = vdwg.mxu0
    %2788 = vmatprep.subr.mxu0 0.0
    %2789 = vmatpush1.msra.mxu0 %v2488
    %2790 = vmatprep.subr.mxu0 0.0
    %2791 = vmatpush1.msra.mxu0 %v2489
    %2792 = vmatprep.subr.mxu0 0.0
    %2793 = vmatpush1.msra.mxu0 %v2490
    %2794 = vmatprep.subr.mxu0 0.0
    %2795 = vmatpush1.msra.mxu0 %v2491
    %2796 = vmatprep.subr.mxu0 0.0
    %2797 = vmatpush1.msra.mxu0 0.0
    %2798 = vmatprep.subr.mxu0 0.0
    %2799 = vmatpush1.msra.mxu0 0.0
    %2800 = vmatprep.subr.mxu0 0.0
    %2801 = vmatpush1.msra.mxu0 0.0
    %2802 = vmatprep.subr.mxu0 0.0
    %2803 = vmatpush1.msra.mxu0 0.0
    %2804 = vmatprep.subr.mxu0 0.0
    %2805 = vmatpush1.msra.mxu0 0.0
    %2806 = vmatprep.subr.mxu0 0.0
    %2807 = vmatpush1.msra.mxu0 0.0
    %2808 = vmatprep.subr.mxu0 0.0
    %2809 = vmatpush1.msra.mxu0 0.0
    %2810 = vmatprep.subr.mxu0 0.0
    %2811 = vmatpush1.msra.mxu0 0.0
    %2812 = vmatprep.subr.mxu0 0.0
    %2813 = vmatpush1.msra.mxu0 0.0
    %2814 = vmatprep.subr.mxu0 0.0
    %2815 = vmatpush1.msra.mxu0 0.0
    %2816 = vmatprep.subr.mxu0 0.0
    %2817 = vmatpush1.msra.mxu0 0.0
    %2818 = vmatprep.subr.mxu0 0.0
    %2819 = vmatpush1.msra.mxu0 0.0
    %2820 = vmatprep.subr.mxu0 0.0
    %2821 = vmatpush1.msra.mxu0 0.0
    %2822 = vmatprep.subr.mxu0 0.0
    %2823 = vmatpush1.msra.mxu0 0.0
    %2824 = vmatprep.subr.mxu0 0.0
    %2825 = vmatpush1.msra.mxu0 0.0
    %2826 = vmatprep.subr.mxu0 0.0
    %2827 = vmatpush1.msra.mxu0 0.0
    %2828 = vmatprep.subr.mxu0 0.0
    %2829 = vmatpush1.msra.mxu0 0.0
    %2830 = vmatprep.subr.mxu0 0.0
    %2831 = vmatpush1.msra.mxu0 0.0
    %2832 = vmatprep.subr.mxu0 0.0
    %2833 = vmatpush1.msra.mxu0 0.0
    %2834 = vmatprep.subr.mxu0 0.0
    %2835 = vmatpush1.msra.mxu0 0.0
    %2836 = vmatprep.subr.mxu0 0.0
    %2837 = vmatpush1.msra.mxu0 0.0
    %2838 = vmatprep.subr.mxu0 0.0
    %2839 = vmatpush1.msra.mxu0 0.0
    %2840 = vmatprep.subr.mxu0 0.0
    %2841 = vmatpush1.msra.mxu0 0.0
    %2842 = vmatprep.subr.mxu0 0.0
    %2843 = vmatpush1.msra.mxu0 0.0
    %2844 = vmatprep.subr.mxu0 0.0
    %2845 = vmatpush1.msra.mxu0 0.0
    %2846 = vmatprep.subr.mxu0 0.0
    %2847 = vmatpush1.msra.mxu0 0.0
    %2848 = vmatprep.subr.mxu0 0.0
    %2849 = vmatpush1.msra.mxu0 0.0
    %2850 = vmatprep.subr.mxu0 0.0
    %2851 = vmatpush1.msra.mxu0 0.0
    %2852 = vmatprep.mubr.f32.mxu0 0.0
    %2853 = vmatmul.mubr.f32.gmra.mrb[0].mxu0 %v2616
    %v2854 = vpop.f32.mrb[0].mxu0
    %v2855 = vadd.f32 %v2707, %v2854
    %v2856 = vpop.f32.mrb[0].mxu0
    %2857 = vmatprep.mubr.f32.mxu0 0.0
    %2858 = vmatmul.mubr.f32.gmra.mrb[0].mxu0 %v2619
    %v2859 = vpop.f32.mrb[0].mxu0
    %v2860 = vadd.f32 %v2707, %v2859
    %v2861 = vpop.f32.mrb[0].mxu0
    %2862 = vmatprep.mubr.f32.mxu0 0.0
    %2863 = vmatmul.mubr.f32.gmra.mrb[0].mxu0 %v2622
    %v2864 = vpop.f32.mrb[0].mxu0
    %v2865 = vadd.f32 %v2707, %v2864
    %v2866 = vpop.f32.mrb[0].mxu0
    %2867 = vdwg.mxu0
    %v2868 = vlaneseq
    %v2869 = vshrl.u32 %v2868, 7
    %v2870 = vsub.s32 0, %v2869
    %v2871 = vrot.slane %v2510, %v2870
    %2872 = vmatprep.subr.mxu0 0.0
    %2873 = vmatpush1.msra.mxu0 %v2492
    %2874 = vmatprep.subr.mxu0 0.0
    %2875 = vmatpush1.msra.mxu0 %v2493
    %2876 = vmatprep.subr.mxu0 0.0
    %2877 = vmatpush1.msra.mxu0 %v2494
    %2878 = vmatprep.subr.mxu0 0.0
    %2879 = vmatpush1.msra.mxu0 %v2495
    %2880 = vmatprep.subr.mxu0 0.0
    %2881 = vmatpush1.msra.mxu0 0.0
    %2882 = vmatprep.subr.mxu0 0.0
    %2883 = vmatpush1.msra.mxu0 0.0
    %2884 = vmatprep.subr.mxu0 0.0
    %2885 = vmatpush1.msra.mxu0 0.0
    %2886 = vmatprep.subr.mxu0 0.0
    %2887 = vmatpush1.msra.mxu0 0.0
    %2888 = vmatprep.subr.mxu0 0.0
    %2889 = vmatpush1.msra.mxu0 0.0
    %2890 = vmatprep.subr.mxu0 0.0
    %2891 = vmatpush1.msra.mxu0 0.0
    %2892 = vmatprep.subr.mxu0 0.0
    %2893 = vmatpush1.msra.mxu0 0.0
    %2894 = vmatprep.subr.mxu0 0.0
    %2895 = vmatpush1.msra.mxu0 0.0
    %2896 = vmatprep.subr.mxu0 0.0
    %2897 = vmatpush1.msra.mxu0 0.0
    %2898 = vmatprep.subr.mxu0 0.0
    %2899 = vmatpush1.msra.mxu0 0.0
    %2900 = vmatprep.subr.mxu0 0.0
    %2901 = vmatpush1.msra.mxu0 0.0
    %2902 = vmatprep.subr.mxu0 0.0
    %2903 = vmatpush1.msra.mxu0 0.0
    %2904 = vmatprep.subr.mxu0 0.0
    %2905 = vmatpush1.msra.mxu0 0.0
    %2906 = vmatprep.subr.mxu0 0.0
    %2907 = vmatpush1.msra.mxu0 0.0
    %2908 = vmatprep.subr.mxu0 0.0
    %2909 = vmatpush1.msra.mxu0 0.0
    %2910 = vmatprep.subr.mxu0 0.0
    %2911 = vmatpush1.msra.mxu0 0.0
    %2912 = vmatprep.subr.mxu0 0.0
    %2913 = vmatpush1.msra.mxu0 0.0
    %2914 = vmatprep.subr.mxu0 0.0
    %2915 = vmatpush1.msra.mxu0 0.0
    %2916 = vmatprep.subr.mxu0 0.0
    %2917 = vmatpush1.msra.mxu0 0.0
    %2918 = vmatprep.subr.mxu0 0.0
    %2919 = vmatpush1.msra.mxu0 0.0
    %2920 = vmatprep.subr.mxu0 0.0
    %2921 = vmatpush1.msra.mxu0 0.0
    %2922 = vmatprep.subr.mxu0 0.0
    %2923 = vmatpush1.msra.mxu0 0.0
    %2924 = vmatprep.subr.mxu0 0.0
    %2925 = vmatpush1.msra.mxu0 0.0
    %2926 = vmatprep.subr.mxu0 0.0
    %2927 = vmatpush1.msra.mxu0 0.0
    %2928 = vmatprep.subr.mxu0 0.0
    %2929 = vmatpush1.msra.mxu0 0.0
    %2930 = vmatprep.subr.mxu0 0.0
    %2931 = vmatpush1.msra.mxu0 0.0
    %2932 = vmatprep.subr.mxu0 0.0
    %2933 = vmatpush1.msra.mxu0 0.0
    %2934 = vmatprep.subr.mxu0 0.0
    %2935 = vmatpush1.msra.mxu0 0.0
    %2936 = vmatprep.mubr.f32.mxu0 0.0
    %2937 = vmatmul.mubr.f32.gmra.mrb[0].mxu0 %v2527
    %v2938 = vpop.f32.mrb[0].mxu0
    %v2939 = vadd.f32 %v2871, %v2938
    %v2940 = vpop.f32.mrb[0].mxu0
    %2941 = vmatprep.mubr.f32.mxu0 0.0
    %2942 = vmatmul.mubr.f32.gmra.mrb[0].mxu0 %v2530
    %v2943 = vpop.f32.mrb[0].mxu0
    %v2944 = vadd.f32 %v2871, %v2943
    %v2945 = vpop.f32.mrb[0].mxu0
    %2946 = vmatprep.mubr.f32.mxu0 0.0
    %2947 = vmatmul.mubr.f32.gmra.mrb[0].mxu0 %v2533
    %v2948 = vpop.f32.mrb[0].mxu0
    %v2949 = vadd.f32 %v2871, %v2948
    %v2950 = vpop.f32.mrb[0].mxu0
    %2951 = vdwg.mxu0
    %2952 = vmatprep.subr.mxu0 0.0
    %2953 = vmatpush1.msra.mxu0 %v2492
    %2954 = vmatprep.subr.mxu0 0.0
    %2955 = vmatpush1.msra.mxu0 %v2493
    %2956 = vmatprep.subr.mxu0 0.0
    %2957 = vmatpush1.msra.mxu0 %v2494
    %2958 = vmatprep.subr.mxu0 0.0
    %2959 = vmatpush1.msra.mxu0 %v2495
    %2960 = vmatprep.subr.mxu0 0.0
    %2961 = vmatpush1.msra.mxu0 0.0
    %2962 = vmatprep.subr.mxu0 0.0
    %2963 = vmatpush1.msra.mxu0 0.0
    %2964 = vmatprep.subr.mxu0 0.0
    %2965 = vmatpush1.msra.mxu0 0.0
    %2966 = vmatprep.subr.mxu0 0.0
    %2967 = vmatpush1.msra.mxu0 0.0
    %2968 = vmatprep.subr.mxu0 0.0
    %2969 = vmatpush1.msra.mxu0 0.0
    %2970 = vmatprep.subr.mxu0 0.0
    %2971 = vmatpush1.msra.mxu0 0.0
    %2972 = vmatprep.subr.mxu0 0.0
    %2973 = vmatpush1.msra.mxu0 0.0
    %2974 = vmatprep.subr.mxu0 0.0
    %2975 = vmatpush1.msra.mxu0 0.0
    %2976 = vmatprep.subr.mxu0 0.0
    %2977 = vmatpush1.msra.mxu0 0.0
    %2978 = vmatprep.subr.mxu0 0.0
    %2979 = vmatpush1.msra.mxu0 0.0
    %2980 = vmatprep.subr.mxu0 0.0
    %2981 = vmatpush1.msra.mxu0 0.0
    %2982 = vmatprep.subr.mxu0 0.0
    %2983 = vmatpush1.msra.mxu0 0.0
    %2984 = vmatprep.subr.mxu0 0.0
    %2985 = vmatpush1.msra.mxu0 0.0
    %2986 = vmatprep.subr.mxu0 0.0
    %2987 = vmatpush1.msra.mxu0 0.0
    %2988 = vmatprep.subr.mxu0 0.0
    %2989 = vmatpush1.msra.mxu0 0.0
    %2990 = vmatprep.subr.mxu0 0.0
    %2991 = vmatpush1.msra.mxu0 0.0
    %2992 = vmatprep.subr.mxu0 0.0
    %2993 = vmatpush1.msra.mxu0 0.0
    %2994 = vmatprep.subr.mxu0 0.0
    %2995 = vmatpush1.msra.mxu0 0.0
    %2996 = vmatprep.subr.mxu0 0.0
    %2997 = vmatpush1.msra.mxu0 0.0
    %2998 = vmatprep.subr.mxu0 0.0
    %2999 = vmatpush1.msra.mxu0 0.0
    %3000 = vmatprep.subr.mxu0 0.0
    %3001 = vmatpush1.msra.mxu0 0.0
    %3002 = vmatprep.subr.mxu0 0.0
    %3003 = vmatpush1.msra.mxu0 0.0
    %3004 = vmatprep.subr.mxu0 0.0
    %3005 = vmatpush1.msra.mxu0 0.0
    %3006 = vmatprep.subr.mxu0 0.0
    %3007 = vmatpush1.msra.mxu0 0.0
    %3008 = vmatprep.subr.mxu0 0.0
    %3009 = vmatpush1.msra.mxu0 0.0
    %3010 = vmatprep.subr.mxu0 0.0
    %3011 = vmatpush1.msra.mxu0 0.0
    %3012 = vmatprep.subr.mxu0 0.0
    %3013 = vmatpush1.msra.mxu0 0.0
    %3014 = vmatprep.subr.mxu0 0.0
    %3015 = vmatpush1.msra.mxu0 0.0
    %3016 = vmatprep.mubr.f32.mxu0 0.0
    %3017 = vmatmul.mubr.f32.gmra.mrb[0].mxu0 %v2616
    %v3018 = vpop.f32.mrb[0].mxu0
    %v3019 = vadd.f32 %v2871, %v3018
    %v3020 = vpop.f32.mrb[0].mxu0
    %3021 = vmatprep.mubr.f32.mxu0 0.0
    %3022 = vmatmul.mubr.f32.gmra.mrb[0].mxu0 %v2619
    %v3023 = vpop.f32.mrb[0].mxu0
    %v3024 = vadd.f32 %v2871, %v3023
    %v3025 = vpop.f32.mrb[0].mxu0
    %3026 = vmatprep.mubr.f32.mxu0 0.0
    %3027 = vmatmul.mubr.f32.gmra.mrb[0].mxu0 %v2622
    %v3028 = vpop.f32.mrb[0].mxu0
    %v3029 = vadd.f32 %v2871, %v3028
    %v3030 = vpop.f32.mrb[0].mxu0
    %3031 = vdwg.mxu0
    %v3032 = vmul.f32 %v2602, %v2775
    %v3033 = vmul.f32 %v2607, %v2780
    %v3034 = vmul.f32 %v2612, %v2785
    %v3036 = vsel %vm169, %v3032, 0
    %v3039 = vsel %vm169, %v3033, 0
    %v3042 = vsel %vm169, %v3034, 0
    %3044 = vmatprep.subr.mxu0 0.0
    %3045 = vmatpush1.msra.mxu0 %v40
    %3046 = vmatprep.subr.mxu0 0.0
    %3047 = vmatpush1.msra.mxu0 %v41
    %3048 = vmatprep.subr.mxu0 0.0
    %3049 = vmatpush1.msra.mxu0 %v42
    %3050 = vmatprep.subr.mxu0 0.0
    %3051 = vmatpush1.msra.mxu0 %v43
    %3052 = vmatprep.subr.mxu0 0.0
    %3053 = vmatpush1.msra.mxu0 0.0
    %3054 = vmatprep.subr.mxu0 0.0
    %3055 = vmatpush1.msra.mxu0 0.0
    %3056 = vmatprep.subr.mxu0 0.0
    %3057 = vmatpush1.msra.mxu0 0.0
    %3058 = vmatprep.subr.mxu0 0.0
    %3059 = vmatpush1.msra.mxu0 0.0
    %3060 = vmatprep.subr.mxu0 0.0
    %3061 = vmatpush1.msra.mxu0 0.0
    %3062 = vmatprep.subr.mxu0 0.0
    %3063 = vmatpush1.msra.mxu0 0.0
    %3064 = vmatprep.subr.mxu0 0.0
    %3065 = vmatpush1.msra.mxu0 0.0
    %3066 = vmatprep.subr.mxu0 0.0
    %3067 = vmatpush1.msra.mxu0 0.0
    %3068 = vmatprep.subr.mxu0 0.0
    %3069 = vmatpush1.msra.mxu0 0.0
    %3070 = vmatprep.subr.mxu0 0.0
    %3071 = vmatpush1.msra.mxu0 0.0
    %3072 = vmatprep.subr.mxu0 0.0
    %3073 = vmatpush1.msra.mxu0 0.0
    %3074 = vmatprep.subr.mxu0 0.0
    %3075 = vmatpush1.msra.mxu0 0.0
    %3076 = vmatprep.subr.mxu0 0.0
    %3077 = vmatpush1.msra.mxu0 0.0
    %3078 = vmatprep.subr.mxu0 0.0
    %3079 = vmatpush1.msra.mxu0 0.0
    %3080 = vmatprep.subr.mxu0 0.0
    %3081 = vmatpush1.msra.mxu0 0.0
    %3082 = vmatprep.subr.mxu0 0.0
    %3083 = vmatpush1.msra.mxu0 0.0
    %3084 = vmatprep.subr.mxu0 0.0
    %3085 = vmatpush1.msra.mxu0 0.0
    %3086 = vmatprep.subr.mxu0 0.0
    %3087 = vmatpush1.msra.mxu0 0.0
    %3088 = vmatprep.subr.mxu0 0.0
    %3089 = vmatpush1.msra.mxu0 0.0
    %3090 = vmatprep.subr.mxu0 0.0
    %3091 = vmatpush1.msra.mxu0 0.0
    %3092 = vmatprep.subr.mxu0 0.0
    %3093 = vmatpush1.msra.mxu0 0.0
    %3094 = vmatprep.subr.mxu0 0.0
    %3095 = vmatpush1.msra.mxu0 0.0
    %3096 = vmatprep.subr.mxu0 0.0
    %3097 = vmatpush1.msra.mxu0 0.0
    %3098 = vmatprep.subr.mxu0 0.0
    %3099 = vmatpush1.msra.mxu0 0.0
    %3100 = vmatprep.subr.mxu0 0.0
    %3101 = vmatpush1.msra.mxu0 0.0
    %3102 = vmatprep.subr.mxu0 0.0
    %3103 = vmatpush1.msra.mxu0 0.0
    %3104 = vmatprep.subr.mxu0 0.0
    %3105 = vmatpush1.msra.mxu0 0.0
    %3106 = vmatprep.subr.mxu0 0.0
    %3107 = vmatpush1.msra.mxu0 0.0
    %3108 = vmatprep.mubr.f32.mxu0 0.0
    %3109 = vmatmul.mubr.f32.gmra.mrb[0].mxu0 %v3036
    %v3110 = vpop.f32.mrb[0].mxu0
    %v3111 = vadd.f32 0.0, %v3110
    %v3112 = vpop.f32.mrb[0].mxu0
    %3113 = vmatprep.mubr.f32.mxu0 0.0
    %3114 = vmatmul.mubr.f32.gmra.mrb[0].mxu0 %v3039
    %v3115 = vpop.f32.mrb[0].mxu0
    %v3116 = vadd.f32 0.0, %v3115
    %v3117 = vpop.f32.mrb[0].mxu0
    %3118 = vmatprep.mubr.f32.mxu0 0.0
    %3119 = vmatmul.mubr.f32.gmra.mrb[0].mxu0 %v3042
    %v3120 = vpop.f32.mrb[0].mxu0
    %v3121 = vadd.f32 0.0, %v3120
    %v3122 = vpop.f32.mrb[0].mxu0
    %3123 = vdwg.mxu0
    %v3124 = vmul.f32 %v3111, 0.35355338
    %v3125 = vmul.f32 %v3116, 0.35355338
    %v3126 = vmul.f32 %v3121, 0.35355338
    %v3127 = vmul.f32 %v2602, %v2855
    %v3128 = vmul.f32 %v2607, %v2860
    %v3129 = vmul.f32 %v2612, %v2865
    %v3131 = vsel %vm169, %v3127, 0
    %v3134 = vsel %vm169, %v3128, 0
    %v3137 = vsel %vm169, %v3129, 0
    %3139 = vmatprep.subr.mxu0 0.0
    %3140 = vmatpush1.msra.mxu0 %v40
    %3141 = vmatprep.subr.mxu0 0.0
    %3142 = vmatpush1.msra.mxu0 %v41
    %3143 = vmatprep.subr.mxu0 0.0
    %3144 = vmatpush1.msra.mxu0 %v42
    %3145 = vmatprep.subr.mxu0 0.0
    %3146 = vmatpush1.msra.mxu0 %v43
    %3147 = vmatprep.subr.mxu0 0.0
    %3148 = vmatpush1.msra.mxu0 0.0
    %3149 = vmatprep.subr.mxu0 0.0
    %3150 = vmatpush1.msra.mxu0 0.0
    %3151 = vmatprep.subr.mxu0 0.0
    %3152 = vmatpush1.msra.mxu0 0.0
    %3153 = vmatprep.subr.mxu0 0.0
    %3154 = vmatpush1.msra.mxu0 0.0
    %3155 = vmatprep.subr.mxu0 0.0
    %3156 = vmatpush1.msra.mxu0 0.0
    %3157 = vmatprep.subr.mxu0 0.0
    %3158 = vmatpush1.msra.mxu0 0.0
    %3159 = vmatprep.subr.mxu0 0.0
    %3160 = vmatpush1.msra.mxu0 0.0
    %3161 = vmatprep.subr.mxu0 0.0
    %3162 = vmatpush1.msra.mxu0 0.0
    %3163 = vmatprep.subr.mxu0 0.0
    %3164 = vmatpush1.msra.mxu0 0.0
    %3165 = vmatprep.subr.mxu0 0.0
    %3166 = vmatpush1.msra.mxu0 0.0
    %3167 = vmatprep.subr.mxu0 0.0
    %3168 = vmatpush1.msra.mxu0 0.0
    %3169 = vmatprep.subr.mxu0 0.0
    %3170 = vmatpush1.msra.mxu0 0.0
    %3171 = vmatprep.subr.mxu0 0.0
    %3172 = vmatpush1.msra.mxu0 0.0
    %3173 = vmatprep.subr.mxu0 0.0
    %3174 = vmatpush1.msra.mxu0 0.0
    %3175 = vmatprep.subr.mxu0 0.0
    %3176 = vmatpush1.msra.mxu0 0.0
    %3177 = vmatprep.subr.mxu0 0.0
    %3178 = vmatpush1.msra.mxu0 0.0
    %3179 = vmatprep.subr.mxu0 0.0
    %3180 = vmatpush1.msra.mxu0 0.0
    %3181 = vmatprep.subr.mxu0 0.0
    %3182 = vmatpush1.msra.mxu0 0.0
    %3183 = vmatprep.subr.mxu0 0.0
    %3184 = vmatpush1.msra.mxu0 0.0
    %3185 = vmatprep.subr.mxu0 0.0
    %3186 = vmatpush1.msra.mxu0 0.0
    %3187 = vmatprep.subr.mxu0 0.0
    %3188 = vmatpush1.msra.mxu0 0.0
    %3189 = vmatprep.subr.mxu0 0.0
    %3190 = vmatpush1.msra.mxu0 0.0
    %3191 = vmatprep.subr.mxu0 0.0
    %3192 = vmatpush1.msra.mxu0 0.0
    %3193 = vmatprep.subr.mxu0 0.0
    %3194 = vmatpush1.msra.mxu0 0.0
    %3195 = vmatprep.subr.mxu0 0.0
    %3196 = vmatpush1.msra.mxu0 0.0
    %3197 = vmatprep.subr.mxu0 0.0
    %3198 = vmatpush1.msra.mxu0 0.0
    %3199 = vmatprep.subr.mxu0 0.0
    %3200 = vmatpush1.msra.mxu0 0.0
    %3201 = vmatprep.subr.mxu0 0.0
    %3202 = vmatpush1.msra.mxu0 0.0
    %3203 = vmatprep.mubr.f32.mxu0 0.0
    %3204 = vmatmul.mubr.f32.gmra.mrb[0].mxu0 %v3131
    %v3205 = vpop.f32.mrb[0].mxu0
    %v3206 = vadd.f32 0.0, %v3205
    %v3207 = vpop.f32.mrb[0].mxu0
    %3208 = vmatprep.mubr.f32.mxu0 0.0
    %3209 = vmatmul.mubr.f32.gmra.mrb[0].mxu0 %v3134
    %v3210 = vpop.f32.mrb[0].mxu0
    %v3211 = vadd.f32 0.0, %v3210
    %v3212 = vpop.f32.mrb[0].mxu0
    %3213 = vmatprep.mubr.f32.mxu0 0.0
    %3214 = vmatmul.mubr.f32.gmra.mrb[0].mxu0 %v3137
    %v3215 = vpop.f32.mrb[0].mxu0
    %v3216 = vadd.f32 0.0, %v3215
    %v3217 = vpop.f32.mrb[0].mxu0
    %3218 = vdwg.mxu0
    %v3219 = vmul.f32 %v3206, 0.35355338
    %v3220 = vmul.f32 %v3211, 0.35355338
    %v3221 = vmul.f32 %v3216, 0.35355338
    %v3222 = vmax.f32 %v3124, %v3219
    %v3223 = vmax.f32 %v3125, %v3220
    %v3224 = vmax.f32 %v3126, %v3221
    %v3225 = vsub.f32 %v3124, %v3222
    %v3226 = vsub.f32 %v3125, %v3223
    %v3227 = vsub.f32 %v3126, %v3224
    %v3228 = vmul.f32 %v3225, 1.442695
    %v3229 = vpow.pop %v3228
    %v3230 = vmul.f32 %v3226, 1.442695
    %v3231 = vpow.pop %v3230
    %v3232 = vmul.f32 %v3227, 1.442695
    %v3233 = vpow.pop %v3232
    %v3234 = vsub.f32 %v3219, %v3222
    %v3235 = vsub.f32 %v3220, %v3223
    %v3236 = vsub.f32 %v3221, %v3224
    %v3237 = vmul.f32 %v3234, 1.442695
    %v3238 = vpow.pop %v3237
    %v3239 = vmul.f32 %v3235, 1.442695
    %v3240 = vpow.pop %v3239
    %v3241 = vmul.f32 %v3236, 1.442695
    %v3242 = vpow.pop %v3241
    %v3243 = vadd.f32 %v3229, %v3238
    %v3244 = vadd.f32 %v3231, %v3240
    %v3245 = vadd.f32 %v3233, %v3242
    %v3246 = vrcp.pop %v3243
    %v3247 = vrcp.pop %v3244
    %v3248 = vrcp.pop %v3245
    %v3249 = vmul.f32 %v3229, %v3246
    %v3250 = vmul.f32 %v3231, %v3247
    %v3251 = vmul.f32 %v3233, %v3248
    %v3253 = vsel %vm961, %v3249, 0
    %v3256 = vsel %vm961, %v3250, 0
    %v3259 = vsel %vm961, %v3251, 0
    %3261 = vmatprep.subr.mxu0 0.0
    %3262 = vmatpush1.msra.mxu0 %v973
    %3263 = vmatprep.subr.mxu0 0.0
    %3264 = vmatpush1.msra.mxu0 0.0
    %3265 = vmatprep.subr.mxu0 0.0
    %3266 = vmatpush1.msra.mxu0 0.0
    %3267 = vmatprep.subr.mxu0 0.0
    %3268 = vmatpush1.msra.mxu0 0.0
    %3269 = vmatprep.subr.mxu0 0.0
    %3270 = vmatpush1.msra.mxu0 0.0
    %3271 = vmatprep.subr.mxu0 0.0
    %3272 = vmatpush1.msra.mxu0 0.0
    %3273 = vmatprep.subr.mxu0 0.0
    %3274 = vmatpush1.msra.mxu0 0.0
    %3275 = vmatprep.subr.mxu0 0.0
    %3276 = vmatpush1.msra.mxu0 0.0
    %3277 = vmatprep.subr.mxu0 0.0
    %3278 = vmatpush1.msra.mxu0 0.0
    %3279 = vmatprep.subr.mxu0 0.0
    %3280 = vmatpush1.msra.mxu0 0.0
    %3281 = vmatprep.subr.mxu0 0.0
    %3282 = vmatpush1.msra.mxu0 0.0
    %3283 = vmatprep.subr.mxu0 0.0
    %3284 = vmatpush1.msra.mxu0 0.0
    %3285 = vmatprep.subr.mxu0 0.0
    %3286 = vmatpush1.msra.mxu0 0.0
    %3287 = vmatprep.subr.mxu0 0.0
    %3288 = vmatpush1.msra.mxu0 0.0
    %3289 = vmatprep.subr.mxu0 0.0
    %3290 = vmatpush1.msra.mxu0 0.0
    %3291 = vmatprep.subr.mxu0 0.0
    %3292 = vmatpush1.msra.mxu0 0.0
    %3293 = vmatprep.subr.mxu0 0.0
    %3294 = vmatpush1.msra.mxu0 0.0
    %3295 = vmatprep.subr.mxu0 0.0
    %3296 = vmatpush1.msra.mxu0 0.0
    %3297 = vmatprep.subr.mxu0 0.0
    %3298 = vmatpush1.msra.mxu0 0.0
    %3299 = vmatprep.subr.mxu0 0.0
    %3300 = vmatpush1.msra.mxu0 0.0
    %3301 = vmatprep.subr.mxu0 0.0
    %3302 = vmatpush1.msra.mxu0 0.0
    %3303 = vmatprep.subr.mxu0 0.0
    %3304 = vmatpush1.msra.mxu0 0.0
    %3305 = vmatprep.subr.mxu0 0.0
    %3306 = vmatpush1.msra.mxu0 0.0
    %3307 = vmatprep.subr.mxu0 0.0
    %3308 = vmatpush1.msra.mxu0 0.0
    %3309 = vmatprep.subr.mxu0 0.0
    %3310 = vmatpush1.msra.mxu0 0.0
    %3311 = vmatprep.subr.mxu0 0.0
    %3312 = vmatpush1.msra.mxu0 0.0
    %3313 = vmatprep.subr.mxu0 0.0
    %3314 = vmatpush1.msra.mxu0 0.0
    %3315 = vmatprep.subr.mxu0 0.0
    %3316 = vmatpush1.msra.mxu0 0.0
    %3317 = vmatprep.subr.mxu0 0.0
    %3318 = vmatpush1.msra.mxu0 0.0
    %3319 = vmatprep.subr.mxu0 0.0
    %3320 = vmatpush1.msra.mxu0 0.0
    %3321 = vmatprep.subr.mxu0 0.0
    %3322 = vmatpush1.msra.mxu0 0.0
    %3323 = vmatprep.subr.mxu0 0.0
    %3324 = vmatpush1.msra.mxu0 0.0
    %3325 = vmatprep.mubr.f32.mxu0 0.0
    %3326 = vmatmul.mubr.f32.gmra.mrb[0].mxu0 %v3253
    %v3327 = vpop.f32.mrb[0].mxu0
    %v3328 = vadd.f32 0.0, %v3327
    %v3329 = vpop.f32.mrb[0].mxu0
    %3330 = vmatprep.mubr.f32.mxu0 0.0
    %3331 = vmatmul.mubr.f32.gmra.mrb[0].mxu0 %v3256
    %v3332 = vpop.f32.mrb[0].mxu0
    %v3333 = vadd.f32 0.0, %v3332
    %v3334 = vpop.f32.mrb[0].mxu0
    %3335 = vmatprep.mubr.f32.mxu0 0.0
    %3336 = vmatmul.mubr.f32.gmra.mrb[0].mxu0 %v3259
    %v3337 = vpop.f32.mrb[0].mxu0
    %v3338 = vadd.f32 0.0, %v3337
    %v3339 = vpop.f32.mrb[0].mxu0
    %3340 = vdwg.mxu0
    %v3341 = vmul.f32 %v3328, %v2939
    %v3342 = vmul.f32 %v3333, %v2944
    %v3343 = vmul.f32 %v3338, %v2949
    %v3344 = vmul.f32 %v3238, %v3246
    %v3345 = vmul.f32 %v3240, %v3247
    %v3346 = vmul.f32 %v3242, %v3248
    %v3348 = vsel %vm961, %v3344, 0
    %v3351 = vsel %vm961, %v3345, 0
    %v3354 = vsel %vm961, %v3346, 0
    %3356 = vmatprep.subr.mxu0 0.0
    %3357 = vmatpush1.msra.mxu0 %v973
    %3358 = vmatprep.subr.mxu0 0.0
    %3359 = vmatpush1.msra.mxu0 0.0
    %3360 = vmatprep.subr.mxu0 0.0
    %3361 = vmatpush1.msra.mxu0 0.0
    %3362 = vmatprep.subr.mxu0 0.0
    %3363 = vmatpush1.msra.mxu0 0.0
    %3364 = vmatprep.subr.mxu0 0.0
    %3365 = vmatpush1.msra.mxu0 0.0
    %3366 = vmatprep.subr.mxu0 0.0
    %3367 = vmatpush1.msra.mxu0 0.0
    %3368 = vmatprep.subr.mxu0 0.0
    %3369 = vmatpush1.msra.mxu0 0.0
    %3370 = vmatprep.subr.mxu0 0.0
    %3371 = vmatpush1.msra.mxu0 0.0
    %3372 = vmatprep.subr.mxu0 0.0
    %3373 = vmatpush1.msra.mxu0 0.0
    %3374 = vmatprep.subr.mxu0 0.0
    %3375 = vmatpush1.msra.mxu0 0.0
    %3376 = vmatprep.subr.mxu0 0.0
    %3377 = vmatpush1.msra.mxu0 0.0
    %3378 = vmatprep.subr.mxu0 0.0
    %3379 = vmatpush1.msra.mxu0 0.0
    %3380 = vmatprep.subr.mxu0 0.0
    %3381 = vmatpush1.msra.mxu0 0.0
    %3382 = vmatprep.subr.mxu0 0.0
    %3383 = vmatpush1.msra.mxu0 0.0
    %3384 = vmatprep.subr.mxu0 0.0
    %3385 = vmatpush1.msra.mxu0 0.0
    %3386 = vmatprep.subr.mxu0 0.0
    %3387 = vmatpush1.msra.mxu0 0.0
    %3388 = vmatprep.subr.mxu0 0.0
    %3389 = vmatpush1.msra.mxu0 0.0
    %3390 = vmatprep.subr.mxu0 0.0
    %3391 = vmatpush1.msra.mxu0 0.0
    %3392 = vmatprep.subr.mxu0 0.0
    %3393 = vmatpush1.msra.mxu0 0.0
    %3394 = vmatprep.subr.mxu0 0.0
    %3395 = vmatpush1.msra.mxu0 0.0
    %3396 = vmatprep.subr.mxu0 0.0
    %3397 = vmatpush1.msra.mxu0 0.0
    %3398 = vmatprep.subr.mxu0 0.0
    %3399 = vmatpush1.msra.mxu0 0.0
    %3400 = vmatprep.subr.mxu0 0.0
    %3401 = vmatpush1.msra.mxu0 0.0
    %3402 = vmatprep.subr.mxu0 0.0
    %3403 = vmatpush1.msra.mxu0 0.0
    %3404 = vmatprep.subr.mxu0 0.0
    %3405 = vmatpush1.msra.mxu0 0.0
    %3406 = vmatprep.subr.mxu0 0.0
    %3407 = vmatpush1.msra.mxu0 0.0
    %3408 = vmatprep.subr.mxu0 0.0
    %3409 = vmatpush1.msra.mxu0 0.0
    %3410 = vmatprep.subr.mxu0 0.0
    %3411 = vmatpush1.msra.mxu0 0.0
    %3412 = vmatprep.subr.mxu0 0.0
    %3413 = vmatpush1.msra.mxu0 0.0
    %3414 = vmatprep.subr.mxu0 0.0
    %3415 = vmatpush1.msra.mxu0 0.0
    %3416 = vmatprep.subr.mxu0 0.0
    %3417 = vmatpush1.msra.mxu0 0.0
    %3418 = vmatprep.subr.mxu0 0.0
    %3419 = vmatpush1.msra.mxu0 0.0
    %3420 = vmatprep.mubr.f32.mxu0 0.0
    %3421 = vmatmul.mubr.f32.gmra.mrb[0].mxu0 %v3348
    %v3422 = vpop.f32.mrb[0].mxu0
    %v3423 = vadd.f32 0.0, %v3422
    %v3424 = vpop.f32.mrb[0].mxu0
    %3425 = vmatprep.mubr.f32.mxu0 0.0
    %3426 = vmatmul.mubr.f32.gmra.mrb[0].mxu0 %v3351
    %v3427 = vpop.f32.mrb[0].mxu0
    %v3428 = vadd.f32 0.0, %v3427
    %v3429 = vpop.f32.mrb[0].mxu0
    %3430 = vmatprep.mubr.f32.mxu0 0.0
    %3431 = vmatmul.mubr.f32.gmra.mrb[0].mxu0 %v3354
    %v3432 = vpop.f32.mrb[0].mxu0
    %v3433 = vadd.f32 0.0, %v3432
    %v3434 = vpop.f32.mrb[0].mxu0
    %3435 = vdwg.mxu0
    %v3436 = vmul.f32 %v3423, %v3019
    %v3437 = vmul.f32 %v3428, %v3024
    %v3438 = vmul.f32 %v3433, %v3029
    %v3439 = vadd.f32 %v3341, %v3436
    %v3440 = vadd.f32 %v3342, %v3437
    %v3441 = vadd.f32 %v3343, %v3438
    %v3442 = vlaneseq
    %v3443 = vshrl.u32 %v3442, 7
    %v3444 = vsub.s32 0, %v3443
    %v3445 = vrot.slane %v2511, %v3444
    %v3447 = vsel %vm169, %v3439, 0
    %v3450 = vsel %vm169, %v3440, 0
    %v3453 = vsel %vm169, %v3441, 0
    %3455 = vmatprep.subr.mxu0 0.0
    %3456 = vmatpush1.msra.mxu0 %v2496
    %3457 = vmatprep.subr.mxu0 0.0
    %3458 = vmatpush1.msra.mxu0 %v2497
    %3459 = vmatprep.subr.mxu0 0.0
    %3460 = vmatpush1.msra.mxu0 %v2498
    %3461 = vmatprep.subr.mxu0 0.0
    %3462 = vmatpush1.msra.mxu0 %v2499
    %3463 = vmatprep.subr.mxu0 0.0
    %3464 = vmatpush1.msra.mxu0 0.0
    %3465 = vmatprep.subr.mxu0 0.0
    %3466 = vmatpush1.msra.mxu0 0.0
    %3467 = vmatprep.subr.mxu0 0.0
    %3468 = vmatpush1.msra.mxu0 0.0
    %3469 = vmatprep.subr.mxu0 0.0
    %3470 = vmatpush1.msra.mxu0 0.0
    %3471 = vmatprep.subr.mxu0 0.0
    %3472 = vmatpush1.msra.mxu0 0.0
    %3473 = vmatprep.subr.mxu0 0.0
    %3474 = vmatpush1.msra.mxu0 0.0
    %3475 = vmatprep.subr.mxu0 0.0
    %3476 = vmatpush1.msra.mxu0 0.0
    %3477 = vmatprep.subr.mxu0 0.0
    %3478 = vmatpush1.msra.mxu0 0.0
    %3479 = vmatprep.subr.mxu0 0.0
    %3480 = vmatpush1.msra.mxu0 0.0
    %3481 = vmatprep.subr.mxu0 0.0
    %3482 = vmatpush1.msra.mxu0 0.0
    %3483 = vmatprep.subr.mxu0 0.0
    %3484 = vmatpush1.msra.mxu0 0.0
    %3485 = vmatprep.subr.mxu0 0.0
    %3486 = vmatpush1.msra.mxu0 0.0
    %3487 = vmatprep.subr.mxu0 0.0
    %3488 = vmatpush1.msra.mxu0 0.0
    %3489 = vmatprep.subr.mxu0 0.0
    %3490 = vmatpush1.msra.mxu0 0.0
    %3491 = vmatprep.subr.mxu0 0.0
    %3492 = vmatpush1.msra.mxu0 0.0
    %3493 = vmatprep.subr.mxu0 0.0
    %3494 = vmatpush1.msra.mxu0 0.0
    %3495 = vmatprep.subr.mxu0 0.0
    %3496 = vmatpush1.msra.mxu0 0.0
    %3497 = vmatprep.subr.mxu0 0.0
    %3498 = vmatpush1.msra.mxu0 0.0
    %3499 = vmatprep.subr.mxu0 0.0
    %3500 = vmatpush1.msra.mxu0 0.0
    %3501 = vmatprep.subr.mxu0 0.0
    %3502 = vmatpush1.msra.mxu0 0.0
    %3503 = vmatprep.subr.mxu0 0.0
    %3504 = vmatpush1.msra.mxu0 0.0
    %3505 = vmatprep.subr.mxu0 0.0
    %3506 = vmatpush1.msra.mxu0 0.0
    %3507 = vmatprep.subr.mxu0 0.0
    %3508 = vmatpush1.msra.mxu0 0.0
    %3509 = vmatprep.subr.mxu0 0.0
    %3510 = vmatpush1.msra.mxu0 0.0
    %3511 = vmatprep.subr.mxu0 0.0
    %3512 = vmatpush1.msra.mxu0 0.0
    %3513 = vmatprep.subr.mxu0 0.0
    %3514 = vmatpush1.msra.mxu0 0.0
    %3515 = vmatprep.subr.mxu0 0.0
    %3516 = vmatpush1.msra.mxu0 0.0
    %3517 = vmatprep.subr.mxu0 0.0
    %3518 = vmatpush1.msra.mxu0 0.0
    %3519 = vmatprep.mubr.f32.mxu0 0.0
    %3520 = vmatmul.mubr.f32.gmra.mrb[0].mxu0 %v3447
    %v3521 = vpop.f32.mrb[0].mxu0
    %v3522 = vadd.f32 %v3445, %v3521
    %v3523 = vpop.f32.mrb[0].mxu0
    %3524 = vmatprep.mubr.f32.mxu0 0.0
    %3525 = vmatmul.mubr.f32.gmra.mrb[0].mxu0 %v3450
    %v3526 = vpop.f32.mrb[0].mxu0
    %v3527 = vadd.f32 %v3445, %v3526
    %v3528 = vpop.f32.mrb[0].mxu0
    %3529 = vmatprep.mubr.f32.mxu0 0.0
    %3530 = vmatmul.mubr.f32.gmra.mrb[0].mxu0 %v3453
    %v3531 = vpop.f32.mrb[0].mxu0
    %v3532 = vadd.f32 %v3445, %v3531
    %v3533 = vpop.f32.mrb[0].mxu0
    %3534 = vdwg.mxu0
    %v3535 = vadd.f32 %v1627, %v3522
    %v3536 = vadd.f32 %v1628, %v3527
    %v3537 = vadd.f32 %v1629, %v3532
    %v3538 = vsel %vm169, %v3535, 0.0
    %3539 = vadd.xlane.f32.xlu0 %v3538
    %v3540 = vpop.xlane.xlu0 %3539
    %v3541 = vsel %vm169, %v3536, 0.0
    %3542 = vadd.xlane.f32.xlu0 %v3541
    %v3543 = vpop.xlane.xlu0 %3542
    %v3544 = vsel %vm169, %v3537, 0.0
    %3545 = vadd.xlane.f32.xlu0 %v3544
    %v3546 = vpop.xlane.xlu0 %3545
    %v3547 = vmul.f32 %v3540, %v1261
    %v3548 = vmul.f32 %v3543, %v1261
    %v3549 = vmul.f32 %v3546, %v1261
    %v3550 = vsub.f32 %v3535, %v3547
    %v3551 = vsub.f32 %v3536, %v3548
    %v3552 = vsub.f32 %v3537, %v3549
    %v3553 = vmul.f32 %v3550, %v3550
    %v3554 = vmul.f32 %v3551, %v3551
    %v3555 = vmul.f32 %v3552, %v3552
    %v3556 = vsel %vm169, %v3553, 0.0
    %3557 = vadd.xlane.f32.xlu0 %v3556
    %v3558 = vpop.xlane.xlu0 %3557
    %v3559 = vsel %vm169, %v3554, 0.0
    %3560 = vadd.xlane.f32.xlu0 %v3559
    %v3561 = vpop.xlane.xlu0 %3560
    %v3562 = vsel %vm169, %v3555, 0.0
    %3563 = vadd.xlane.f32.xlu0 %v3562
    %v3564 = vpop.xlane.xlu0 %3563
    %v3565 = vmul.f32 %v3558, %v1261
    %v3566 = vmul.f32 %v3561, %v1261
    %v3567 = vmul.f32 %v3564, %v1261
    %v3568 = vadd.f32 %v3565, 1e-05
    %v3569 = vadd.f32 %v3566, 1e-05
    %v3570 = vadd.f32 %v3567, 1e-05
    %v3571 = vrsqrt.pop %v3568
    %v3572 = vrsqrt.pop %v3569
    %v3573 = vrsqrt.pop %v3570
    %v3574 = vmul.f32 %v3550, %v3571
    %v3575 = vmul.f32 %v3551, %v3572
    %v3576 = vmul.f32 %v3552, %v3573
    %v3577 = vlaneseq
    %v3578 = vshrl.u32 %v3577, 7
    %v3579 = vsub.s32 0, %v3578
    %v3580 = vrot.slane %v2513, %v3579
    %v3581 = vmul.f32 %v3574, %v3580
    %v3582 = vmul.f32 %v3575, %v3580
    %v3583 = vmul.f32 %v3576, %v3580
    %v3584 = vlaneseq
    %v3585 = vshrl.u32 %v3584, 7
    %v3586 = vsub.s32 0, %v3585
    %v3587 = vrot.slane %v2514, %v3586
    %v3588 = vadd.f32 %v3581, %v3587
    %v3589 = vadd.f32 %v3582, %v3587
    %v3590 = vadd.f32 %v3583, %v3587
    %v3591 = vlaneseq
    %v3592 = vshrl.u32 %v3591, 7
    %v3593 = vsub.s32 0, %v3592
    %v3594 = vrot.slane %v2521, %v3593
    %v3596 = vsel %vm169, %v3588, 0
    %v3599 = vsel %vm169, %v3589, 0
    %v3602 = vsel %vm169, %v3590, 0
    %3604 = vmatprep.subr.mxu0 0.0
    %3605 = vmatpush1.msra.mxu0 %v2517
    %3606 = vmatprep.subr.mxu0 0.0
    %3607 = vmatpush1.msra.mxu0 %v2518
    %3608 = vmatprep.subr.mxu0 0.0
    %3609 = vmatpush1.msra.mxu0 %v2519
    %3610 = vmatprep.subr.mxu0 0.0
    %3611 = vmatpush1.msra.mxu0 %v2520
    %3612 = vmatprep.subr.mxu0 0.0
    %3613 = vmatpush1.msra.mxu0 0.0
    %3614 = vmatprep.subr.mxu0 0.0
    %3615 = vmatpush1.msra.mxu0 0.0
    %3616 = vmatprep.subr.mxu0 0.0
    %3617 = vmatpush1.msra.mxu0 0.0
    %3618 = vmatprep.subr.mxu0 0.0
    %3619 = vmatpush1.msra.mxu0 0.0
    %3620 = vmatprep.subr.mxu0 0.0
    %3621 = vmatpush1.msra.mxu0 0.0
    %3622 = vmatprep.subr.mxu0 0.0
    %3623 = vmatpush1.msra.mxu0 0.0
    %3624 = vmatprep.subr.mxu0 0.0
    %3625 = vmatpush1.msra.mxu0 0.0
    %3626 = vmatprep.subr.mxu0 0.0
    %3627 = vmatpush1.msra.mxu0 0.0
    %3628 = vmatprep.subr.mxu0 0.0
    %3629 = vmatpush1.msra.mxu0 0.0
    %3630 = vmatprep.subr.mxu0 0.0
    %3631 = vmatpush1.msra.mxu0 0.0
    %3632 = vmatprep.subr.mxu0 0.0
    %3633 = vmatpush1.msra.mxu0 0.0
    %3634 = vmatprep.subr.mxu0 0.0
    %3635 = vmatpush1.msra.mxu0 0.0
    %3636 = vmatprep.subr.mxu0 0.0
    %3637 = vmatpush1.msra.mxu0 0.0
    %3638 = vmatprep.subr.mxu0 0.0
    %3639 = vmatpush1.msra.mxu0 0.0
    %3640 = vmatprep.subr.mxu0 0.0
    %3641 = vmatpush1.msra.mxu0 0.0
    %3642 = vmatprep.subr.mxu0 0.0
    %3643 = vmatpush1.msra.mxu0 0.0
    %3644 = vmatprep.subr.mxu0 0.0
    %3645 = vmatpush1.msra.mxu0 0.0
    %3646 = vmatprep.subr.mxu0 0.0
    %3647 = vmatpush1.msra.mxu0 0.0
    %3648 = vmatprep.subr.mxu0 0.0
    %3649 = vmatpush1.msra.mxu0 0.0
    %3650 = vmatprep.subr.mxu0 0.0
    %3651 = vmatpush1.msra.mxu0 0.0
    %3652 = vmatprep.subr.mxu0 0.0
    %3653 = vmatpush1.msra.mxu0 0.0
    %3654 = vmatprep.subr.mxu0 0.0
    %3655 = vmatpush1.msra.mxu0 0.0
    %3656 = vmatprep.subr.mxu0 0.0
    %3657 = vmatpush1.msra.mxu0 0.0
    %3658 = vmatprep.subr.mxu0 0.0
    %3659 = vmatpush1.msra.mxu0 0.0
    %3660 = vmatprep.subr.mxu0 0.0
    %3661 = vmatpush1.msra.mxu0 0.0
    %3662 = vmatprep.subr.mxu0 0.0
    %3663 = vmatpush1.msra.mxu0 0.0
    %3664 = vmatprep.subr.mxu0 0.0
    %3665 = vmatpush1.msra.mxu0 0.0
    %3666 = vmatprep.subr.mxu0 0.0
    %3667 = vmatpush1.msra.mxu0 0.0
    %3668 = vmatprep.mubr.f32.mxu0 0.0
    %3669 = vmatmul.mubr.f32.gmra.mrb[0].mxu0 %v3596
    %v3670 = vpop.f32.mrb[0].mxu0
    %v3671 = vadd.f32 %v3594, %v3670
    %v3672 = vpop.f32.mrb[0].mxu0
    %3673 = vmatprep.mubr.f32.mxu0 0.0
    %3674 = vmatmul.mubr.f32.gmra.mrb[0].mxu0 %v3599
    %v3675 = vpop.f32.mrb[0].mxu0
    %v3676 = vadd.f32 %v3594, %v3675
    %v3677 = vpop.f32.mrb[0].mxu0
    %3678 = vmatprep.mubr.f32.mxu0 0.0
    %3679 = vmatmul.mubr.f32.gmra.mrb[0].mxu0 %v3602
    %v3680 = vpop.f32.mrb[0].mxu0
    %v3681 = vadd.f32 %v3594, %v3680
    %v3682 = vpop.f32.mrb[0].mxu0
    %3683 = vdwg.mxu0
    %v3684 = vmul.f32 %v3671, 0.5
    %v3685 = vmul.f32 %v3676, 0.5
    %v3686 = vmul.f32 %v3681, 0.5
    %v3687 = vmul.f32 %v3671, 0.70710677
    %v3688 = vmul.f32 %v3676, 0.70710677
    %v3689 = vmul.f32 %v3681, 0.70710677
    %vm3690 = vcmp.ge.f32.partialorder %v3687, 0.0
    %vm3691 = vcmp.ge.f32.partialorder %v3688, 0.0
    %vm3692 = vcmp.ge.f32.partialorder %v3689, 0.0
    %v3693 = vsel %vm3690, 1.0, -1.0
    %v3694 = vsel %vm3691, 1.0, -1.0
    %v3695 = vsel %vm3692, 1.0, -1.0
    %v3696 = vand.u32 2147483647, %v3687
    %v3697 = vand.u32 2147483647, %v3688
    %v3698 = vand.u32 2147483647, %v3689
    %v3699 = vmul.f32 %v3696, 0.3275911
    %v3700 = vmul.f32 %v3697, 0.3275911
    %v3701 = vmul.f32 %v3698, 0.3275911
    %v3702 = vadd.f32 %v3699, 1.0
    %v3703 = vadd.f32 %v3700, 1.0
    %v3704 = vadd.f32 %v3701, 1.0
    %v3705 = vrcp.pop %v3702
    %v3706 = vmul.f32 1.0, %v3705
    %v3707 = vrcp.pop %v3703
    %v3708 = vmul.f32 1.0, %v3707
    %v3709 = vrcp.pop %v3704
    %v3710 = vmul.f32 1.0, %v3709
    %v3711 = vmul.f32 %v3706, 1.0614054
    %v3712 = vmul.f32 %v3708, 1.0614054
    %v3713 = vmul.f32 %v3710, 1.0614054
    %v3714 = vadd.f32 %v3711, -1.4531521
    %v3715 = vadd.f32 %v3712, -1.4531521
    %v3716 = vadd.f32 %v3713, -1.4531521
    %v3717 = vmul.f32 %v3714, %v3706
    %v3718 = vmul.f32 %v3715, %v3708
    %v3719 = vmul.f32 %v3716, %v3710
    %v3720 = vadd.f32 %v3717, 1.4214138
    %v3721 = vadd.f32 %v3718, 1.4214138
    %v3722 = vadd.f32 %v3719, 1.4214138
    %v3723 = vmul.f32 %v3720, %v3706
    %v3724 = vmul.f32 %v3721, %v3708
    %v3725 = vmul.f32 %v3722, %v3710
    %v3726 = vadd.f32 %v3723, -0.28449672
    %v3727 = vadd.f32 %v3724, -0.28449672
    %v3728 = vadd.f32 %v3725, -0.28449672
    %v3729 = vmul.f32 %v3726, %v3706
    %v3730 = vmul.f32 %v3727, %v3708
    %v3731 = vmul.f32 %v3728, %v3710
    %v3732 = vadd.f32 %v3729, 0.2548296
    %v3733 = vadd.f32 %v3730, 0.2548296
    %v3734 = vadd.f32 %v3731, 0.2548296
    %v3735 = vmul.f32 %v3732, %v3706
    %v3736 = vmul.f32 %v3733, %v3708
    %v3737 = vmul.f32 %v3734, %v3710
    %v3738 = vsub.f32 0.0, %v3696
    %v3739 = vsub.f32 0.0, %v3697
    %v3740 = vsub.f32 0.0, %v3698
    %v3741 = vmul.f32 %v3738, %v3696
    %v3742 = vmul.f32 %v3739, %v3697
    %v3743 = vmul.f32 %v3740, %v3698
    %v3744 = vmul.f32 %v3741, 1.442695
    %v3745 = vpow.pop %v3744
    %v3746 = vmul.f32 %v3742, 1.442695
    %v3747 = vpow.pop %v3746
    %v3748 = vmul.f32 %v3743, 1.442695
    %v3749 = vpow.pop %v3748
    %v3750 = vmul.f32 %v3735, %v3745
    %v3751 = vmul.f32 %v3736, %v3747
    %v3752 = vmul.f32 %v3737, %v3749
    %v3753 = vsub.f32 1.0, %v3750
    %v3754 = vsub.f32 1.0, %v3751
    %v3755 = vsub.f32 1.0, %v3752
    %v3756 = vmul.f32 %v3693, %v3753
    %v3757 = vmul.f32 %v3694, %v3754
    %v3758 = vmul.f32 %v3695, %v3755
    %v3759 = vadd.f32 %v3756, 1.0
    %v3760 = vadd.f32 %v3757, 1.0
    %v3761 = vadd.f32 %v3758, 1.0
    %v3762 = vmul.f32 %v3684, %v3759
    %v3763 = vmul.f32 %v3685, %v3760
    %v3764 = vmul.f32 %v3686, %v3761
    %v3765 = vlaneseq
    %v3766 = vshrl.u32 %v3765, 7
    %v3767 = vsub.s32 0, %v3766
    %v3768 = vrot.slane %v2512, %v3767
    %v3770 = vsel %vm1484, %v3762, 0
    %v3773 = vsel %vm1484, %v3763, 0
    %v3776 = vsel %vm1484, %v3764, 0
    %3778 = vmatprep.subr.mxu0 0.0
    %3779 = vmatpush1.msra.mxu0 %v2500
    %3780 = vmatprep.subr.mxu0 0.0
    %3781 = vmatpush1.msra.mxu0 %v2501
    %3782 = vmatprep.subr.mxu0 0.0
    %3783 = vmatpush1.msra.mxu0 %v2502
    %3784 = vmatprep.subr.mxu0 0.0
    %3785 = vmatpush1.msra.mxu0 %v2503
    %3786 = vmatprep.subr.mxu0 0.0
    %3787 = vmatpush1.msra.mxu0 %v2504
    %3788 = vmatprep.subr.mxu0 0.0
    %3789 = vmatpush1.msra.mxu0 %v2505
    %3790 = vmatprep.subr.mxu0 0.0
    %3791 = vmatpush1.msra.mxu0 %v2506
    %3792 = vmatprep.subr.mxu0 0.0
    %3793 = vmatpush1.msra.mxu0 %v2507
    %3794 = vmatprep.subr.mxu0 0.0
    %3795 = vmatpush1.msra.mxu0 0.0
    %3796 = vmatprep.subr.mxu0 0.0
    %3797 = vmatpush1.msra.mxu0 0.0
    %3798 = vmatprep.subr.mxu0 0.0
    %3799 = vmatpush1.msra.mxu0 0.0
    %3800 = vmatprep.subr.mxu0 0.0
    %3801 = vmatpush1.msra.mxu0 0.0
    %3802 = vmatprep.subr.mxu0 0.0
    %3803 = vmatpush1.msra.mxu0 0.0
    %3804 = vmatprep.subr.mxu0 0.0
    %3805 = vmatpush1.msra.mxu0 0.0
    %3806 = vmatprep.subr.mxu0 0.0
    %3807 = vmatpush1.msra.mxu0 0.0
    %3808 = vmatprep.subr.mxu0 0.0
    %3809 = vmatpush1.msra.mxu0 0.0
    %3810 = vmatprep.subr.mxu0 0.0
    %3811 = vmatpush1.msra.mxu0 0.0
    %3812 = vmatprep.subr.mxu0 0.0
    %3813 = vmatpush1.msra.mxu0 0.0
    %3814 = vmatprep.subr.mxu0 0.0
    %3815 = vmatpush1.msra.mxu0 0.0
    %3816 = vmatprep.subr.mxu0 0.0
    %3817 = vmatpush1.msra.mxu0 0.0
    %3818 = vmatprep.subr.mxu0 0.0
    %3819 = vmatpush1.msra.mxu0 0.0
    %3820 = vmatprep.subr.mxu0 0.0
    %3821 = vmatpush1.msra.mxu0 0.0
    %3822 = vmatprep.subr.mxu0 0.0
    %3823 = vmatpush1.msra.mxu0 0.0
    %3824 = vmatprep.subr.mxu0 0.0
    %3825 = vmatpush1.msra.mxu0 0.0
    %3826 = vmatprep.subr.mxu0 0.0
    %3827 = vmatpush1.msra.mxu0 0.0
    %3828 = vmatprep.subr.mxu0 0.0
    %3829 = vmatpush1.msra.mxu0 0.0
    %3830 = vmatprep.subr.mxu0 0.0
    %3831 = vmatpush1.msra.mxu0 0.0
    %3832 = vmatprep.subr.mxu0 0.0
    %3833 = vmatpush1.msra.mxu0 0.0
    %3834 = vmatprep.subr.mxu0 0.0
    %3835 = vmatpush1.msra.mxu0 0.0
    %3836 = vmatprep.subr.mxu0 0.0
    %3837 = vmatpush1.msra.mxu0 0.0
    %3838 = vmatprep.subr.mxu0 0.0
    %3839 = vmatpush1.msra.mxu0 0.0
    %3840 = vmatprep.subr.mxu0 0.0
    %3841 = vmatpush1.msra.mxu0 0.0
    %3842 = vmatprep.mubr.f32.mxu0 0.0
    %3843 = vmatmul.mubr.f32.gmra.mrb[0].mxu0 %v3770
    %v3844 = vpop.f32.mrb[0].mxu0
    %v3845 = vpop.f32.mrb[0].mxu0
    %3846 = vmatprep.mubr.f32.mxu0 0.0
    %3847 = vmatmul.mubr.f32.gmra.mrb[0].mxu0 %v3773
    %v3848 = vpop.f32.mrb[0].mxu0
    %v3849 = vpop.f32.mrb[0].mxu0
    %3850 = vmatprep.mubr.f32.mxu0 0.0
    %3851 = vmatmul.mubr.f32.gmra.mrb[0].mxu0 %v3776
    %v3852 = vpop.f32.mrb[0].mxu0
    %v3853 = vadd.f32 %v3768, %v3852
    %v3854 = vpop.f32.mrb[0].mxu0
    %3855 = vdwg.mxu0
    %v3856 = vadd.f32 %v3590, %v3853
    %v3857 = vsel %vm169, %v3856, 0.0
    %3858 = vadd.xlane.f32.xlu0 %v3857
    %v3859 = vpop.xlane.xlu0 %3858
    %v3860 = vmul.f32 %v3859, %v1261
    %v3861 = vsub.f32 %v3856, %v3860
    %v3862 = vmul.f32 %v3861, %v3861
    %v3863 = vsel %vm169, %v3862, 0.0
    %3864 = vadd.xlane.f32.xlu0 %v3863
    %v3865 = vpop.xlane.xlu0 %3864
    %v3866 = vmul.f32 %v3865, %v1261
    %v3867 = vadd.f32 %v3866, 1e-05
    %v3868 = vrsqrt.pop %v3867
    %v3869 = vmul.f32 %v3861, %v3868
    %v3870 = vlaneseq
    %v3871 = vshrl.u32 %v3870, 7
    %v3872 = vsub.s32 0, %v3871
    %v3873 = vrot.slane %v2515, %v3872
    %v3874 = vmul.f32 %v3869, %v3873
    %v3875 = vlaneseq
    %v3876 = vshrl.u32 %v3875, 7
    %v3877 = vsub.s32 0, %v3876
    %v3878 = vrot.slane %v2516, %v3877
    %v3879 = vadd.f32 %v3874, %v3878
    %v3880 = vmul.f32 %v2691, %v2775
    %v3881 = vmul.f32 %v2696, %v2780
    %v3882 = vmul.f32 %v2701, %v2785
    %v3884 = vsel %vm169, %v3880, 0
    %v3887 = vsel %vm169, %v3881, 0
    %v3890 = vsel %vm169, %v3882, 0
    %3892 = vmatprep.subr.mxu0 0.0
    %3893 = vmatpush1.msra.mxu0 %v40
    %3894 = vmatprep.subr.mxu0 0.0
    %3895 = vmatpush1.msra.mxu0 %v41
    %3896 = vmatprep.subr.mxu0 0.0
    %3897 = vmatpush1.msra.mxu0 %v42
    %3898 = vmatprep.subr.mxu0 0.0
    %3899 = vmatpush1.msra.mxu0 %v43
    %3900 = vmatprep.subr.mxu0 0.0
    %3901 = vmatpush1.msra.mxu0 0.0
    %3902 = vmatprep.subr.mxu0 0.0
    %3903 = vmatpush1.msra.mxu0 0.0
    %3904 = vmatprep.subr.mxu0 0.0
    %3905 = vmatpush1.msra.mxu0 0.0
    %3906 = vmatprep.subr.mxu0 0.0
    %3907 = vmatpush1.msra.mxu0 0.0
    %3908 = vmatprep.subr.mxu0 0.0
    %3909 = vmatpush1.msra.mxu0 0.0
    %3910 = vmatprep.subr.mxu0 0.0
    %3911 = vmatpush1.msra.mxu0 0.0
    %3912 = vmatprep.subr.mxu0 0.0
    %3913 = vmatpush1.msra.mxu0 0.0
    %3914 = vmatprep.subr.mxu0 0.0
    %3915 = vmatpush1.msra.mxu0 0.0
    %3916 = vmatprep.subr.mxu0 0.0
    %3917 = vmatpush1.msra.mxu0 0.0
    %3918 = vmatprep.subr.mxu0 0.0
    %3919 = vmatpush1.msra.mxu0 0.0
    %3920 = vmatprep.subr.mxu0 0.0
    %3921 = vmatpush1.msra.mxu0 0.0
    %3922 = vmatprep.subr.mxu0 0.0
    %3923 = vmatpush1.msra.mxu0 0.0
    %3924 = vmatprep.subr.mxu0 0.0
    %3925 = vmatpush1.msra.mxu0 0.0
    %3926 = vmatprep.subr.mxu0 0.0
    %3927 = vmatpush1.msra.mxu0 0.0
    %3928 = vmatprep.subr.mxu0 0.0
    %3929 = vmatpush1.msra.mxu0 0.0
    %3930 = vmatprep.subr.mxu0 0.0
    %3931 = vmatpush1.msra.mxu0 0.0
    %3932 = vmatprep.subr.mxu0 0.0
    %3933 = vmatpush1.msra.mxu0 0.0
    %3934 = vmatprep.subr.mxu0 0.0
    %3935 = vmatpush1.msra.mxu0 0.0
    %3936 = vmatprep.subr.mxu0 0.0
    %3937 = vmatpush1.msra.mxu0 0.0
    %3938 = vmatprep.subr.mxu0 0.0
    %3939 = vmatpush1.msra.mxu0 0.0
    %3940 = vmatprep.subr.mxu0 0.0
    %3941 = vmatpush1.msra.mxu0 0.0
    %3942 = vmatprep.subr.mxu0 0.0
    %3943 = vmatpush1.msra.mxu0 0.0
    %3944 = vmatprep.subr.mxu0 0.0
    %3945 = vmatpush1.msra.mxu0 0.0
    %3946 = vmatprep.subr.mxu0 0.0
    %3947 = vmatpush1.msra.mxu0 0.0
    %3948 = vmatprep.subr.mxu0 0.0
    %3949 = vmatpush1.msra.mxu0 0.0
    %3950 = vmatprep.subr.mxu0 0.0
    %3951 = vmatpush1.msra.mxu0 0.0
    %3952 = vmatprep.subr.mxu0 0.0
    %3953 = vmatpush1.msra.mxu0 0.0
    %3954 = vmatprep.subr.mxu0 0.0
    %3955 = vmatpush1.msra.mxu0 0.0
    %3956 = vmatprep.mubr.f32.mxu0 0.0
    %3957 = vmatmul.mubr.f32.gmra.mrb[0].mxu0 %v3884
    %v3958 = vpop.f32.mrb[0].mxu0
    %v3959 = vadd.f32 0.0, %v3958
    %v3960 = vpop.f32.mrb[0].mxu0
    %3961 = vmatprep.mubr.f32.mxu0 0.0
    %3962 = vmatmul.mubr.f32.gmra.mrb[0].mxu0 %v3887
    %v3963 = vpop.f32.mrb[0].mxu0
    %v3964 = vadd.f32 0.0, %v3963
    %v3965 = vpop.f32.mrb[0].mxu0
    %3966 = vmatprep.mubr.f32.mxu0 0.0
    %3967 = vmatmul.mubr.f32.gmra.mrb[0].mxu0 %v3890
    %v3968 = vpop.f32.mrb[0].mxu0
    %v3969 = vadd.f32 0.0, %v3968
    %v3970 = vpop.f32.mrb[0].mxu0
    %3971 = vdwg.mxu0
    %v3972 = vmul.f32 %v3959, 0.35355338
    %v3973 = vmul.f32 %v3964, 0.35355338
    %v3974 = vmul.f32 %v3969, 0.35355338
    %v3975 = vmul.f32 %v2691, %v2855
    %v3976 = vmul.f32 %v2696, %v2860
    %v3977 = vmul.f32 %v2701, %v2865
    %v3979 = vsel %vm169, %v3975, 0
    %v3982 = vsel %vm169, %v3976, 0
    %v3985 = vsel %vm169, %v3977, 0
    %3987 = vmatprep.subr.mxu0 0.0
    %3988 = vmatpush1.msra.mxu0 %v40
    %3989 = vmatprep.subr.mxu0 0.0
    %3990 = vmatpush1.msra.mxu0 %v41
    %3991 = vmatprep.subr.mxu0 0.0
    %3992 = vmatpush1.msra.mxu0 %v42
    %3993 = vmatprep.subr.mxu0 0.0
    %3994 = vmatpush1.msra.mxu0 %v43
    %3995 = vmatprep.subr.mxu0 0.0
    %3996 = vmatpush1.msra.mxu0 0.0
    %3997 = vmatprep.subr.mxu0 0.0
    %3998 = vmatpush1.msra.mxu0 0.0
    %3999 = vmatprep.subr.mxu0 0.0
    %4000 = vmatpush1.msra.mxu0 0.0
    %4001 = vmatprep.subr.mxu0 0.0
    %4002 = vmatpush1.msra.mxu0 0.0
    %4003 = vmatprep.subr.mxu0 0.0
    %4004 = vmatpush1.msra.mxu0 0.0
    %4005 = vmatprep.subr.mxu0 0.0
    %4006 = vmatpush1.msra.mxu0 0.0
    %4007 = vmatprep.subr.mxu0 0.0
    %4008 = vmatpush1.msra.mxu0 0.0
    %4009 = vmatprep.subr.mxu0 0.0
    %4010 = vmatpush1.msra.mxu0 0.0
    %4011 = vmatprep.subr.mxu0 0.0
    %4012 = vmatpush1.msra.mxu0 0.0
    %4013 = vmatprep.subr.mxu0 0.0
    %4014 = vmatpush1.msra.mxu0 0.0
    %4015 = vmatprep.subr.mxu0 0.0
    %4016 = vmatpush1.msra.mxu0 0.0
    %4017 = vmatprep.subr.mxu0 0.0
    %4018 = vmatpush1.msra.mxu0 0.0
    %4019 = vmatprep.subr.mxu0 0.0
    %4020 = vmatpush1.msra.mxu0 0.0
    %4021 = vmatprep.subr.mxu0 0.0
    %4022 = vmatpush1.msra.mxu0 0.0
    %4023 = vmatprep.subr.mxu0 0.0
    %4024 = vmatpush1.msra.mxu0 0.0
    %4025 = vmatprep.subr.mxu0 0.0
    %4026 = vmatpush1.msra.mxu0 0.0
    %4027 = vmatprep.subr.mxu0 0.0
    %4028 = vmatpush1.msra.mxu0 0.0
    %4029 = vmatprep.subr.mxu0 0.0
    %4030 = vmatpush1.msra.mxu0 0.0
    %4031 = vmatprep.subr.mxu0 0.0
    %4032 = vmatpush1.msra.mxu0 0.0
    %4033 = vmatprep.subr.mxu0 0.0
    %4034 = vmatpush1.msra.mxu0 0.0
    %4035 = vmatprep.subr.mxu0 0.0
    %4036 = vmatpush1.msra.mxu0 0.0
    %4037 = vmatprep.subr.mxu0 0.0
    %4038 = vmatpush1.msra.mxu0 0.0
    %4039 = vmatprep.subr.mxu0 0.0
    %4040 = vmatpush1.msra.mxu0 0.0
    %4041 = vmatprep.subr.mxu0 0.0
    %4042 = vmatpush1.msra.mxu0 0.0
    %4043 = vmatprep.subr.mxu0 0.0
    %4044 = vmatpush1.msra.mxu0 0.0
    %4045 = vmatprep.subr.mxu0 0.0
    %4046 = vmatpush1.msra.mxu0 0.0
    %4047 = vmatprep.subr.mxu0 0.0
    %4048 = vmatpush1.msra.mxu0 0.0
    %4049 = vmatprep.subr.mxu0 0.0
    %4050 = vmatpush1.msra.mxu0 0.0
    %4051 = vmatprep.mubr.f32.mxu0 0.0
    %4052 = vmatmul.mubr.f32.gmra.mrb[0].mxu0 %v3979
    %v4053 = vpop.f32.mrb[0].mxu0
    %v4054 = vadd.f32 0.0, %v4053
    %v4055 = vpop.f32.mrb[0].mxu0
    %4056 = vmatprep.mubr.f32.mxu0 0.0
    %4057 = vmatmul.mubr.f32.gmra.mrb[0].mxu0 %v3982
    %v4058 = vpop.f32.mrb[0].mxu0
    %v4059 = vadd.f32 0.0, %v4058
    %v4060 = vpop.f32.mrb[0].mxu0
    %4061 = vmatprep.mubr.f32.mxu0 0.0
    %4062 = vmatmul.mubr.f32.gmra.mrb[0].mxu0 %v3985
    %v4063 = vpop.f32.mrb[0].mxu0
    %v4064 = vadd.f32 0.0, %v4063
    %v4065 = vpop.f32.mrb[0].mxu0
    %4066 = vdwg.mxu0
    %v4067 = vmul.f32 %v4054, 0.35355338
    %v4068 = vmul.f32 %v4059, 0.35355338
    %v4069 = vmul.f32 %v4064, 0.35355338
    %v4070 = vmax.f32 %v3972, %v4067
    %v4071 = vmax.f32 %v3973, %v4068
    %v4072 = vmax.f32 %v3974, %v4069
    %v4073 = vsub.f32 %v3972, %v4070
    %v4074 = vsub.f32 %v3973, %v4071
    %v4075 = vsub.f32 %v3974, %v4072
    %v4076 = vmul.f32 %v4073, 1.442695
    %v4077 = vpow.pop %v4076
    %v4078 = vmul.f32 %v4074, 1.442695
    %v4079 = vpow.pop %v4078
    %v4080 = vmul.f32 %v4075, 1.442695
    %v4081 = vpow.pop %v4080
    %v4082 = vsub.f32 %v4067, %v4070
    %v4083 = vsub.f32 %v4068, %v4071
    %v4084 = vsub.f32 %v4069, %v4072
    %v4085 = vmul.f32 %v4082, 1.442695
    %v4086 = vpow.pop %v4085
    %v4087 = vmul.f32 %v4083, 1.442695
    %v4088 = vpow.pop %v4087
    %v4089 = vmul.f32 %v4084, 1.442695
    %v4090 = vpow.pop %v4089
    %v4091 = vadd.f32 %v4077, %v4086
    %v4092 = vadd.f32 %v4079, %v4088
    %v4093 = vadd.f32 %v4081, %v4090
    %v4094 = vrcp.pop %v4091
    %v4095 = vrcp.pop %v4092
    %v4096 = vrcp.pop %v4093
    %v4097 = vmul.f32 %v4077, %v4094
    %v4098 = vmul.f32 %v4079, %v4095
    %v4099 = vmul.f32 %v4081, %v4096
    %v4101 = vsel %vm961, %v4097, 0
    %v4104 = vsel %vm961, %v4098, 0
    %v4107 = vsel %vm961, %v4099, 0
    %4109 = vmatprep.subr.mxu0 0.0
    %4110 = vmatpush1.msra.mxu0 %v973
    %4111 = vmatprep.subr.mxu0 0.0
    %4112 = vmatpush1.msra.mxu0 0.0
    %4113 = vmatprep.subr.mxu0 0.0
    %4114 = vmatpush1.msra.mxu0 0.0
    %4115 = vmatprep.subr.mxu0 0.0
    %4116 = vmatpush1.msra.mxu0 0.0
    %4117 = vmatprep.subr.mxu0 0.0
    %4118 = vmatpush1.msra.mxu0 0.0
    %4119 = vmatprep.subr.mxu0 0.0
    %4120 = vmatpush1.msra.mxu0 0.0
    %4121 = vmatprep.subr.mxu0 0.0
    %4122 = vmatpush1.msra.mxu0 0.0
    %4123 = vmatprep.subr.mxu0 0.0
    %4124 = vmatpush1.msra.mxu0 0.0
    %4125 = vmatprep.subr.mxu0 0.0
    %4126 = vmatpush1.msra.mxu0 0.0
    %4127 = vmatprep.subr.mxu0 0.0
    %4128 = vmatpush1.msra.mxu0 0.0
    %4129 = vmatprep.subr.mxu0 0.0
    %4130 = vmatpush1.msra.mxu0 0.0
    %4131 = vmatprep.subr.mxu0 0.0
    %4132 = vmatpush1.msra.mxu0 0.0
    %4133 = vmatprep.subr.mxu0 0.0
    %4134 = vmatpush1.msra.mxu0 0.0
    %4135 = vmatprep.subr.mxu0 0.0
    %4136 = vmatpush1.msra.mxu0 0.0
    %4137 = vmatprep.subr.mxu0 0.0
    %4138 = vmatpush1.msra.mxu0 0.0
    %4139 = vmatprep.subr.mxu0 0.0
    %4140 = vmatpush1.msra.mxu0 0.0
    %4141 = vmatprep.subr.mxu0 0.0
    %4142 = vmatpush1.msra.mxu0 0.0
    %4143 = vmatprep.subr.mxu0 0.0
    %4144 = vmatpush1.msra.mxu0 0.0
    %4145 = vmatprep.subr.mxu0 0.0
    %4146 = vmatpush1.msra.mxu0 0.0
    %4147 = vmatprep.subr.mxu0 0.0
    %4148 = vmatpush1.msra.mxu0 0.0
    %4149 = vmatprep.subr.mxu0 0.0
    %4150 = vmatpush1.msra.mxu0 0.0
    %4151 = vmatprep.subr.mxu0 0.0
    %4152 = vmatpush1.msra.mxu0 0.0
    %4153 = vmatprep.subr.mxu0 0.0
    %4154 = vmatpush1.msra.mxu0 0.0
    %4155 = vmatprep.subr.mxu0 0.0
    %4156 = vmatpush1.msra.mxu0 0.0
    %4157 = vmatprep.subr.mxu0 0.0
    %4158 = vmatpush1.msra.mxu0 0.0
    %4159 = vmatprep.subr.mxu0 0.0
    %4160 = vmatpush1.msra.mxu0 0.0
    %4161 = vmatprep.subr.mxu0 0.0
    %4162 = vmatpush1.msra.mxu0 0.0
    %4163 = vmatprep.subr.mxu0 0.0
    %4164 = vmatpush1.msra.mxu0 0.0
    %4165 = vmatprep.subr.mxu0 0.0
    %4166 = vmatpush1.msra.mxu0 0.0
    %4167 = vmatprep.subr.mxu0 0.0
    %4168 = vmatpush1.msra.mxu0 0.0
    %4169 = vmatprep.subr.mxu0 0.0
    %4170 = vmatpush1.msra.mxu0 0.0
    %4171 = vmatprep.subr.mxu0 0.0
    %4172 = vmatpush1.msra.mxu0 0.0
    %4173 = vmatprep.mubr.f32.mxu0 0.0
    %4174 = vmatmul.mubr.f32.gmra.mrb[0].mxu0 %v4101
    %v4175 = vpop.f32.mrb[0].mxu0
    %v4176 = vadd.f32 0.0, %v4175
    %v4177 = vpop.f32.mrb[0].mxu0
    %4178 = vmatprep.mubr.f32.mxu0 0.0
    %4179 = vmatmul.mubr.f32.gmra.mrb[0].mxu0 %v4104
    %v4180 = vpop.f32.mrb[0].mxu0
    %v4181 = vadd.f32 0.0, %v4180
    %v4182 = vpop.f32.mrb[0].mxu0
    %4183 = vmatprep.mubr.f32.mxu0 0.0
    %4184 = vmatmul.mubr.f32.gmra.mrb[0].mxu0 %v4107
    %v4185 = vpop.f32.mrb[0].mxu0
    %v4186 = vadd.f32 0.0, %v4185
    %v4187 = vpop.f32.mrb[0].mxu0
    %4188 = vdwg.mxu0
    %v4189 = vmul.f32 %v4176, %v2939
    %v4190 = vmul.f32 %v4181, %v2944
    %v4191 = vmul.f32 %v4186, %v2949
    %v4192 = vmul.f32 %v4086, %v4094
    %v4193 = vmul.f32 %v4088, %v4095
    %v4194 = vmul.f32 %v4090, %v4096
    %v4196 = vsel %vm961, %v4192, 0
    %v4199 = vsel %vm961, %v4193, 0
    %v4202 = vsel %vm961, %v4194, 0
    %4204 = vmatprep.subr.mxu0 0.0
    %4205 = vmatpush1.msra.mxu0 %v973
    %4206 = vmatprep.subr.mxu0 0.0
    %4207 = vmatpush1.msra.mxu0 0.0
    %4208 = vmatprep.subr.mxu0 0.0
    %4209 = vmatpush1.msra.mxu0 0.0
    %4210 = vmatprep.subr.mxu0 0.0
    %4211 = vmatpush1.msra.mxu0 0.0
    %4212 = vmatprep.subr.mxu0 0.0
    %4213 = vmatpush1.msra.mxu0 0.0
    %4214 = vmatprep.subr.mxu0 0.0
    %4215 = vmatpush1.msra.mxu0 0.0
    %4216 = vmatprep.subr.mxu0 0.0
    %4217 = vmatpush1.msra.mxu0 0.0
    %4218 = vmatprep.subr.mxu0 0.0
    %4219 = vmatpush1.msra.mxu0 0.0
    %4220 = vmatprep.subr.mxu0 0.0
    %4221 = vmatpush1.msra.mxu0 0.0
    %4222 = vmatprep.subr.mxu0 0.0
    %4223 = vmatpush1.msra.mxu0 0.0
    %4224 = vmatprep.subr.mxu0 0.0
    %4225 = vmatpush1.msra.mxu0 0.0
    %4226 = vmatprep.subr.mxu0 0.0
    %4227 = vmatpush1.msra.mxu0 0.0
    %4228 = vmatprep.subr.mxu0 0.0
    %4229 = vmatpush1.msra.mxu0 0.0
    %4230 = vmatprep.subr.mxu0 0.0
    %4231 = vmatpush1.msra.mxu0 0.0
    %4232 = vmatprep.subr.mxu0 0.0
    %4233 = vmatpush1.msra.mxu0 0.0
    %4234 = vmatprep.subr.mxu0 0.0
    %4235 = vmatpush1.msra.mxu0 0.0
    %4236 = vmatprep.subr.mxu0 0.0
    %4237 = vmatpush1.msra.mxu0 0.0
    %4238 = vmatprep.subr.mxu0 0.0
    %4239 = vmatpush1.msra.mxu0 0.0
    %4240 = vmatprep.subr.mxu0 0.0
    %4241 = vmatpush1.msra.mxu0 0.0
    %4242 = vmatprep.subr.mxu0 0.0
    %4243 = vmatpush1.msra.mxu0 0.0
    %4244 = vmatprep.subr.mxu0 0.0
    %4245 = vmatpush1.msra.mxu0 0.0
    %4246 = vmatprep.subr.mxu0 0.0
    %4247 = vmatpush1.msra.mxu0 0.0
    %4248 = vmatprep.subr.mxu0 0.0
    %4249 = vmatpush1.msra.mxu0 0.0
    %4250 = vmatprep.subr.mxu0 0.0
    %4251 = vmatpush1.msra.mxu0 0.0
    %4252 = vmatprep.subr.mxu0 0.0
    %4253 = vmatpush1.msra.mxu0 0.0
    %4254 = vmatprep.subr.mxu0 0.0
    %4255 = vmatpush1.msra.mxu0 0.0
    %4256 = vmatprep.subr.mxu0 0.0
    %4257 = vmatpush1.msra.mxu0 0.0
    %4258 = vmatprep.subr.mxu0 0.0
    %4259 = vmatpush1.msra.mxu0 0.0
    %4260 = vmatprep.subr.mxu0 0.0
    %4261 = vmatpush1.msra.mxu0 0.0
    %4262 = vmatprep.subr.mxu0 0.0
    %4263 = vmatpush1.msra.mxu0 0.0
    %4264 = vmatprep.subr.mxu0 0.0
    %4265 = vmatpush1.msra.mxu0 0.0
    %4266 = vmatprep.subr.mxu0 0.0
    %4267 = vmatpush1.msra.mxu0 0.0
    %4268 = vmatprep.mubr.f32.mxu0 0.0
    %4269 = vmatmul.mubr.f32.gmra.mrb[0].mxu0 %v4196
    %v4270 = vpop.f32.mrb[0].mxu0
    %v4271 = vadd.f32 0.0, %v4270
    %v4272 = vpop.f32.mrb[0].mxu0
    %4273 = vmatprep.mubr.f32.mxu0 0.0
    %4274 = vmatmul.mubr.f32.gmra.mrb[0].mxu0 %v4199
    %v4275 = vpop.f32.mrb[0].mxu0
    %v4276 = vadd.f32 0.0, %v4275
    %v4277 = vpop.f32.mrb[0].mxu0
    %4278 = vmatprep.mubr.f32.mxu0 0.0
    %4279 = vmatmul.mubr.f32.gmra.mrb[0].mxu0 %v4202
    %v4280 = vpop.f32.mrb[0].mxu0
    %v4281 = vadd.f32 0.0, %v4280
    %v4282 = vpop.f32.mrb[0].mxu0
    %4283 = vdwg.mxu0
    %v4284 = vmul.f32 %v4271, %v3019
    %v4285 = vmul.f32 %v4276, %v3024
    %v4286 = vmul.f32 %v4281, %v3029
    %v4287 = vadd.f32 %v4189, %v4284
    %v4288 = vadd.f32 %v4190, %v4285
    %v4289 = vadd.f32 %v4191, %v4286
    %v4291 = vsel %vm169, %v4287, 0
    %v4294 = vsel %vm169, %v4288, 0
    %v4297 = vsel %vm169, %v4289, 0
    %4299 = vmatprep.subr.mxu0 0.0
    %4300 = vmatpush1.msra.mxu0 %v2496
    %4301 = vmatprep.subr.mxu0 0.0
    %4302 = vmatpush1.msra.mxu0 %v2497
    %4303 = vmatprep.subr.mxu0 0.0
    %4304 = vmatpush1.msra.mxu0 %v2498
    %4305 = vmatprep.subr.mxu0 0.0
    %4306 = vmatpush1.msra.mxu0 %v2499
    %4307 = vmatprep.subr.mxu0 0.0
    %4308 = vmatpush1.msra.mxu0 0.0
    %4309 = vmatprep.subr.mxu0 0.0
    %4310 = vmatpush1.msra.mxu0 0.0
    %4311 = vmatprep.subr.mxu0 0.0
    %4312 = vmatpush1.msra.mxu0 0.0
    %4313 = vmatprep.subr.mxu0 0.0
    %4314 = vmatpush1.msra.mxu0 0.0
    %4315 = vmatprep.subr.mxu0 0.0
    %4316 = vmatpush1.msra.mxu0 0.0
    %4317 = vmatprep.subr.mxu0 0.0
    %4318 = vmatpush1.msra.mxu0 0.0
    %4319 = vmatprep.subr.mxu0 0.0
    %4320 = vmatpush1.msra.mxu0 0.0
    %4321 = vmatprep.subr.mxu0 0.0
    %4322 = vmatpush1.msra.mxu0 0.0
    %4323 = vmatprep.subr.mxu0 0.0
    %4324 = vmatpush1.msra.mxu0 0.0
    %4325 = vmatprep.subr.mxu0 0.0
    %4326 = vmatpush1.msra.mxu0 0.0
    %4327 = vmatprep.subr.mxu0 0.0
    %4328 = vmatpush1.msra.mxu0 0.0
    %4329 = vmatprep.subr.mxu0 0.0
    %4330 = vmatpush1.msra.mxu0 0.0
    %4331 = vmatprep.subr.mxu0 0.0
    %4332 = vmatpush1.msra.mxu0 0.0
    %4333 = vmatprep.subr.mxu0 0.0
    %4334 = vmatpush1.msra.mxu0 0.0
    %4335 = vmatprep.subr.mxu0 0.0
    %4336 = vmatpush1.msra.mxu0 0.0
    %4337 = vmatprep.subr.mxu0 0.0
    %4338 = vmatpush1.msra.mxu0 0.0
    %4339 = vmatprep.subr.mxu0 0.0
    %4340 = vmatpush1.msra.mxu0 0.0
    %4341 = vmatprep.subr.mxu0 0.0
    %4342 = vmatpush1.msra.mxu0 0.0
    %4343 = vmatprep.subr.mxu0 0.0
    %4344 = vmatpush1.msra.mxu0 0.0
    %4345 = vmatprep.subr.mxu0 0.0
    %4346 = vmatpush1.msra.mxu0 0.0
    %4347 = vmatprep.subr.mxu0 0.0
    %4348 = vmatpush1.msra.mxu0 0.0
    %4349 = vmatprep.subr.mxu0 0.0
    %4350 = vmatpush1.msra.mxu0 0.0
    %4351 = vmatprep.subr.mxu0 0.0
    %4352 = vmatpush1.msra.mxu0 0.0
    %4353 = vmatprep.subr.mxu0 0.0
    %4354 = vmatpush1.msra.mxu0 0.0
    %4355 = vmatprep.subr.mxu0 0.0
    %4356 = vmatpush1.msra.mxu0 0.0
    %4357 = vmatprep.subr.mxu0 0.0
    %4358 = vmatpush1.msra.mxu0 0.0
    %4359 = vmatprep.subr.mxu0 0.0
    %4360 = vmatpush1.msra.mxu0 0.0
    %4361 = vmatprep.subr.mxu0 0.0
    %4362 = vmatpush1.msra.mxu0 0.0
    %4363 = vmatprep.mubr.f32.mxu0 0.0
    %4364 = vmatmul.mubr.f32.gmra.mrb[0].mxu0 %v4291
    %v4365 = vpop.f32.mrb[0].mxu0
    %v4366 = vadd.f32 %v3445, %v4365
    %v4367 = vpop.f32.mrb[0].mxu0
    %4368 = vmatprep.mubr.f32.mxu0 0.0
    %4369 = vmatmul.mubr.f32.gmra.mrb[0].mxu0 %v4294
    %v4370 = vpop.f32.mrb[0].mxu0
    %v4371 = vadd.f32 %v3445, %v4370
    %v4372 = vpop.f32.mrb[0].mxu0
    %4373 = vmatprep.mubr.f32.mxu0 0.0
    %4374 = vmatmul.mubr.f32.gmra.mrb[0].mxu0 %v4297
    %v4375 = vpop.f32.mrb[0].mxu0
    %v4376 = vadd.f32 %v3445, %v4375
    %v4377 = vpop.f32.mrb[0].mxu0
    %4378 = vdwg.mxu0
    %v4379 = vadd.f32 %v2481, %v4366
    %v4380 = vadd.f32 %v2482, %v4371
    %v4381 = vadd.f32 %v2483, %v4376
    %v4382 = vsel %vm169, %v4379, 0.0
    %4383 = vadd.xlane.f32.xlu0 %v4382
    %v4384 = vpop.xlane.xlu0 %4383
    %v4385 = vsel %vm169, %v4380, 0.0
    %4386 = vadd.xlane.f32.xlu0 %v4385
    %v4387 = vpop.xlane.xlu0 %4386
    %v4388 = vsel %vm169, %v4381, 0.0
    %4389 = vadd.xlane.f32.xlu0 %v4388
    %v4390 = vpop.xlane.xlu0 %4389
    %v4391 = vmul.f32 %v4384, %v1261
    %v4392 = vmul.f32 %v4387, %v1261
    %v4393 = vmul.f32 %v4390, %v1261
    %v4394 = vsub.f32 %v4379, %v4391
    %v4395 = vsub.f32 %v4380, %v4392
    %v4396 = vsub.f32 %v4381, %v4393
    %v4397 = vmul.f32 %v4394, %v4394
    %v4398 = vmul.f32 %v4395, %v4395
    %v4399 = vmul.f32 %v4396, %v4396
    %v4400 = vsel %vm169, %v4397, 0.0
    %4401 = vadd.xlane.f32.xlu0 %v4400
    %v4402 = vpop.xlane.xlu0 %4401
    %v4403 = vsel %vm169, %v4398, 0.0
    %4404 = vadd.xlane.f32.xlu0 %v4403
    %v4405 = vpop.xlane.xlu0 %4404
    %v4406 = vsel %vm169, %v4399, 0.0
    %4407 = vadd.xlane.f32.xlu0 %v4406
    %v4408 = vpop.xlane.xlu0 %4407
    %v4409 = vmul.f32 %v4402, %v1261
    %v4410 = vmul.f32 %v4405, %v1261
    %v4411 = vmul.f32 %v4408, %v1261
    %v4412 = vadd.f32 %v4409, 1e-05
    %v4413 = vadd.f32 %v4410, 1e-05
    %v4414 = vadd.f32 %v4411, 1e-05
    %v4415 = vrsqrt.pop %v4412
    %v4416 = vrsqrt.pop %v4413
    %v4417 = vrsqrt.pop %v4414
    %v4418 = vmul.f32 %v4394, %v4415
    %v4419 = vmul.f32 %v4395, %v4416
    %v4420 = vmul.f32 %v4396, %v4417
    %v4421 = vmul.f32 %v4418, %v3580
    %v4422 = vmul.f32 %v4419, %v3580
    %v4423 = vmul.f32 %v4420, %v3580
    %v4424 = vadd.f32 %v4421, %v3587
    %v4425 = vadd.f32 %v4422, %v3587
    %v4426 = vadd.f32 %v4423, %v3587
    %v4428 = vsel %vm169, %v4424, 0
    %v4431 = vsel %vm169, %v4425, 0
    %v4434 = vsel %vm169, %v4426, 0
    %4436 = vmatprep.subr.mxu0 0.0
    %4437 = vmatpush1.msra.mxu0 %v2517
    %4438 = vmatprep.subr.mxu0 0.0
    %4439 = vmatpush1.msra.mxu0 %v2518
    %4440 = vmatprep.subr.mxu0 0.0
    %4441 = vmatpush1.msra.mxu0 %v2519
    %4442 = vmatprep.subr.mxu0 0.0
    %4443 = vmatpush1.msra.mxu0 %v2520
    %4444 = vmatprep.subr.mxu0 0.0
    %4445 = vmatpush1.msra.mxu0 0.0
    %4446 = vmatprep.subr.mxu0 0.0
    %4447 = vmatpush1.msra.mxu0 0.0
    %4448 = vmatprep.subr.mxu0 0.0
    %4449 = vmatpush1.msra.mxu0 0.0
    %4450 = vmatprep.subr.mxu0 0.0
    %4451 = vmatpush1.msra.mxu0 0.0
    %4452 = vmatprep.subr.mxu0 0.0
    %4453 = vmatpush1.msra.mxu0 0.0
    %4454 = vmatprep.subr.mxu0 0.0
    %4455 = vmatpush1.msra.mxu0 0.0
    %4456 = vmatprep.subr.mxu0 0.0
    %4457 = vmatpush1.msra.mxu0 0.0
    %4458 = vmatprep.subr.mxu0 0.0
    %4459 = vmatpush1.msra.mxu0 0.0
    %4460 = vmatprep.subr.mxu0 0.0
    %4461 = vmatpush1.msra.mxu0 0.0
    %4462 = vmatprep.subr.mxu0 0.0
    %4463 = vmatpush1.msra.mxu0 0.0
    %4464 = vmatprep.subr.mxu0 0.0
    %4465 = vmatpush1.msra.mxu0 0.0
    %4466 = vmatprep.subr.mxu0 0.0
    %4467 = vmatpush1.msra.mxu0 0.0
    %4468 = vmatprep.subr.mxu0 0.0
    %4469 = vmatpush1.msra.mxu0 0.0
    %4470 = vmatprep.subr.mxu0 0.0
    %4471 = vmatpush1.msra.mxu0 0.0
    %4472 = vmatprep.subr.mxu0 0.0
    %4473 = vmatpush1.msra.mxu0 0.0
    %4474 = vmatprep.subr.mxu0 0.0
    %4475 = vmatpush1.msra.mxu0 0.0
    %4476 = vmatprep.subr.mxu0 0.0
    %4477 = vmatpush1.msra.mxu0 0.0
    %4478 = vmatprep.subr.mxu0 0.0
    %4479 = vmatpush1.msra.mxu0 0.0
    %4480 = vmatprep.subr.mxu0 0.0
    %4481 = vmatpush1.msra.mxu0 0.0
    %4482 = vmatprep.subr.mxu0 0.0
    %4483 = vmatpush1.msra.mxu0 0.0
    %4484 = vmatprep.subr.mxu0 0.0
    %4485 = vmatpush1.msra.mxu0 0.0
    %4486 = vmatprep.subr.mxu0 0.0
    %4487 = vmatpush1.msra.mxu0 0.0
    %4488 = vmatprep.subr.mxu0 0.0
    %4489 = vmatpush1.msra.mxu0 0.0
    %4490 = vmatprep.subr.mxu0 0.0
    %4491 = vmatpush1.msra.mxu0 0.0
    %4492 = vmatprep.subr.mxu0 0.0
    %4493 = vmatpush1.msra.mxu0 0.0
    %4494 = vmatprep.subr.mxu0 0.0
    %4495 = vmatpush1.msra.mxu0 0.0
    %4496 = vmatprep.subr.mxu0 0.0
    %4497 = vmatpush1.msra.mxu0 0.0
    %4498 = vmatprep.subr.mxu0 0.0
    %4499 = vmatpush1.msra.mxu0 0.0
    %4500 = vmatprep.mubr.f32.mxu0 0.0
    %4501 = vmatmul.mubr.f32.gmra.mrb[0].mxu0 %v4428
    %v4502 = vpop.f32.mrb[0].mxu0
    %v4503 = vadd.f32 %v3594, %v4502
    %v4504 = vpop.f32.mrb[0].mxu0
    %4505 = vmatprep.mubr.f32.mxu0 0.0
    %4506 = vmatmul.mubr.f32.gmra.mrb[0].mxu0 %v4431
    %v4507 = vpop.f32.mrb[0].mxu0
    %v4508 = vadd.f32 %v3594, %v4507
    %v4509 = vpop.f32.mrb[0].mxu0
    %4510 = vmatprep.mubr.f32.mxu0 0.0
    %4511 = vmatmul.mubr.f32.gmra.mrb[0].mxu0 %v4434
    %v4512 = vpop.f32.mrb[0].mxu0
    %v4513 = vadd.f32 %v3594, %v4512
    %v4514 = vpop.f32.mrb[0].mxu0
    %4515 = vdwg.mxu0
    %v4516 = vmul.f32 %v4503, 0.5
    %v4517 = vmul.f32 %v4508, 0.5
    %v4518 = vmul.f32 %v4513, 0.5
    %v4519 = vmul.f32 %v4503, 0.70710677
    %v4520 = vmul.f32 %v4508, 0.70710677
    %v4521 = vmul.f32 %v4513, 0.70710677
    %vm4522 = vcmp.ge.f32.partialorder %v4519, 0.0
    %vm4523 = vcmp.ge.f32.partialorder %v4520, 0.0
    %vm4524 = vcmp.ge.f32.partialorder %v4521, 0.0
    %v4525 = vsel %vm4522, 1.0, -1.0
    %v4526 = vsel %vm4523, 1.0, -1.0
    %v4527 = vsel %vm4524, 1.0, -1.0
    %v4528 = vand.u32 2147483647, %v4519
    %v4529 = vand.u32 2147483647, %v4520
    %v4530 = vand.u32 2147483647, %v4521
    %v4531 = vmul.f32 %v4528, 0.3275911
    %v4532 = vmul.f32 %v4529, 0.3275911
    %v4533 = vmul.f32 %v4530, 0.3275911
    %v4534 = vadd.f32 %v4531, 1.0
    %v4535 = vadd.f32 %v4532, 1.0
    %v4536 = vadd.f32 %v4533, 1.0
    %v4537 = vrcp.pop %v4534
    %v4538 = vmul.f32 1.0, %v4537
    %v4539 = vrcp.pop %v4535
    %v4540 = vmul.f32 1.0, %v4539
    %v4541 = vrcp.pop %v4536
    %v4542 = vmul.f32 1.0, %v4541
    %v4543 = vmul.f32 %v4538, 1.0614054
    %v4544 = vmul.f32 %v4540, 1.0614054
    %v4545 = vmul.f32 %v4542, 1.0614054
    %v4546 = vadd.f32 %v4543, -1.4531521
    %v4547 = vadd.f32 %v4544, -1.4531521
    %v4548 = vadd.f32 %v4545, -1.4531521
    %v4549 = vmul.f32 %v4546, %v4538
    %v4550 = vmul.f32 %v4547, %v4540
    %v4551 = vmul.f32 %v4548, %v4542
    %v4552 = vadd.f32 %v4549, 1.4214138
    %v4553 = vadd.f32 %v4550, 1.4214138
    %v4554 = vadd.f32 %v4551, 1.4214138
    %v4555 = vmul.f32 %v4552, %v4538
    %v4556 = vmul.f32 %v4553, %v4540
    %v4557 = vmul.f32 %v4554, %v4542
    %v4558 = vadd.f32 %v4555, -0.28449672
    %v4559 = vadd.f32 %v4556, -0.28449672
    %v4560 = vadd.f32 %v4557, -0.28449672
    %v4561 = vmul.f32 %v4558, %v4538
    %v4562 = vmul.f32 %v4559, %v4540
    %v4563 = vmul.f32 %v4560, %v4542
    %v4564 = vadd.f32 %v4561, 0.2548296
    %v4565 = vadd.f32 %v4562, 0.2548296
    %v4566 = vadd.f32 %v4563, 0.2548296
    %v4567 = vmul.f32 %v4564, %v4538
    %v4568 = vmul.f32 %v4565, %v4540
    %v4569 = vmul.f32 %v4566, %v4542
    %v4570 = vsub.f32 0.0, %v4528
    %v4571 = vsub.f32 0.0, %v4529
    %v4572 = vsub.f32 0.0, %v4530
    %v4573 = vmul.f32 %v4570, %v4528
    %v4574 = vmul.f32 %v4571, %v4529
    %v4575 = vmul.f32 %v4572, %v4530
    %v4576 = vmul.f32 %v4573, 1.442695
    %v4577 = vpow.pop %v4576
    %v4578 = vmul.f32 %v4574, 1.442695
    %v4579 = vpow.pop %v4578
    %v4580 = vmul.f32 %v4575, 1.442695
    %v4581 = vpow.pop %v4580
    %v4582 = vmul.f32 %v4567, %v4577
    %v4583 = vmul.f32 %v4568, %v4579
    %v4584 = vmul.f32 %v4569, %v4581
    %v4585 = vsub.f32 1.0, %v4582
    %v4586 = vsub.f32 1.0, %v4583
    %v4587 = vsub.f32 1.0, %v4584
    %v4588 = vmul.f32 %v4525, %v4585
    %v4589 = vmul.f32 %v4526, %v4586
    %v4590 = vmul.f32 %v4527, %v4587
    %v4591 = vadd.f32 %v4588, 1.0
    %v4592 = vadd.f32 %v4589, 1.0
    %v4593 = vadd.f32 %v4590, 1.0
    %v4594 = vmul.f32 %v4516, %v4591
    %v4595 = vmul.f32 %v4517, %v4592
    %v4596 = vmul.f32 %v4518, %v4593
    %v4598 = vsel %vm1484, %v4594, 0
    %v4601 = vsel %vm1484, %v4595, 0
    %v4604 = vsel %vm1484, %v4596, 0
    %4606 = vmatprep.subr.mxu0 0.0
    %4607 = vmatpush1.msra.mxu0 %v2500
    %4608 = vmatprep.subr.mxu0 0.0
    %4609 = vmatpush1.msra.mxu0 %v2501
    %4610 = vmatprep.subr.mxu0 0.0
    %4611 = vmatpush1.msra.mxu0 %v2502
    %4612 = vmatprep.subr.mxu0 0.0
    %4613 = vmatpush1.msra.mxu0 %v2503
    %4614 = vmatprep.subr.mxu0 0.0
    %4615 = vmatpush1.msra.mxu0 %v2504
    %4616 = vmatprep.subr.mxu0 0.0
    %4617 = vmatpush1.msra.mxu0 %v2505
    %4618 = vmatprep.subr.mxu0 0.0
    %4619 = vmatpush1.msra.mxu0 %v2506
    %4620 = vmatprep.subr.mxu0 0.0
    %4621 = vmatpush1.msra.mxu0 %v2507
    %4622 = vmatprep.subr.mxu0 0.0
    %4623 = vmatpush1.msra.mxu0 0.0
    %4624 = vmatprep.subr.mxu0 0.0
    %4625 = vmatpush1.msra.mxu0 0.0
    %4626 = vmatprep.subr.mxu0 0.0
    %4627 = vmatpush1.msra.mxu0 0.0
    %4628 = vmatprep.subr.mxu0 0.0
    %4629 = vmatpush1.msra.mxu0 0.0
    %4630 = vmatprep.subr.mxu0 0.0
    %4631 = vmatpush1.msra.mxu0 0.0
    %4632 = vmatprep.subr.mxu0 0.0
    %4633 = vmatpush1.msra.mxu0 0.0
    %4634 = vmatprep.subr.mxu0 0.0
    %4635 = vmatpush1.msra.mxu0 0.0
    %4636 = vmatprep.subr.mxu0 0.0
    %4637 = vmatpush1.msra.mxu0 0.0
    %4638 = vmatprep.subr.mxu0 0.0
    %4639 = vmatpush1.msra.mxu0 0.0
    %4640 = vmatprep.subr.mxu0 0.0
    %4641 = vmatpush1.msra.mxu0 0.0
    %4642 = vmatprep.subr.mxu0 0.0
    %4643 = vmatpush1.msra.mxu0 0.0
    %4644 = vmatprep.subr.mxu0 0.0
    %4645 = vmatpush1.msra.mxu0 0.0
    %4646 = vmatprep.subr.mxu0 0.0
    %4647 = vmatpush1.msra.mxu0 0.0
    %4648 = vmatprep.subr.mxu0 0.0
    %4649 = vmatpush1.msra.mxu0 0.0
    %4650 = vmatprep.subr.mxu0 0.0
    %4651 = vmatpush1.msra.mxu0 0.0
    %4652 = vmatprep.subr.mxu0 0.0
    %4653 = vmatpush1.msra.mxu0 0.0
    %4654 = vmatprep.subr.mxu0 0.0
    %4655 = vmatpush1.msra.mxu0 0.0
    %4656 = vmatprep.subr.mxu0 0.0
    %4657 = vmatpush1.msra.mxu0 0.0
    %4658 = vmatprep.subr.mxu0 0.0
    %4659 = vmatpush1.msra.mxu0 0.0
    %4660 = vmatprep.subr.mxu0 0.0
    %4661 = vmatpush1.msra.mxu0 0.0
    %4662 = vmatprep.subr.mxu0 0.0
    %4663 = vmatpush1.msra.mxu0 0.0
    %4664 = vmatprep.subr.mxu0 0.0
    %4665 = vmatpush1.msra.mxu0 0.0
    %4666 = vmatprep.subr.mxu0 0.0
    %4667 = vmatpush1.msra.mxu0 0.0
    %4668 = vmatprep.subr.mxu0 0.0
    %4669 = vmatpush1.msra.mxu0 0.0
    %4670 = vmatprep.mubr.f32.mxu0 0.0
    %4671 = vmatmul.mubr.f32.gmra.mrb[0].mxu0 %v4598
    %v4672 = vpop.f32.mrb[0].mxu0
    %v4673 = vpop.f32.mrb[0].mxu0
    %4674 = vmatprep.mubr.f32.mxu0 0.0
    %4675 = vmatmul.mubr.f32.gmra.mrb[0].mxu0 %v4601
    %v4676 = vpop.f32.mrb[0].mxu0
    %v4677 = vpop.f32.mrb[0].mxu0
    %4678 = vmatprep.mubr.f32.mxu0 0.0
    %4679 = vmatmul.mubr.f32.gmra.mrb[0].mxu0 %v4604
    %v4680 = vpop.f32.mrb[0].mxu0
    %v4681 = vadd.f32 %v3768, %v4680
    %v4682 = vpop.f32.mrb[0].mxu0
    %4683 = vdwg.mxu0
    %v4684 = vadd.f32 %v4426, %v4681
    %v4685 = vsel %vm169, %v4684, 0.0
    %4686 = vadd.xlane.f32.xlu0 %v4685
    %v4687 = vpop.xlane.xlu0 %4686
    %v4688 = vmul.f32 %v4687, %v1261
    %v4689 = vsub.f32 %v4684, %v4688
    %v4690 = vmul.f32 %v4689, %v4689
    %v4691 = vsel %vm169, %v4690, 0.0
    %4692 = vadd.xlane.f32.xlu0 %v4691
    %v4693 = vpop.xlane.xlu0 %4692
    %v4694 = vmul.f32 %v4693, %v1261
    %v4695 = vadd.f32 %v4694, 1e-05
    %v4696 = vrsqrt.pop %v4695
    %v4697 = vmul.f32 %v4689, %v4696
    %v4698 = vmul.f32 %v4697, %v3873
    %v4699 = vadd.f32 %v4698, %v3878
    %v4700 = vld [vmem:[%s1 + $0x43] sm:$0x1]
    %v4701 = vld [vmem:[%s1 + $0x44] sm:$0x1]
    %v4702 = vld [vmem:[%s1 + $0x45] sm:$0x1]
    %v4703 = vld [vmem:[%s1 + $0x46] sm:$0x1]
    %v4704 = vld [vmem:[%s3] sm:$0xff]
    %v4705 = vld [vmem:[%s3 + $0x8] sm:$0xff]
    %v4706 = vld [vmem:[%s3 + $0x10] sm:$0xff]
    %v4707 = vld [vmem:[%s3 + $0x18] sm:$0xff]
    %v4708 = vld [vmem:[%s3 + $0x20] sm:$0x1]
    %v4709 = vsel %vm180, %v3879, 0.0
    %4710 = vadd.xlane.f32.xlu0 %v4709
    %v4711 = vpop.xlane.xlu0 %4710
    %v4712 = vmul.f32 %v4711, %v1261
    %v4713 = vsub.f32 %v3879, %v4712
    %v4714 = vmul.f32 %v4713, %v4713
    %v4715 = vsel %vm180, %v4714, 0.0
    %4716 = vadd.xlane.f32.xlu0 %v4715
    %v4717 = vpop.xlane.xlu0 %4716
    %v4718 = vmul.f32 %v4717, %v1261
    %v4719 = vadd.f32 %v4718, 1e-05
    %v4720 = vrsqrt.pop %v4719
    %v4721 = vmul.f32 %v4713, %v4720
    %v4722 = vmul.f32 %v4721, %v4700
    %v4723 = vadd.f32 %v4722, %v4701
    %v4724 = vsel %vm180, %v4723, 0.0
    %4725 = vadd.xlane.f32.xlu0 %v4724
    %v4726 = vpop.xlane.xlu0 %4725
    %v4727 = vmul.f32 %v4726, %v1261
    %v4728 = vsub.f32 %v4723, %v4727
    %v4729 = vmul.f32 %v4728, %v4728
    %v4730 = vsel %vm180, %v4729, 0.0
    %4731 = vadd.xlane.f32.xlu0 %v4730
    %v4732 = vpop.xlane.xlu0 %4731
    %v4733 = vmul.f32 %v4732, %v1261
    %v4734 = vadd.f32 %v4733, 1e-05
    %v4735 = vrsqrt.pop %v4734
    %v4736 = vmul.f32 %v4728, %v4735
    %v4737 = vmul.f32 %v4736, %v4702
    %v4738 = vadd.f32 %v4737, %v4703
    %v4740 = vsel %vm169, %v4738, 0
    %4742 = vmatprep.subr.mxu0 0.0
    %4743 = vmatpush1.msra.mxu0 %v4704
    %4744 = vmatprep.subr.mxu0 0.0
    %4745 = vmatpush1.msra.mxu0 %v4705
    %4746 = vmatprep.subr.mxu0 0.0
    %4747 = vmatpush1.msra.mxu0 %v4706
    %4748 = vmatprep.subr.mxu0 0.0
    %4749 = vmatpush1.msra.mxu0 %v4707
    %4750 = vmatprep.subr.mxu0 0.0
    %4751 = vmatpush1.msra.mxu0 0.0
    %4752 = vmatprep.subr.mxu0 0.0
    %4753 = vmatpush1.msra.mxu0 0.0
    %4754 = vmatprep.subr.mxu0 0.0
    %4755 = vmatpush1.msra.mxu0 0.0
    %4756 = vmatprep.subr.mxu0 0.0
    %4757 = vmatpush1.msra.mxu0 0.0
    %4758 = vmatprep.subr.mxu0 0.0
    %4759 = vmatpush1.msra.mxu0 0.0
    %4760 = vmatprep.subr.mxu0 0.0
    %4761 = vmatpush1.msra.mxu0 0.0
    %4762 = vmatprep.subr.mxu0 0.0
    %4763 = vmatpush1.msra.mxu0 0.0
    %4764 = vmatprep.subr.mxu0 0.0
    %4765 = vmatpush1.msra.mxu0 0.0
    %4766 = vmatprep.subr.mxu0 0.0
    %4767 = vmatpush1.msra.mxu0 0.0
    %4768 = vmatprep.subr.mxu0 0.0
    %4769 = vmatpush1.msra.mxu0 0.0
    %4770 = vmatprep.subr.mxu0 0.0
    %4771 = vmatpush1.msra.mxu0 0.0
    %4772 = vmatprep.subr.mxu0 0.0
    %4773 = vmatpush1.msra.mxu0 0.0
    %4774 = vmatprep.subr.mxu0 0.0
    %4775 = vmatpush1.msra.mxu0 0.0
    %4776 = vmatprep.subr.mxu0 0.0
    %4777 = vmatpush1.msra.mxu0 0.0
    %4778 = vmatprep.subr.mxu0 0.0
    %4779 = vmatpush1.msra.mxu0 0.0
    %4780 = vmatprep.subr.mxu0 0.0
    %4781 = vmatpush1.msra.mxu0 0.0
    %4782 = vmatprep.subr.mxu0 0.0
    %4783 = vmatpush1.msra.mxu0 0.0
    %4784 = vmatprep.subr.mxu0 0.0
    %4785 = vmatpush1.msra.mxu0 0.0
    %4786 = vmatprep.subr.mxu0 0.0
    %4787 = vmatpush1.msra.mxu0 0.0
    %4788 = vmatprep.subr.mxu0 0.0
    %4789 = vmatpush1.msra.mxu0 0.0
    %4790 = vmatprep.subr.mxu0 0.0
    %4791 = vmatpush1.msra.mxu0 0.0
    %4792 = vmatprep.subr.mxu0 0.0
    %4793 = vmatpush1.msra.mxu0 0.0
    %4794 = vmatprep.subr.mxu0 0.0
    %4795 = vmatpush1.msra.mxu0 0.0
    %4796 = vmatprep.subr.mxu0 0.0
    %4797 = vmatpush1.msra.mxu0 0.0
    %4798 = vmatprep.subr.mxu0 0.0
    %4799 = vmatpush1.msra.mxu0 0.0
    %4800 = vmatprep.subr.mxu0 0.0
    %4801 = vmatpush1.msra.mxu0 0.0
    %4802 = vmatprep.subr.mxu0 0.0
    %4803 = vmatpush1.msra.mxu0 0.0
    %4804 = vmatprep.subr.mxu0 0.0
    %4805 = vmatpush1.msra.mxu0 0.0
    %4806 = vmatprep.mubr.f32.mxu0 0.0
    %4807 = vmatmul.mubr.f32.gmra.mrb[0].mxu0 %v4740
    %v4808 = vpop.f32.mrb[0].mxu0
    %v4809 = vadd.f32 %v4708, %v4808
    %v4810 = vpop.f32.mrb[0].mxu0
    %4811 = vdwg.mxu0
    %4812 = vst [vmem:[#allocation3] sm:$0x1] %v4809
    %v4813 = vsel %vm180, %v4699, 0.0
    %4814 = vadd.xlane.f32.xlu0 %v4813
    %v4815 = vpop.xlane.xlu0 %4814
    %v4816 = vmul.f32 %v4815, %v1261
    %v4817 = vsub.f32 %v4699, %v4816
    %v4818 = vmul.f32 %v4817, %v4817
    %v4819 = vsel %vm180, %v4818, 0.0
    %4820 = vadd.xlane.f32.xlu0 %v4819
    %v4821 = vpop.xlane.xlu0 %4820
    %v4822 = vmul.f32 %v4821, %v1261
    %v4823 = vadd.f32 %v4822, 1e-05
    %v4824 = vrsqrt.pop %v4823
    %v4825 = vmul.f32 %v4817, %v4824
    %v4826 = vmul.f32 %v4825, %v4700
    %v4827 = vadd.f32 %v4826, %v4701
    %v4828 = vsel %vm180, %v4827, 0.0
    %4829 = vadd.xlane.f32.xlu0 %v4828
    %v4830 = vpop.xlane.xlu0 %4829
    %v4831 = vmul.f32 %v4830, %v1261
    %v4832 = vsub.f32 %v4827, %v4831
    %v4833 = vmul.f32 %v4832, %v4832
    %v4834 = vsel %vm180, %v4833, 0.0
    %4835 = vadd.xlane.f32.xlu0 %v4834
    %v4836 = vpop.xlane.xlu0 %4835
    %v4837 = vmul.f32 %v4836, %v1261
    %v4838 = vadd.f32 %v4837, 1e-05
    %v4839 = vrsqrt.pop %v4838
    %v4840 = vmul.f32 %v4832, %v4839
    %v4841 = vmul.f32 %v4840, %v4702
    %v4842 = vadd.f32 %v4841, %v4703
    %v4844 = vsel %vm169, %v4842, 0
    %4846 = vmatprep.subr.mxu0 0.0
    %4847 = vmatpush1.msra.mxu0 %v4704
    %4848 = vmatprep.subr.mxu0 0.0
    %4849 = vmatpush1.msra.mxu0 %v4705
    %4850 = vmatprep.subr.mxu0 0.0
    %4851 = vmatpush1.msra.mxu0 %v4706
    %4852 = vmatprep.subr.mxu0 0.0
    %4853 = vmatpush1.msra.mxu0 %v4707
    %4854 = vmatprep.subr.mxu0 0.0
    %4855 = vmatpush1.msra.mxu0 0.0
    %4856 = vmatprep.subr.mxu0 0.0
    %4857 = vmatpush1.msra.mxu0 0.0
    %4858 = vmatprep.subr.mxu0 0.0
    %4859 = vmatpush1.msra.mxu0 0.0
    %4860 = vmatprep.subr.mxu0 0.0
    %4861 = vmatpush1.msra.mxu0 0.0
    %4862 = vmatprep.subr.mxu0 0.0
    %4863 = vmatpush1.msra.mxu0 0.0
    %4864 = vmatprep.subr.mxu0 0.0
    %4865 = vmatpush1.msra.mxu0 0.0
    %4866 = vmatprep.subr.mxu0 0.0
    %4867 = vmatpush1.msra.mxu0 0.0
    %4868 = vmatprep.subr.mxu0 0.0
    %4869 = vmatpush1.msra.mxu0 0.0
    %4870 = vmatprep.subr.mxu0 0.0
    %4871 = vmatpush1.msra.mxu0 0.0
    %4872 = vmatprep.subr.mxu0 0.0
    %4873 = vmatpush1.msra.mxu0 0.0
    %4874 = vmatprep.subr.mxu0 0.0
    %4875 = vmatpush1.msra.mxu0 0.0
    %4876 = vmatprep.subr.mxu0 0.0
    %4877 = vmatpush1.msra.mxu0 0.0
    %4878 = vmatprep.subr.mxu0 0.0
    %4879 = vmatpush1.msra.mxu0 0.0
    %4880 = vmatprep.subr.mxu0 0.0
    %4881 = vmatpush1.msra.mxu0 0.0
    %4882 = vmatprep.subr.mxu0 0.0
    %4883 = vmatpush1.msra.mxu0 0.0
    %4884 = vmatprep.subr.mxu0 0.0
    %4885 = vmatpush1.msra.mxu0 0.0
    %4886 = vmatprep.subr.mxu0 0.0
    %4887 = vmatpush1.msra.mxu0 0.0
    %4888 = vmatprep.subr.mxu0 0.0
    %4889 = vmatpush1.msra.mxu0 0.0
    %4890 = vmatprep.subr.mxu0 0.0
    %4891 = vmatpush1.msra.mxu0 0.0
    %4892 = vmatprep.subr.mxu0 0.0
    %4893 = vmatpush1.msra.mxu0 0.0
    %4894 = vmatprep.subr.mxu0 0.0
    %4895 = vmatpush1.msra.mxu0 0.0
    %4896 = vmatprep.subr.mxu0 0.0
    %4897 = vmatpush1.msra.mxu0 0.0
    %4898 = vmatprep.subr.mxu0 0.0
    %4899 = vmatpush1.msra.mxu0 0.0
    %4900 = vmatprep.subr.mxu0 0.0
    %4901 = vmatpush1.msra.mxu0 0.0
    %4902 = vmatprep.subr.mxu0 0.0
    %4903 = vmatpush1.msra.mxu0 0.0
    %4904 = vmatprep.subr.mxu0 0.0
    %4905 = vmatpush1.msra.mxu0 0.0
    %4906 = vmatprep.subr.mxu0 0.0
    %4907 = vmatpush1.msra.mxu0 0.0
    %4908 = vmatprep.subr.mxu0 0.0
    %4909 = vmatpush1.msra.mxu0 0.0
    %4910 = vmatprep.mubr.f32.mxu0 0.0
    %4911 = vmatmul.mubr.f32.gmra.mrb[0].mxu0 %v4844
    %v4912 = vpop.f32.mrb[0].mxu0
    %v4913 = vadd.f32 %v4708, %v4912
    %v4914 = vpop.f32.mrb[0].mxu0
    %4915 = vdwg.mxu0
    %4916 = vst [vmem:[#allocation3 + $0x1] sm:$0x1] %v4913
    // Predicated region
    $region18: #{vit_forward.1} parent=1 // pred_check
      _
    $region19: #{vit_forward.1} parent=1 // pred_check_branch
      %4918 = sbr.rel (0) target = $region21
    $region20: #{vit_forward.1} parent=1 // pred_region
      %s4920 = ssub.s32 32, 32
      %4921 = vsyncadd [#allocation4], %s4920
      %s4923 = sshll.u32 [#allocation3], 4
      %s4924 = int_to_ptr.vmem [resolvable:$true] %s4923
      %4926 = dma.vmem_to_hbm [thread:$0]  %s4924, 32, %s4, [#allocation4]
    $region21: #{vit_forward.1} parent=1 // pred_fallthru
      _
    // Predicated region
    $region22: #{vit_forward.1} parent=1 // pred_check
      _
    $region23: #{vit_forward.1} parent=1 // pred_check_branch
      %4928 = sbr.rel (0) target = $region25
    $region24: #{vit_forward.1} parent=1 // pred_region
      %4929 = dma.done [#allocation4], 32
    $region25: #{vit_forward.1} parent=1 // pred_fallthru
      _
    %4930 = vsyncpa [#allocation4], 1

</llo_original>
